<compile_context>
chip_gen: v7x
topology: tpu7x:2x2x1
jax: 0.10.0
libtpu: 0.0.40
codegen_flags: <defaults>
</compile_context>

<pallas_src>
import jax
import jax.numpy as jnp
from jax import lax
from jax.experimental import pallas as pl
from jax.experimental.pallas import tpu as pltpu

IN_FEATURES = 3 * 64 * 64   # 12288
HIDDEN = 50
OUT = 6
MAX_BATCH_BLOCK = 256       # rows per grid step once B grows large


def mlp_kernel(x_ref, w1_ref, b1_ref, w2_ref, b2_ref, out_ref):
    # fc1: (TB, K) bf16  x  (H, K) bf16  -> (TB, H) f32 on the MXU.
    # Contract on the LAST dim of both operands (W1 is untransposed).
    h = lax.dot_general(
        x_ref[...], w1_ref[...],
        dimension_numbers=(((1,), (1,)), ((), ())),
        preferred_element_type=jnp.float32)
    h = jnp.maximum(h + b1_ref[...], 0.0)            # bias + ReLU in f32 (VPU)

    # fc2: (TB, H) f32  x  (OUT, H) f32 -> (TB, OUT), again untransposed W2.
    y = lax.dot_general(
        h, w2_ref[...],
        dimension_numbers=(((1,), (1,)), ((), ())),
        preferred_element_type=jnp.float32)
    out_ref[...] = (y + b2_ref[...]).astype(out_ref.dtype)


def mlp_forward(x, w1, b1, w2, b2):
    """x: (B,3,64,64) f32; w1: (50,12288); b1: (50,); w2: (6,50); b2: (6,)."""
    B = x.shape[0]
    x_flat = x.reshape(B, -1).astype(jnp.bfloat16)   # same ordering as torch .view
    # In production, store W1 in bf16 once so this cast is not paid per call.
    w1_bf = w1.astype(jnp.bfloat16)                  # (50, 12288), NOT transposed
    b1_2d = b1.reshape(1, HIDDEN).astype(jnp.float32)
    w2_f32 = w2.astype(jnp.float32)                  # (6, 50), NOT transposed
    b2_2d = b2.reshape(1, OUT).astype(jnp.float32)

    tb = min(B, MAX_BATCH_BLOCK)
    n_b = pl.cdiv(B, tb)

    flops = 2 * B * IN_FEATURES * HIDDEN + 2 * B * HIDDEN * OUT
    bytes_accessed = (x_flat.size * 2 + w1_bf.size * 2
                      + (b1.size + w2.size + b2.size + B * OUT) * 4)

    return pl.pallas_call(
        mlp_kernel,
        out_shape=jax.ShapeDtypeStruct((B, OUT), jnp.float32),
        grid=(n_b,),
        in_specs=[
            pl.BlockSpec((tb, IN_FEATURES), lambda i: (i, 0)),       # x rows
            pl.BlockSpec((HIDDEN, IN_FEATURES), lambda i: (0, 0)),   # W1 resident
            pl.BlockSpec((1, HIDDEN), lambda i: (0, 0)),             # b1 resident
            pl.BlockSpec((OUT, HIDDEN), lambda i: (0, 0)),           # W2 resident
            pl.BlockSpec((1, OUT), lambda i: (0, 0)),                # b2 resident
        ],
        out_specs=pl.BlockSpec((tb, OUT), lambda i: (i, 0)),
        compiler_params=pltpu.CompilerParams(
            dimension_semantics=("parallel",),       # batch axis only
            vmem_limit_bytes=32 * 1024 * 1024,       # safe on v5e/v6e/v7x
        ),
        cost_estimate=pl.CostEstimate(
            flops=flops, transcendentals=0, bytes_accessed=bytes_accessed),
    )(x_flat, w1_bf, b1_2d, w2_f32, b2_2d)


if __name__ == "__main__":
    key = jax.random.PRNGKey(0)
    kx, k1, k2, k3, k4 = jax.random.split(key, 5)

    B = 2
    x = jax.random.normal(kx, (B, 3, 64, 64), dtype=jnp.float32)

    # Deterministic parameter init (uniform, roughly matching torch Linear scale).
    bound1 = 1.0 / (IN_FEATURES ** 0.5)
    bound2 = 1.0 / (HIDDEN ** 0.5)
    w1 = jax.random.uniform(k1, (HIDDEN, IN_FEATURES), jnp.float32, -bound1, bound1)
    b1 = jax.random.uniform(k2, (HIDDEN,), jnp.float32, -bound1, bound1)
    w2 = jax.random.uniform(k3, (OUT, HIDDEN), jnp.float32, -bound2, bound2)
    b2 = jax.random.uniform(k4, (OUT,), jnp.float32, -bound2, bound2)

    out = jax.block_until_ready(mlp_forward(x, w1, b1, w2, b2))

    # Pure-JAX f32 reference (same math as the PyTorch forward).
    # Tolerance is widened vs. the f32-only kernel because x/W1 are shipped to
    # the MXU in bf16 (accumulation stays f32); observed error is ~1e-3.
    xf = x.reshape(B, -1)
    ref = jnp.maximum(xf @ w1.T + b1, 0.0) @ w2.T + b2
    assert out.shape == (B, OUT)
    assert jnp.allclose(out, ref, atol=2e-2, rtol=2e-2), (out, ref)

    print("KERNEL_OK")
</pallas_src>

<mosaic_0001>
module attributes {stable_mosaic.version = 11 : i64} {
  func.func @mlp_kernel(%arg0: i32, %arg1: memref<2x12288xbf16, #tpu.memory_space<vmem>>, %arg2: memref<50x12288xbf16, #tpu.memory_space<vmem>>, %arg3: memref<1x50xf32, #tpu.memory_space<vmem>>, %arg4: memref<6x50xf32, #tpu.memory_space<vmem>>, %arg5: memref<1x6xf32, #tpu.memory_space<vmem>>, %arg6: memref<2x6xf32, #tpu.memory_space<vmem>>) attributes {dimension_semantics = [#tpu.dimension_semantics<parallel>], iteration_bounds = array<i64: 1>, scalar_prefetch = 0 : i64, scratch_operands = 0 : i64, tpu.core_type = #tpu.core_type<tc>, window_params = [{transform_indices = @transform_0, window_bounds = array<i64: 2, 12288>}, {pipeline_mode = #tpu.pipeline_mode<synchronous>, transform_indices = @transform_1, window_bounds = array<i64: 50, 12288>}, {pipeline_mode = #tpu.pipeline_mode<synchronous>, transform_indices = @transform_2, window_bounds = array<i64: 1, 50>}, {pipeline_mode = #tpu.pipeline_mode<synchronous>, transform_indices = @transform_3, window_bounds = array<i64: 6, 50>}, {pipeline_mode = #tpu.pipeline_mode<synchronous>, transform_indices = @transform_4, window_bounds = array<i64: 1, 6>}, {transform_indices = @transform_5, window_bounds = array<i64: 2, 6>}]} {
    %c0 = arith.constant 0 : index
    %c0_0 = arith.constant 0 : index
    %0 = vector.load %arg1[%c0, %c0_0] : memref<2x12288xbf16, #tpu.memory_space<vmem>>, vector<2x12288xbf16>
    %c0_1 = arith.constant 0 : index
    %c0_2 = arith.constant 0 : index
    %1 = vector.load %arg2[%c0_1, %c0_2] : memref<50x12288xbf16, #tpu.memory_space<vmem>>, vector<50x12288xbf16>
    %cst = arith.constant dense<0.000000e+00> : vector<2x50xf32>
    %2 = tpu.matmul %0, %1, %cst {dimension_numbers = #tpu.dot_dimension_numbers<[1], [1], [0], [0], [0, 0, 1, 0], [], []>} : vector<2x12288xbf16>, vector<50x12288xbf16>, vector<2x50xf32> -> vector<2x50xf32>
    %c0_3 = arith.constant 0 : index
    %c0_4 = arith.constant 0 : index
    %3 = vector.load %arg3[%c0_3, %c0_4] : memref<1x50xf32, #tpu.memory_space<vmem>>, vector<1x50xf32>
    %4 = vector.broadcast %3 : vector<1x50xf32> to vector<2x50xf32>
    %5 = arith.addf %2, %4 : vector<2x50xf32>
    %cst_5 = arith.constant 0.000000e+00 : f32
    %6 = vector.broadcast %cst_5 : f32 to vector<2x50xf32>
    %7 = arith.maximumf %5, %6 : vector<2x50xf32>
    %c0_6 = arith.constant 0 : index
    %c0_7 = arith.constant 0 : index
    %8 = vector.load %arg4[%c0_6, %c0_7] : memref<6x50xf32, #tpu.memory_space<vmem>>, vector<6x50xf32>
    %cst_8 = arith.constant dense<0.000000e+00> : vector<2x6xf32>
    %9 = tpu.matmul %7, %8, %cst_8 {dimension_numbers = #tpu.dot_dimension_numbers<[1], [1], [0], [0], [0, 0, 1, 0], [], []>} : vector<2x50xf32>, vector<6x50xf32>, vector<2x6xf32> -> vector<2x6xf32>
    %c0_9 = arith.constant 0 : index
    %c0_10 = arith.constant 0 : index
    %10 = vector.load %arg5[%c0_9, %c0_10] : memref<1x6xf32, #tpu.memory_space<vmem>>, vector<1x6xf32>
    %11 = vector.broadcast %10 : vector<1x6xf32> to vector<2x6xf32>
    %12 = arith.addf %9, %11 : vector<2x6xf32>
    %c0_11 = arith.constant 0 : index
    %c0_12 = arith.constant 0 : index
    %13 = vector.load %arg6[%c0_11, %c0_12] : memref<2x6xf32, #tpu.memory_space<vmem>>, vector<2x6xf32>
    tpu.vector_store %arg6[%c0_11, %c0_12], %12 {strides = array<i32>} : memref<2x6xf32, #tpu.memory_space<vmem>>, vector<2x6xf32>,
    return
  }
  func.func @transform_0(%arg0: i32) -> (i32, i32) {
    %c0_i32 = arith.constant 0 : i32
    %c0_i32_0 = arith.constant 0 : i32
    return %arg0, %c0_i32 : i32, i32
  }
  func.func @transform_1(%arg0: i32) -> (i32, i32) {
    %c0_i32 = arith.constant 0 : i32
    %c0_i32_0 = arith.constant 0 : i32
    %c0_i32_1 = arith.constant 0 : i32
    return %c0_i32, %c0_i32_0 : i32, i32
  }
  func.func @transform_2(%arg0: i32) -> (i32, i32) {
    %c0_i32 = arith.constant 0 : i32
    %c0_i32_0 = arith.constant 0 : i32
    %c0_i32_1 = arith.constant 0 : i32
    return %c0_i32, %c0_i32_0 : i32, i32
  }
  func.func @transform_3(%arg0: i32) -> (i32, i32) {
    %c0_i32 = arith.constant 0 : i32
    %c0_i32_0 = arith.constant 0 : i32
    %c0_i32_1 = arith.constant 0 : i32
    return %c0_i32, %c0_i32_0 : i32, i32
  }
  func.func @transform_4(%arg0: i32) -> (i32, i32) {
    %c0_i32 = arith.constant 0 : i32
    %c0_i32_0 = arith.constant 0 : i32
    %c0_i32_1 = arith.constant 0 : i32
    return %c0_i32, %c0_i32_0 : i32, i32
  }
  func.func @transform_5(%arg0: i32) -> (i32, i32) {
    %c0_i32 = arith.constant 0 : i32
    %c0_i32_0 = arith.constant 0 : i32
    return %arg0, %c0_i32 : i32, i32
  }
}

</mosaic_0001>

<llo_original>
// kernel: tpu_custom_call.1
$region0: #{tpu_custom_call.1}
  #allocation0 [shape = 'u32[]', space=smem, size = 0x4, offset = 0x4, fixed_abs, tag = 'smem constant byte address 0x4 - core index']
  #allocation1 [shape = 'u32[144,128]{1,0:T(1,128)}', space=vmem, size = 0x12000, scoped, tag = 'internal scratch']
  %s0 = inlined_call_operand.hbm [shape: bf16[2,12288], index: 0, kind: input, shape index: {}]
  %s1 = inlined_call_operand.hbm [shape: bf16[50,12288], index: 1, kind: input, shape index: {}]
  %s2 = inlined_call_operand.hbm [shape: f32[1,50], index: 2, kind: input, shape index: {}]
  %s3 = inlined_call_operand.hbm [shape: f32[6,50], index: 3, kind: input, shape index: {}]
  %s4 = inlined_call_operand.hbm [shape: f32[1,6], index: 4, kind: input, shape index: {}]
  %s5 = inlined_call_operand.hbm [shape: f32[2,6], index: 5, kind: output, shape index: {}]
  %s6 = sld [smem:[#allocation0]]
  $region50: #{tpu_custom_call.1} parent=0
    _
  %s8 = ssub.s32 1, %s6
  %s9 = scalar_select 0, %s8, %s6
  $region1: #{tpu_custom_call.1} parent=0
    #allocation2 [shape = 'u8[49152]{0}', space=vmem, size = 0xc000, scoped, tag = 'input window, operand 0, single buffered']
    #allocation3 [shape = 's32[1]{0}', space=sflag, size = 0x4, scoped, tag = 'scoped memory for tpu_custom_call.1']
    #allocation4 [shape = 's32[1]{0}', space=sflag, size = 0x4, scoped, tag = 'scoped memory for tpu_custom_call.1']
    #allocation5 [shape = 'u8[1376256]{0}', space=vmem, size = 0x150000, scoped, tag = 'input window, operand 1, single buffered']
    #allocation6 [shape = 's32[1]{0}', space=sflag, size = 0x4, scoped, tag = 'scoped memory for tpu_custom_call.1']
    #allocation7 [shape = 'u8[512]{0}', space=vmem, size = 0x400, scoped, tag = 'input window, operand 2, single buffered']
    #allocation8 [shape = 'u8[4096]{0}', space=vmem, size = 0x1000, scoped, tag = 'input window, operand 3, single buffered']
    #allocation9 [shape = 's32[1]{0}', space=sflag, size = 0x4, scoped, tag = 'scoped memory for tpu_custom_call.1']
    #allocation10 [shape = 'u8[512]{0}', space=vmem, size = 0x400, scoped, tag = 'input window, operand 4, single buffered']
    #allocation11 [shape = 'u8[1024]{0}', space=vmem, size = 0x400, scoped, tag = 'output window, operand 0, single buffered']
    %10 = vsyncpa [#allocation3], 0
    %11 = vsyncpa [#allocation6], 0
    %12 = vsyncpa [#allocation9], 0
    %13 = vsyncpa [#allocation4], 0
    // Predicated region
    $region2: #{tpu_custom_call.1} parent=1 // pred_check
      _
    $region3: #{tpu_custom_call.1} parent=1 // pred_check_branch
      %15 = sbr.rel (0) target = $region5
    $region4: #{tpu_custom_call.1} parent=1 // pred_region
      %s17 = ssub.s32 1536, 1536
      %18 = vsyncadd [#allocation3], %s17
      %s20 = sshll.u32 [#allocation2], 4
      %s21 = int_to_ptr.vmem [resolvable:$true] %s20
      %23 = dma.hbm_to_vmem [thread:$0]  %s0, 1536, %s21, [#allocation3]
    $region5: #{tpu_custom_call.1} parent=1 // pred_fallthru
      _
    // Predicated region
    $region6: #{tpu_custom_call.1} parent=1 // pred_check
      _
    $region7: #{tpu_custom_call.1} parent=1 // pred_check_branch
      %25 = sbr.rel (0) target = $region9
    $region8: #{tpu_custom_call.1} parent=1 // pred_region
      %s27 = ssub.s32 43008, 43008
      %28 = vsyncadd [#allocation6], %s27
      %s29 = sshll.u32 [#allocation5], 4
      %s30 = int_to_ptr.vmem [resolvable:$true] %s29
      %35 = dma.hbm_to_vmem [thread:$0]  %s1, 43008, %s30, [#allocation6], 6144, 6144, 384
    $region9: #{tpu_custom_call.1} parent=1 // pred_fallthru
      _
    // Predicated region
    $region10: #{tpu_custom_call.1} parent=1 // pred_check
      _
    $region11: #{tpu_custom_call.1} parent=1 // pred_check_branch
      %37 = sbr.rel (0) target = $region13
    $region12: #{tpu_custom_call.1} parent=1 // pred_region
      %s39 = ssub.s32 16, 16
      %40 = vsyncadd [#allocation6], %s39
      %s42 = sshll.u32 [#allocation7], 4
      %s43 = int_to_ptr.vmem [resolvable:$true] %s42
      %45 = dma.hbm_to_vmem [thread:$0]  %s2, 16, %s43, [#allocation6]
    $region13: #{tpu_custom_call.1} parent=1 // pred_fallthru
      _
    // Predicated region
    $region14: #{tpu_custom_call.1} parent=1 // pred_check
      _
    $region15: #{tpu_custom_call.1} parent=1 // pred_check_branch
      %47 = sbr.rel (0) target = $region17
    $region16: #{tpu_custom_call.1} parent=1 // pred_region
      %s49 = ssub.s32 128, 128
      %50 = vsyncadd [#allocation9], %s49
      %s52 = sshll.u32 [#allocation8], 4
      %s53 = int_to_ptr.vmem [resolvable:$true] %s52
      %55 = dma.hbm_to_vmem [thread:$0]  %s3, 128, %s53, [#allocation9]
    $region17: #{tpu_custom_call.1} parent=1 // pred_fallthru
      _
    // Predicated region
    $region18: #{tpu_custom_call.1} parent=1 // pred_check
      _
    $region19: #{tpu_custom_call.1} parent=1 // pred_check_branch
      %57 = sbr.rel (0) target = $region21
    $region20: #{tpu_custom_call.1} parent=1 // pred_region
      %s59 = ssub.s32 16, 16
      %60 = vsyncadd [#allocation9], %s59
      %s62 = sshll.u32 [#allocation10], 4
      %s63 = int_to_ptr.vmem [resolvable:$true] %s62
      %65 = dma.hbm_to_vmem [thread:$0]  %s4, 16, %s63, [#allocation9]
    $region21: #{tpu_custom_call.1} parent=1 // pred_fallthru
      _
    // Predicated region
    $region22: #{tpu_custom_call.1} parent=1 // pred_check
      _
    $region23: #{tpu_custom_call.1} parent=1 // pred_check_branch
      %67 = sbr.rel (0) target = $region25
    $region24: #{tpu_custom_call.1} parent=1 // pred_region
      %68 = dma.done [#allocation3], 1536
    $region25: #{tpu_custom_call.1} parent=1 // pred_fallthru
      _
    // Predicated region
    $region26: #{tpu_custom_call.1} parent=1 // pred_check
      _
    $region27: #{tpu_custom_call.1} parent=1 // pred_check_branch
      %70 = sbr.rel (0) target = $region29
    $region28: #{tpu_custom_call.1} parent=1 // pred_region
      %71 = dma.done [#allocation6], 43008
    $region29: #{tpu_custom_call.1} parent=1 // pred_fallthru
      _
    // Predicated region
    $region30: #{tpu_custom_call.1} parent=1 // pred_check
      _
    $region31: #{tpu_custom_call.1} parent=1 // pred_check_branch
      %73 = sbr.rel (0) target = $region33
    $region32: #{tpu_custom_call.1} parent=1 // pred_region
      %74 = dma.done [#allocation6], 16
    $region33: #{tpu_custom_call.1} parent=1 // pred_fallthru
      _
    // Predicated region
    $region34: #{tpu_custom_call.1} parent=1 // pred_check
      _
    $region35: #{tpu_custom_call.1} parent=1 // pred_check_branch
      %76 = sbr.rel (0) target = $region37
    $region36: #{tpu_custom_call.1} parent=1 // pred_region
      %77 = dma.done [#allocation9], 128
    $region37: #{tpu_custom_call.1} parent=1 // pred_fallthru
      _
    // Predicated region
    $region38: #{tpu_custom_call.1} parent=1 // pred_check
      _
    $region39: #{tpu_custom_call.1} parent=1 // pred_check_branch
      %79 = sbr.rel (0) target = $region41
    $region40: #{tpu_custom_call.1} parent=1 // pred_region
      %80 = dma.done [#allocation9], 16
    $region41: #{tpu_custom_call.1} parent=1 // pred_fallthru
      _
    %v82 = vld [vmem:[#allocation2] sm:$0xff]
    %v83 = vld [vmem:[#allocation2 + $0x8] sm:$0xff]
    %v84 = vld [vmem:[#allocation2 + $0x10] sm:$0xff]
    %v85 = vld [vmem:[#allocation2 + $0x18] sm:$0xff]
    %v86 = vld [vmem:[#allocation2 + $0x20] sm:$0xff]
    %v87 = vld [vmem:[#allocation2 + $0x28] sm:$0xff]
    %v88 = vld [vmem:[#allocation2 + $0x30] sm:$0xff]
    %v89 = vld [vmem:[#allocation2 + $0x38] sm:$0xff]
    %v90 = vld [vmem:[#allocation2 + $0x40] sm:$0xff]
    %v91 = vld [vmem:[#allocation2 + $0x48] sm:$0xff]
    %v92 = vld [vmem:[#allocation2 + $0x50] sm:$0xff]
    %v93 = vld [vmem:[#allocation2 + $0x58] sm:$0xff]
    %v94 = vld [vmem:[#allocation5] sm:$0xff]
    %v95 = vld [vmem:[#allocation5 + $0x8] sm:$0xff]
    %v96 = vld [vmem:[#allocation5 + $0x10] sm:$0xff]
    %v97 = vld [vmem:[#allocation5 + $0x18] sm:$0xff]
    %v98 = vld [vmem:[#allocation5 + $0x20] sm:$0xff]
    %v99 = vld [vmem:[#allocation5 + $0x28] sm:$0xff]
    %v100 = vld [vmem:[#allocation5 + $0x30] sm:$0xff]
    %v101 = vld [vmem:[#allocation5 + $0x38] sm:$0xff]
    %v102 = vld [vmem:[#allocation5 + $0x40] sm:$0xff]
    %v103 = vld [vmem:[#allocation5 + $0x48] sm:$0xff]
    %v104 = vld [vmem:[#allocation5 + $0x50] sm:$0xff]
    %v105 = vld [vmem:[#allocation5 + $0x58] sm:$0xff]
    %v106 = vld [vmem:[#allocation5 + $0x60] sm:$0xff]
    %v107 = vld [vmem:[#allocation5 + $0x68] sm:$0xff]
    %v108 = vld [vmem:[#allocation5 + $0x70] sm:$0xff]
    %v109 = vld [vmem:[#allocation5 + $0x78] sm:$0xff]
    %v110 = vld [vmem:[#allocation5 + $0x80] sm:$0xff]
    %v111 = vld [vmem:[#allocation5 + $0x88] sm:$0xff]
    %v112 = vld [vmem:[#allocation5 + $0x90] sm:$0xff]
    %v113 = vld [vmem:[#allocation5 + $0x98] sm:$0xff]
    %v114 = vld [vmem:[#allocation5 + $0xa0] sm:$0xff]
    %v115 = vld [vmem:[#allocation5 + $0xa8] sm:$0xff]
    %v116 = vld [vmem:[#allocation5 + $0xb0] sm:$0xff]
    %v117 = vld [vmem:[#allocation5 + $0xb8] sm:$0xff]
    %v118 = vld [vmem:[#allocation5 + $0xc0] sm:$0xff]
    %v119 = vld [vmem:[#allocation5 + $0xc8] sm:$0xff]
    %v120 = vld [vmem:[#allocation5 + $0xd0] sm:$0xff]
    %v121 = vld [vmem:[#allocation5 + $0xd8] sm:$0xff]
    %v122 = vld [vmem:[#allocation5 + $0xe0] sm:$0xff]
    %v123 = vld [vmem:[#allocation5 + $0xe8] sm:$0xff]
    %v124 = vld [vmem:[#allocation5 + $0xf0] sm:$0xff]
    %v125 = vld [vmem:[#allocation5 + $0xf8] sm:$0xff]
    %v126 = vld [vmem:[#allocation5 + $0x100] sm:$0xff]
    %v127 = vld [vmem:[#allocation5 + $0x108] sm:$0xff]
    %v128 = vld [vmem:[#allocation5 + $0x110] sm:$0xff]
    %v129 = vld [vmem:[#allocation5 + $0x118] sm:$0xff]
    %v130 = vld [vmem:[#allocation5 + $0x120] sm:$0xff]
    %v131 = vld [vmem:[#allocation5 + $0x128] sm:$0xff]
    %v132 = vld [vmem:[#allocation5 + $0x130] sm:$0xff]
    %v133 = vld [vmem:[#allocation5 + $0x138] sm:$0xff]
    %v134 = vld [vmem:[#allocation5 + $0x140] sm:$0xff]
    %v135 = vld [vmem:[#allocation5 + $0x148] sm:$0xff]
    %v136 = vld [vmem:[#allocation5 + $0x150] sm:$0xff]
    %v137 = vld [vmem:[#allocation5 + $0x158] sm:$0xff]
    %v138 = vld [vmem:[#allocation5 + $0x160] sm:$0xff]
    %v139 = vld [vmem:[#allocation5 + $0x168] sm:$0xff]
    %v140 = vld [vmem:[#allocation5 + $0x170] sm:$0xff]
    %v141 = vld [vmem:[#allocation5 + $0x178] sm:$0xff]
    %v142 = vld [vmem:[#allocation5 + $0x180] sm:$0xff]
    %v143 = vld [vmem:[#allocation5 + $0x188] sm:$0xff]
    %v144 = vld [vmem:[#allocation5 + $0x190] sm:$0xff]
    %v145 = vld [vmem:[#allocation5 + $0x198] sm:$0xff]
    %v146 = vld [vmem:[#allocation5 + $0x1a0] sm:$0xff]
    %v147 = vld [vmem:[#allocation5 + $0x1a8] sm:$0xff]
    %v148 = vld [vmem:[#allocation5 + $0x1b0] sm:$0xff]
    %v149 = vld [vmem:[#allocation5 + $0x1b8] sm:$0xff]
    %v150 = vld [vmem:[#allocation5 + $0x1c0] sm:$0xff]
    %v151 = vld [vmem:[#allocation5 + $0x1c8] sm:$0xff]
    %v152 = vld [vmem:[#allocation5 + $0x1d0] sm:$0xff]
    %v153 = vld [vmem:[#allocation5 + $0x1d8] sm:$0xff]
    %v154 = vld [vmem:[#allocation5 + $0x1e0] sm:$0xff]
    %v155 = vld [vmem:[#allocation5 + $0x1e8] sm:$0xff]
    %v156 = vld [vmem:[#allocation5 + $0x1f0] sm:$0xff]
    %v157 = vld [vmem:[#allocation5 + $0x1f8] sm:$0xff]
    %v158 = vld [vmem:[#allocation5 + $0x200] sm:$0xff]
    %v159 = vld [vmem:[#allocation5 + $0x208] sm:$0xff]
    %v160 = vld [vmem:[#allocation5 + $0x210] sm:$0xff]
    %v161 = vld [vmem:[#allocation5 + $0x218] sm:$0xff]
    %v162 = vld [vmem:[#allocation5 + $0x220] sm:$0xff]
    %v163 = vld [vmem:[#allocation5 + $0x228] sm:$0xff]
    %v164 = vld [vmem:[#allocation5 + $0x230] sm:$0xff]
    %v165 = vld [vmem:[#allocation5 + $0x238] sm:$0xff]
    %v166 = vld [vmem:[#allocation5 + $0x240] sm:$0xff]
    %v167 = vld [vmem:[#allocation5 + $0x248] sm:$0xff]
    %v168 = vld [vmem:[#allocation5 + $0x250] sm:$0xff]
    %v169 = vld [vmem:[#allocation5 + $0x258] sm:$0xff]
    %v170 = vld [vmem:[#allocation5 + $0x260] sm:$0xff]
    %v171 = vld [vmem:[#allocation5 + $0x268] sm:$0xff]
    %v172 = vld [vmem:[#allocation5 + $0x270] sm:$0xff]
    %v173 = vld [vmem:[#allocation5 + $0x278] sm:$0xff]
    %v174 = vld [vmem:[#allocation5 + $0x280] sm:$0xff]
    %v175 = vld [vmem:[#allocation5 + $0x288] sm:$0xff]
    %v176 = vld [vmem:[#allocation5 + $0x290] sm:$0xff]
    %v177 = vld [vmem:[#allocation5 + $0x298] sm:$0xff]
    %v178 = vld [vmem:[#allocation5 + $0x2a0] sm:$0xff]
    %v179 = vld [vmem:[#allocation5 + $0x2a8] sm:$0xff]
    %v180 = vld [vmem:[#allocation5 + $0x2b0] sm:$0xff]
    %v181 = vld [vmem:[#allocation5 + $0x2b8] sm:$0xff]
    %v182 = vld [vmem:[#allocation5 + $0x2c0] sm:$0xff]
    %v183 = vld [vmem:[#allocation5 + $0x2c8] sm:$0xff]
    %v184 = vld [vmem:[#allocation5 + $0x2d0] sm:$0xff]
    %v185 = vld [vmem:[#allocation5 + $0x2d8] sm:$0xff]
    %v186 = vld [vmem:[#allocation5 + $0x2e0] sm:$0xff]
    %v187 = vld [vmem:[#allocation5 + $0x2e8] sm:$0xff]
    %v188 = vld [vmem:[#allocation5 + $0x2f0] sm:$0xff]
    %v189 = vld [vmem:[#allocation5 + $0x2f8] sm:$0xff]
    %v190 = vld [vmem:[#allocation5 + $0x300] sm:$0xff]
    %v191 = vld [vmem:[#allocation5 + $0x308] sm:$0xff]
    %v192 = vld [vmem:[#allocation5 + $0x310] sm:$0xff]
    %v193 = vld [vmem:[#allocation5 + $0x318] sm:$0xff]
    %v194 = vld [vmem:[#allocation5 + $0x320] sm:$0xff]
    %v195 = vld [vmem:[#allocation5 + $0x328] sm:$0xff]
    %v196 = vld [vmem:[#allocation5 + $0x330] sm:$0xff]
    %v197 = vld [vmem:[#allocation5 + $0x338] sm:$0xff]
    %v198 = vld [vmem:[#allocation5 + $0x340] sm:$0xff]
    %v199 = vld [vmem:[#allocation5 + $0x348] sm:$0xff]
    %v200 = vld [vmem:[#allocation5 + $0x350] sm:$0xff]
    %v201 = vld [vmem:[#allocation5 + $0x358] sm:$0xff]
    %v202 = vld [vmem:[#allocation5 + $0x360] sm:$0xff]
    %v203 = vld [vmem:[#allocation5 + $0x368] sm:$0xff]
    %v204 = vld [vmem:[#allocation5 + $0x370] sm:$0xff]
    %v205 = vld [vmem:[#allocation5 + $0x378] sm:$0xff]
    %v206 = vld [vmem:[#allocation5 + $0x380] sm:$0xff]
    %v207 = vld [vmem:[#allocation5 + $0x388] sm:$0xff]
    %v208 = vld [vmem:[#allocation5 + $0x390] sm:$0xff]
    %v209 = vld [vmem:[#allocation5 + $0x398] sm:$0xff]
    %v210 = vld [vmem:[#allocation5 + $0x3a0] sm:$0xff]
    %v211 = vld [vmem:[#allocation5 + $0x3a8] sm:$0xff]
    %v212 = vld [vmem:[#allocation5 + $0x3b0] sm:$0xff]
    %v213 = vld [vmem:[#allocation5 + $0x3b8] sm:$0xff]
    %v214 = vld [vmem:[#allocation5 + $0x3c0] sm:$0xff]
    %v215 = vld [vmem:[#allocation5 + $0x3c8] sm:$0xff]
    %v216 = vld [vmem:[#allocation5 + $0x3d0] sm:$0xff]
    %v217 = vld [vmem:[#allocation5 + $0x3d8] sm:$0xff]
    %v218 = vld [vmem:[#allocation5 + $0x3e0] sm:$0xff]
    %v219 = vld [vmem:[#allocation5 + $0x3e8] sm:$0xff]
    %v220 = vld [vmem:[#allocation5 + $0x3f0] sm:$0xff]
    %v221 = vld [vmem:[#allocation5 + $0x3f8] sm:$0xff]
    %v222 = vld [vmem:[#allocation5 + $0x400] sm:$0xff]
    %v223 = vld [vmem:[#allocation5 + $0x408] sm:$0xff]
    %v224 = vld [vmem:[#allocation5 + $0x410] sm:$0xff]
    %v225 = vld [vmem:[#allocation5 + $0x418] sm:$0xff]
    %v226 = vld [vmem:[#allocation5 + $0x420] sm:$0xff]
    %v227 = vld [vmem:[#allocation5 + $0x428] sm:$0xff]
    %v228 = vld [vmem:[#allocation5 + $0x430] sm:$0xff]
    %v229 = vld [vmem:[#allocation5 + $0x438] sm:$0xff]
    %v230 = vld [vmem:[#allocation5 + $0x440] sm:$0xff]
    %v231 = vld [vmem:[#allocation5 + $0x448] sm:$0xff]
    %v232 = vld [vmem:[#allocation5 + $0x450] sm:$0xff]
    %v233 = vld [vmem:[#allocation5 + $0x458] sm:$0xff]
    %v234 = vld [vmem:[#allocation5 + $0x460] sm:$0xff]
    %v235 = vld [vmem:[#allocation5 + $0x468] sm:$0xff]
    %v236 = vld [vmem:[#allocation5 + $0x470] sm:$0xff]
    %v237 = vld [vmem:[#allocation5 + $0x478] sm:$0xff]
    %v238 = vld [vmem:[#allocation5 + $0x480] sm:$0xff]
    %v239 = vld [vmem:[#allocation5 + $0x488] sm:$0xff]
    %v240 = vld [vmem:[#allocation5 + $0x490] sm:$0xff]
    %v241 = vld [vmem:[#allocation5 + $0x498] sm:$0xff]
    %v242 = vld [vmem:[#allocation5 + $0x4a0] sm:$0xff]
    %v243 = vld [vmem:[#allocation5 + $0x4a8] sm:$0xff]
    %v244 = vld [vmem:[#allocation5 + $0x4b0] sm:$0xff]
    %v245 = vld [vmem:[#allocation5 + $0x4b8] sm:$0xff]
    %v246 = vld [vmem:[#allocation5 + $0x4c0] sm:$0xff]
    %v247 = vld [vmem:[#allocation5 + $0x4c8] sm:$0xff]
    %v248 = vld [vmem:[#allocation5 + $0x4d0] sm:$0xff]
    %v249 = vld [vmem:[#allocation5 + $0x4d8] sm:$0xff]
    %v250 = vld [vmem:[#allocation5 + $0x4e0] sm:$0xff]
    %v251 = vld [vmem:[#allocation5 + $0x4e8] sm:$0xff]
    %v252 = vld [vmem:[#allocation5 + $0x4f0] sm:$0xff]
    %v253 = vld [vmem:[#allocation5 + $0x4f8] sm:$0xff]
    %v254 = vld [vmem:[#allocation5 + $0x500] sm:$0xff]
    %v255 = vld [vmem:[#allocation5 + $0x508] sm:$0xff]
    %v256 = vld [vmem:[#allocation5 + $0x510] sm:$0xff]
    %v257 = vld [vmem:[#allocation5 + $0x518] sm:$0xff]
    %v258 = vld [vmem:[#allocation5 + $0x520] sm:$0xff]
    %v259 = vld [vmem:[#allocation5 + $0x528] sm:$0xff]
    %v260 = vld [vmem:[#allocation5 + $0x530] sm:$0xff]
    %v261 = vld [vmem:[#allocation5 + $0x538] sm:$0xff]
    %v262 = vld [vmem:[#allocation5 + $0x540] sm:$0xff]
    %v263 = vld [vmem:[#allocation5 + $0x548] sm:$0xff]
    %v264 = vld [vmem:[#allocation5 + $0x550] sm:$0xff]
    %v265 = vld [vmem:[#allocation5 + $0x558] sm:$0xff]
    %v266 = vld [vmem:[#allocation5 + $0x560] sm:$0xff]
    %v267 = vld [vmem:[#allocation5 + $0x568] sm:$0xff]
    %v268 = vld [vmem:[#allocation5 + $0x570] sm:$0xff]
    %v269 = vld [vmem:[#allocation5 + $0x578] sm:$0xff]
    %v270 = vld [vmem:[#allocation5 + $0x580] sm:$0xff]
    %v271 = vld [vmem:[#allocation5 + $0x588] sm:$0xff]
    %v272 = vld [vmem:[#allocation5 + $0x590] sm:$0xff]
    %v273 = vld [vmem:[#allocation5 + $0x598] sm:$0xff]
    %v274 = vld [vmem:[#allocation5 + $0x5a0] sm:$0xff]
    %v275 = vld [vmem:[#allocation5 + $0x5a8] sm:$0xff]
    %v276 = vld [vmem:[#allocation5 + $0x5b0] sm:$0xff]
    %v277 = vld [vmem:[#allocation5 + $0x5b8] sm:$0xff]
    %v278 = vld [vmem:[#allocation5 + $0x5c0] sm:$0xff]
    %v279 = vld [vmem:[#allocation5 + $0x5c8] sm:$0xff]
    %v280 = vld [vmem:[#allocation5 + $0x5d0] sm:$0xff]
    %v281 = vld [vmem:[#allocation5 + $0x5d8] sm:$0xff]
    %v282 = vld [vmem:[#allocation5 + $0x5e0] sm:$0xff]
    %v283 = vld [vmem:[#allocation5 + $0x5e8] sm:$0xff]
    %v284 = vld [vmem:[#allocation5 + $0x5f0] sm:$0xff]
    %v285 = vld [vmem:[#allocation5 + $0x5f8] sm:$0xff]
    %v286 = vld [vmem:[#allocation5 + $0x600] sm:$0xff]
    %v287 = vld [vmem:[#allocation5 + $0x608] sm:$0xff]
    %v288 = vld [vmem:[#allocation5 + $0x610] sm:$0xff]
    %v289 = vld [vmem:[#allocation5 + $0x618] sm:$0xff]
    %v290 = vld [vmem:[#allocation5 + $0x620] sm:$0xff]
    %v291 = vld [vmem:[#allocation5 + $0x628] sm:$0xff]
    %v292 = vld [vmem:[#allocation5 + $0x630] sm:$0xff]
    %v293 = vld [vmem:[#allocation5 + $0x638] sm:$0xff]
    %v294 = vld [vmem:[#allocation5 + $0x640] sm:$0xff]
    %v295 = vld [vmem:[#allocation5 + $0x648] sm:$0xff]
    %v296 = vld [vmem:[#allocation5 + $0x650] sm:$0xff]
    %v297 = vld [vmem:[#allocation5 + $0x658] sm:$0xff]
    %v298 = vld [vmem:[#allocation5 + $0x660] sm:$0xff]
    %v299 = vld [vmem:[#allocation5 + $0x668] sm:$0xff]
    %v300 = vld [vmem:[#allocation5 + $0x670] sm:$0xff]
    %v301 = vld [vmem:[#allocation5 + $0x678] sm:$0xff]
    %v302 = vld [vmem:[#allocation5 + $0x680] sm:$0xff]
    %v303 = vld [vmem:[#allocation5 + $0x688] sm:$0xff]
    %v304 = vld [vmem:[#allocation5 + $0x690] sm:$0xff]
    %v305 = vld [vmem:[#allocation5 + $0x698] sm:$0xff]
    %v306 = vld [vmem:[#allocation5 + $0x6a0] sm:$0xff]
    %v307 = vld [vmem:[#allocation5 + $0x6a8] sm:$0xff]
    %v308 = vld [vmem:[#allocation5 + $0x6b0] sm:$0xff]
    %v309 = vld [vmem:[#allocation5 + $0x6b8] sm:$0xff]
    %v310 = vld [vmem:[#allocation5 + $0x6c0] sm:$0xff]
    %v311 = vld [vmem:[#allocation5 + $0x6c8] sm:$0xff]
    %v312 = vld [vmem:[#allocation5 + $0x6d0] sm:$0xff]
    %v313 = vld [vmem:[#allocation5 + $0x6d8] sm:$0xff]
    %v314 = vld [vmem:[#allocation5 + $0x6e0] sm:$0xff]
    %v315 = vld [vmem:[#allocation5 + $0x6e8] sm:$0xff]
    %v316 = vld [vmem:[#allocation5 + $0x6f0] sm:$0xff]
    %v317 = vld [vmem:[#allocation5 + $0x6f8] sm:$0xff]
    %v318 = vld [vmem:[#allocation5 + $0x700] sm:$0xff]
    %v319 = vld [vmem:[#allocation5 + $0x708] sm:$0xff]
    %v320 = vld [vmem:[#allocation5 + $0x710] sm:$0xff]
    %v321 = vld [vmem:[#allocation5 + $0x718] sm:$0xff]
    %v322 = vld [vmem:[#allocation5 + $0x720] sm:$0xff]
    %v323 = vld [vmem:[#allocation5 + $0x728] sm:$0xff]
    %v324 = vld [vmem:[#allocation5 + $0x730] sm:$0xff]
    %v325 = vld [vmem:[#allocation5 + $0x738] sm:$0xff]
    %v326 = vld [vmem:[#allocation5 + $0x740] sm:$0xff]
    %v327 = vld [vmem:[#allocation5 + $0x748] sm:$0xff]
    %v328 = vld [vmem:[#allocation5 + $0x750] sm:$0xff]
    %v329 = vld [vmem:[#allocation5 + $0x758] sm:$0xff]
    %v330 = vld [vmem:[#allocation5 + $0x760] sm:$0xff]
    %v331 = vld [vmem:[#allocation5 + $0x768] sm:$0xff]
    %v332 = vld [vmem:[#allocation5 + $0x770] sm:$0xff]
    %v333 = vld [vmem:[#allocation5 + $0x778] sm:$0xff]
    %v334 = vld [vmem:[#allocation5 + $0x780] sm:$0xff]
    %v335 = vld [vmem:[#allocation5 + $0x788] sm:$0xff]
    %v336 = vld [vmem:[#allocation5 + $0x790] sm:$0xff]
    %v337 = vld [vmem:[#allocation5 + $0x798] sm:$0xff]
    %v338 = vld [vmem:[#allocation5 + $0x7a0] sm:$0xff]
    %v339 = vld [vmem:[#allocation5 + $0x7a8] sm:$0xff]
    %v340 = vld [vmem:[#allocation5 + $0x7b0] sm:$0xff]
    %v341 = vld [vmem:[#allocation5 + $0x7b8] sm:$0xff]
    %v342 = vld [vmem:[#allocation5 + $0x7c0] sm:$0xff]
    %v343 = vld [vmem:[#allocation5 + $0x7c8] sm:$0xff]
    %v344 = vld [vmem:[#allocation5 + $0x7d0] sm:$0xff]
    %v345 = vld [vmem:[#allocation5 + $0x7d8] sm:$0xff]
    %v346 = vld [vmem:[#allocation5 + $0x7e0] sm:$0xff]
    %v347 = vld [vmem:[#allocation5 + $0x7e8] sm:$0xff]
    %v348 = vld [vmem:[#allocation5 + $0x7f0] sm:$0xff]
    %v349 = vld [vmem:[#allocation5 + $0x7f8] sm:$0xff]
    %v350 = vld [vmem:[#allocation5 + $0x800] sm:$0xff]
    %v351 = vld [vmem:[#allocation5 + $0x808] sm:$0xff]
    %v352 = vld [vmem:[#allocation5 + $0x810] sm:$0xff]
    %v353 = vld [vmem:[#allocation5 + $0x818] sm:$0xff]
    %v354 = vld [vmem:[#allocation5 + $0x820] sm:$0xff]
    %v355 = vld [vmem:[#allocation5 + $0x828] sm:$0xff]
    %v356 = vld [vmem:[#allocation5 + $0x830] sm:$0xff]
    %v357 = vld [vmem:[#allocation5 + $0x838] sm:$0xff]
    %v358 = vld [vmem:[#allocation5 + $0x840] sm:$0xff]
    %v359 = vld [vmem:[#allocation5 + $0x848] sm:$0xff]
    %v360 = vld [vmem:[#allocation5 + $0x850] sm:$0xff]
    %v361 = vld [vmem:[#allocation5 + $0x858] sm:$0xff]
    %v362 = vld [vmem:[#allocation5 + $0x860] sm:$0xff]
    %v363 = vld [vmem:[#allocation5 + $0x868] sm:$0xff]
    %v364 = vld [vmem:[#allocation5 + $0x870] sm:$0xff]
    %v365 = vld [vmem:[#allocation5 + $0x878] sm:$0xff]
    %v366 = vld [vmem:[#allocation5 + $0x880] sm:$0xff]
    %v367 = vld [vmem:[#allocation5 + $0x888] sm:$0xff]
    %v368 = vld [vmem:[#allocation5 + $0x890] sm:$0xff]
    %v369 = vld [vmem:[#allocation5 + $0x898] sm:$0xff]
    %v370 = vld [vmem:[#allocation5 + $0x8a0] sm:$0xff]
    %v371 = vld [vmem:[#allocation5 + $0x8a8] sm:$0xff]
    %v372 = vld [vmem:[#allocation5 + $0x8b0] sm:$0xff]
    %v373 = vld [vmem:[#allocation5 + $0x8b8] sm:$0xff]
    %v374 = vld [vmem:[#allocation5 + $0x8c0] sm:$0xff]
    %v375 = vld [vmem:[#allocation5 + $0x8c8] sm:$0xff]
    %v376 = vld [vmem:[#allocation5 + $0x8d0] sm:$0xff]
    %v377 = vld [vmem:[#allocation5 + $0x8d8] sm:$0xff]
    %v378 = vld [vmem:[#allocation5 + $0x8e0] sm:$0xff]
    %v379 = vld [vmem:[#allocation5 + $0x8e8] sm:$0xff]
    %v380 = vld [vmem:[#allocation5 + $0x8f0] sm:$0xff]
    %v381 = vld [vmem:[#allocation5 + $0x8f8] sm:$0xff]
    %v382 = vld [vmem:[#allocation5 + $0x900] sm:$0x11]
    %v383 = vld [vmem:[#allocation5 + $0x908] sm:$0x11]
    %v384 = vld [vmem:[#allocation5 + $0x910] sm:$0x11]
    %v385 = vld [vmem:[#allocation5 + $0x918] sm:$0x11]
    %v386 = vld [vmem:[#allocation5 + $0x920] sm:$0x11]
    %v387 = vld [vmem:[#allocation5 + $0x928] sm:$0x11]
    %v388 = vld [vmem:[#allocation5 + $0x930] sm:$0x11]
    %v389 = vld [vmem:[#allocation5 + $0x938] sm:$0x11]
    %v390 = vld [vmem:[#allocation5 + $0x940] sm:$0x11]
    %v391 = vld [vmem:[#allocation5 + $0x948] sm:$0x11]
    %v392 = vld [vmem:[#allocation5 + $0x950] sm:$0x11]
    %v393 = vld [vmem:[#allocation5 + $0x958] sm:$0x11]
    %v394 = vld [vmem:[#allocation5 + $0x960] sm:$0x11]
    %v395 = vld [vmem:[#allocation5 + $0x968] sm:$0x11]
    %v396 = vld [vmem:[#allocation5 + $0x970] sm:$0x11]
    %v397 = vld [vmem:[#allocation5 + $0x978] sm:$0x11]
    %v398 = vld [vmem:[#allocation5 + $0x980] sm:$0x11]
    %v399 = vld [vmem:[#allocation5 + $0x988] sm:$0x11]
    %v400 = vld [vmem:[#allocation5 + $0x990] sm:$0x11]
    %v401 = vld [vmem:[#allocation5 + $0x998] sm:$0x11]
    %v402 = vld [vmem:[#allocation5 + $0x9a0] sm:$0x11]
    %v403 = vld [vmem:[#allocation5 + $0x9a8] sm:$0x11]
    %v404 = vld [vmem:[#allocation5 + $0x9b0] sm:$0x11]
    %v405 = vld [vmem:[#allocation5 + $0x9b8] sm:$0x11]
    %v406 = vld [vmem:[#allocation5 + $0x9c0] sm:$0x11]
    %v407 = vld [vmem:[#allocation5 + $0x9c8] sm:$0x11]
    %v408 = vld [vmem:[#allocation5 + $0x9d0] sm:$0x11]
    %v409 = vld [vmem:[#allocation5 + $0x9d8] sm:$0x11]
    %v410 = vld [vmem:[#allocation5 + $0x9e0] sm:$0x11]
    %v411 = vld [vmem:[#allocation5 + $0x9e8] sm:$0x11]
    %v412 = vld [vmem:[#allocation5 + $0x9f0] sm:$0x11]
    %v413 = vld [vmem:[#allocation5 + $0x9f8] sm:$0x11]
    %v414 = vld [vmem:[#allocation5 + $0xa00] sm:$0x11]
    %v415 = vld [vmem:[#allocation5 + $0xa08] sm:$0x11]
    %v416 = vld [vmem:[#allocation5 + $0xa10] sm:$0x11]
    %v417 = vld [vmem:[#allocation5 + $0xa18] sm:$0x11]
    %v418 = vld [vmem:[#allocation5 + $0xa20] sm:$0x11]
    %v419 = vld [vmem:[#allocation5 + $0xa28] sm:$0x11]
    %v420 = vld [vmem:[#allocation5 + $0xa30] sm:$0x11]
    %v421 = vld [vmem:[#allocation5 + $0xa38] sm:$0x11]
    %v422 = vld [vmem:[#allocation5 + $0xa40] sm:$0x11]
    %v423 = vld [vmem:[#allocation5 + $0xa48] sm:$0x11]
    %v424 = vld [vmem:[#allocation5 + $0xa50] sm:$0x11]
    %v425 = vld [vmem:[#allocation5 + $0xa58] sm:$0x11]
    %v426 = vld [vmem:[#allocation5 + $0xa60] sm:$0x11]
    %v427 = vld [vmem:[#allocation5 + $0xa68] sm:$0x11]
    %v428 = vld [vmem:[#allocation5 + $0xa70] sm:$0x11]
    %v429 = vld [vmem:[#allocation5 + $0xa78] sm:$0x11]
    %v430 = vld [vmem:[#allocation7] sm:$0x1]
    %v432 = vlaneseq
    %v433 = vshrl.u32 %v432, 7
    %v434 = vsub.s32 0, %v433
    %v435 = vrot.slane %v430, %v434
    %v449 = vcombine.high %v82, %v82
    %v451 = vunpack.c.l.s4 1966171168
    %v452 = vunpack.c.0.s8 %v451
    %v453 = vlaneseq
    %v454 = vshrl.u32 %v453, 7
    %v455 = vsub.s32 %v452, %v454
    %v456 = vrot.slane %v82, %v455
    %v458 = vunpack.c.l.s4 1966171168
    %v459 = vunpack.c.0.s8 %v458
    %v460 = vlaneseq
    %v461 = vshrl.u32 %v460, 7
    %v462 = vsub.s32 %v459, %v461
    %v463 = vrot.slane %v449, %v462
    %v464 = vcombine.high %v456, %v456
    %v465 = vcombine.high %v463, %v463
    %v467 = vunpack.c.l.s4 1966171168
    %v468 = vunpack.c.0.s8 %v467
    %v469 = vlaneseq
    %v470 = vshrl.u32 %v469, 7
    %v471 = vsub.s32 %v468, %v470
    %v472 = vrot.slane %v456, %v471
    %v474 = vunpack.c.l.s4 1966171168
    %v475 = vunpack.c.0.s8 %v474
    %v476 = vlaneseq
    %v477 = vshrl.u32 %v476, 7
    %v478 = vsub.s32 %v475, %v477
    %v479 = vrot.slane %v463, %v478
    %v481 = vunpack.c.l.s4 1966171168
    %v482 = vunpack.c.0.s8 %v481
    %v483 = vlaneseq
    %v484 = vshrl.u32 %v483, 7
    %v485 = vsub.s32 %v482, %v484
    %v486 = vrot.slane %v464, %v485
    %v488 = vunpack.c.l.s4 1966171168
    %v489 = vunpack.c.0.s8 %v488
    %v490 = vlaneseq
    %v491 = vshrl.u32 %v490, 7
    %v492 = vsub.s32 %v489, %v491
    %v493 = vrot.slane %v465, %v492
    %v494 = vcombine.high %v472, %v472
    %v495 = vcombine.high %v479, %v479
    %v496 = vcombine.high %v486, %v486
    %v497 = vcombine.high %v493, %v493
    %v498 = vcombine.high %v83, %v83
    %v500 = vunpack.c.l.s4 1966171168
    %v501 = vunpack.c.0.s8 %v500
    %v502 = vlaneseq
    %v503 = vshrl.u32 %v502, 7
    %v504 = vsub.s32 %v501, %v503
    %v505 = vrot.slane %v83, %v504
    %v507 = vunpack.c.l.s4 1966171168
    %v508 = vunpack.c.0.s8 %v507
    %v509 = vlaneseq
    %v510 = vshrl.u32 %v509, 7
    %v511 = vsub.s32 %v508, %v510
    %v512 = vrot.slane %v498, %v511
    %v513 = vcombine.high %v505, %v505
    %v514 = vcombine.high %v512, %v512
    %v516 = vunpack.c.l.s4 1966171168
    %v517 = vunpack.c.0.s8 %v516
    %v518 = vlaneseq
    %v519 = vshrl.u32 %v518, 7
    %v520 = vsub.s32 %v517, %v519
    %v521 = vrot.slane %v505, %v520
    %v523 = vunpack.c.l.s4 1966171168
    %v524 = vunpack.c.0.s8 %v523
    %v525 = vlaneseq
    %v526 = vshrl.u32 %v525, 7
    %v527 = vsub.s32 %v524, %v526
    %v528 = vrot.slane %v512, %v527
    %v530 = vunpack.c.l.s4 1966171168
    %v531 = vunpack.c.0.s8 %v530
    %v532 = vlaneseq
    %v533 = vshrl.u32 %v532, 7
    %v534 = vsub.s32 %v531, %v533
    %v535 = vrot.slane %v513, %v534
    %v537 = vunpack.c.l.s4 1966171168
    %v538 = vunpack.c.0.s8 %v537
    %v539 = vlaneseq
    %v540 = vshrl.u32 %v539, 7
    %v541 = vsub.s32 %v538, %v540
    %v542 = vrot.slane %v514, %v541
    %v543 = vcombine.high %v521, %v521
    %v544 = vcombine.high %v528, %v528
    %v545 = vcombine.high %v535, %v535
    %v546 = vcombine.high %v542, %v542
    %v547 = vcombine.high %v84, %v84
    %v549 = vunpack.c.l.s4 1966171168
    %v550 = vunpack.c.0.s8 %v549
    %v551 = vlaneseq
    %v552 = vshrl.u32 %v551, 7
    %v553 = vsub.s32 %v550, %v552
    %v554 = vrot.slane %v84, %v553
    %v556 = vunpack.c.l.s4 1966171168
    %v557 = vunpack.c.0.s8 %v556
    %v558 = vlaneseq
    %v559 = vshrl.u32 %v558, 7
    %v560 = vsub.s32 %v557, %v559
    %v561 = vrot.slane %v547, %v560
    %v562 = vcombine.high %v554, %v554
    %v563 = vcombine.high %v561, %v561
    %v565 = vunpack.c.l.s4 1966171168
    %v566 = vunpack.c.0.s8 %v565
    %v567 = vlaneseq
    %v568 = vshrl.u32 %v567, 7
    %v569 = vsub.s32 %v566, %v568
    %v570 = vrot.slane %v554, %v569
    %v572 = vunpack.c.l.s4 1966171168
    %v573 = vunpack.c.0.s8 %v572
    %v574 = vlaneseq
    %v575 = vshrl.u32 %v574, 7
    %v576 = vsub.s32 %v573, %v575
    %v577 = vrot.slane %v561, %v576
    %v579 = vunpack.c.l.s4 1966171168
    %v580 = vunpack.c.0.s8 %v579
    %v581 = vlaneseq
    %v582 = vshrl.u32 %v581, 7
    %v583 = vsub.s32 %v580, %v582
    %v584 = vrot.slane %v562, %v583
    %v586 = vunpack.c.l.s4 1966171168
    %v587 = vunpack.c.0.s8 %v586
    %v588 = vlaneseq
    %v589 = vshrl.u32 %v588, 7
    %v590 = vsub.s32 %v587, %v589
    %v591 = vrot.slane %v563, %v590
    %v592 = vcombine.high %v570, %v570
    %v593 = vcombine.high %v577, %v577
    %v594 = vcombine.high %v584, %v584
    %v595 = vcombine.high %v591, %v591
    %v596 = vcombine.high %v85, %v85
    %v598 = vunpack.c.l.s4 1966171168
    %v599 = vunpack.c.0.s8 %v598
    %v600 = vlaneseq
    %v601 = vshrl.u32 %v600, 7
    %v602 = vsub.s32 %v599, %v601
    %v603 = vrot.slane %v85, %v602
    %v605 = vunpack.c.l.s4 1966171168
    %v606 = vunpack.c.0.s8 %v605
    %v607 = vlaneseq
    %v608 = vshrl.u32 %v607, 7
    %v609 = vsub.s32 %v606, %v608
    %v610 = vrot.slane %v596, %v609
    %v611 = vcombine.high %v603, %v603
    %v612 = vcombine.high %v610, %v610
    %v614 = vunpack.c.l.s4 1966171168
    %v615 = vunpack.c.0.s8 %v614
    %v616 = vlaneseq
    %v617 = vshrl.u32 %v616, 7
    %v618 = vsub.s32 %v615, %v617
    %v619 = vrot.slane %v603, %v618
    %v621 = vunpack.c.l.s4 1966171168
    %v622 = vunpack.c.0.s8 %v621
    %v623 = vlaneseq
    %v624 = vshrl.u32 %v623, 7
    %v625 = vsub.s32 %v622, %v624
    %v626 = vrot.slane %v610, %v625
    %v628 = vunpack.c.l.s4 1966171168
    %v629 = vunpack.c.0.s8 %v628
    %v630 = vlaneseq
    %v631 = vshrl.u32 %v630, 7
    %v632 = vsub.s32 %v629, %v631
    %v633 = vrot.slane %v611, %v632
    %v635 = vunpack.c.l.s4 1966171168
    %v636 = vunpack.c.0.s8 %v635
    %v637 = vlaneseq
    %v638 = vshrl.u32 %v637, 7
    %v639 = vsub.s32 %v636, %v638
    %v640 = vrot.slane %v612, %v639
    %v641 = vcombine.high %v619, %v619
    %v642 = vcombine.high %v626, %v626
    %v643 = vcombine.high %v633, %v633
    %v644 = vcombine.high %v640, %v640
    %v645 = vcombine.high %v86, %v86
    %v647 = vunpack.c.l.s4 1966171168
    %v648 = vunpack.c.0.s8 %v647
    %v649 = vlaneseq
    %v650 = vshrl.u32 %v649, 7
    %v651 = vsub.s32 %v648, %v650
    %v652 = vrot.slane %v86, %v651
    %v654 = vunpack.c.l.s4 1966171168
    %v655 = vunpack.c.0.s8 %v654
    %v656 = vlaneseq
    %v657 = vshrl.u32 %v656, 7
    %v658 = vsub.s32 %v655, %v657
    %v659 = vrot.slane %v645, %v658
    %v660 = vcombine.high %v652, %v652
    %v661 = vcombine.high %v659, %v659
    %v663 = vunpack.c.l.s4 1966171168
    %v664 = vunpack.c.0.s8 %v663
    %v665 = vlaneseq
    %v666 = vshrl.u32 %v665, 7
    %v667 = vsub.s32 %v664, %v666
    %v668 = vrot.slane %v652, %v667
    %v670 = vunpack.c.l.s4 1966171168
    %v671 = vunpack.c.0.s8 %v670
    %v672 = vlaneseq
    %v673 = vshrl.u32 %v672, 7
    %v674 = vsub.s32 %v671, %v673
    %v675 = vrot.slane %v659, %v674
    %v677 = vunpack.c.l.s4 1966171168
    %v678 = vunpack.c.0.s8 %v677
    %v679 = vlaneseq
    %v680 = vshrl.u32 %v679, 7
    %v681 = vsub.s32 %v678, %v680
    %v682 = vrot.slane %v660, %v681
    %v684 = vunpack.c.l.s4 1966171168
    %v685 = vunpack.c.0.s8 %v684
    %v686 = vlaneseq
    %v687 = vshrl.u32 %v686, 7
    %v688 = vsub.s32 %v685, %v687
    %v689 = vrot.slane %v661, %v688
    %v690 = vcombine.high %v668, %v668
    %v691 = vcombine.high %v675, %v675
    %v692 = vcombine.high %v682, %v682
    %v693 = vcombine.high %v689, %v689
    %v694 = vcombine.high %v87, %v87
    %v696 = vunpack.c.l.s4 1966171168
    %v697 = vunpack.c.0.s8 %v696
    %v698 = vlaneseq
    %v699 = vshrl.u32 %v698, 7
    %v700 = vsub.s32 %v697, %v699
    %v701 = vrot.slane %v87, %v700
    %v703 = vunpack.c.l.s4 1966171168
    %v704 = vunpack.c.0.s8 %v703
    %v705 = vlaneseq
    %v706 = vshrl.u32 %v705, 7
    %v707 = vsub.s32 %v704, %v706
    %v708 = vrot.slane %v694, %v707
    %v709 = vcombine.high %v701, %v701
    %v710 = vcombine.high %v708, %v708
    %v712 = vunpack.c.l.s4 1966171168
    %v713 = vunpack.c.0.s8 %v712
    %v714 = vlaneseq
    %v715 = vshrl.u32 %v714, 7
    %v716 = vsub.s32 %v713, %v715
    %v717 = vrot.slane %v701, %v716
    %v719 = vunpack.c.l.s4 1966171168
    %v720 = vunpack.c.0.s8 %v719
    %v721 = vlaneseq
    %v722 = vshrl.u32 %v721, 7
    %v723 = vsub.s32 %v720, %v722
    %v724 = vrot.slane %v708, %v723
    %v726 = vunpack.c.l.s4 1966171168
    %v727 = vunpack.c.0.s8 %v726
    %v728 = vlaneseq
    %v729 = vshrl.u32 %v728, 7
    %v730 = vsub.s32 %v727, %v729
    %v731 = vrot.slane %v709, %v730
    %v733 = vunpack.c.l.s4 1966171168
    %v734 = vunpack.c.0.s8 %v733
    %v735 = vlaneseq
    %v736 = vshrl.u32 %v735, 7
    %v737 = vsub.s32 %v734, %v736
    %v738 = vrot.slane %v710, %v737
    %v739 = vcombine.high %v717, %v717
    %v740 = vcombine.high %v724, %v724
    %v741 = vcombine.high %v731, %v731
    %v742 = vcombine.high %v738, %v738
    %v743 = vcombine.high %v88, %v88
    %v745 = vunpack.c.l.s4 1966171168
    %v746 = vunpack.c.0.s8 %v745
    %v747 = vlaneseq
    %v748 = vshrl.u32 %v747, 7
    %v749 = vsub.s32 %v746, %v748
    %v750 = vrot.slane %v88, %v749
    %v752 = vunpack.c.l.s4 1966171168
    %v753 = vunpack.c.0.s8 %v752
    %v754 = vlaneseq
    %v755 = vshrl.u32 %v754, 7
    %v756 = vsub.s32 %v753, %v755
    %v757 = vrot.slane %v743, %v756
    %v758 = vcombine.high %v750, %v750
    %v759 = vcombine.high %v757, %v757
    %v761 = vunpack.c.l.s4 1966171168
    %v762 = vunpack.c.0.s8 %v761
    %v763 = vlaneseq
    %v764 = vshrl.u32 %v763, 7
    %v765 = vsub.s32 %v762, %v764
    %v766 = vrot.slane %v750, %v765
    %v768 = vunpack.c.l.s4 1966171168
    %v769 = vunpack.c.0.s8 %v768
    %v770 = vlaneseq
    %v771 = vshrl.u32 %v770, 7
    %v772 = vsub.s32 %v769, %v771
    %v773 = vrot.slane %v757, %v772
    %v775 = vunpack.c.l.s4 1966171168
    %v776 = vunpack.c.0.s8 %v775
    %v777 = vlaneseq
    %v778 = vshrl.u32 %v777, 7
    %v779 = vsub.s32 %v776, %v778
    %v780 = vrot.slane %v758, %v779
    %v782 = vunpack.c.l.s4 1966171168
    %v783 = vunpack.c.0.s8 %v782
    %v784 = vlaneseq
    %v785 = vshrl.u32 %v784, 7
    %v786 = vsub.s32 %v783, %v785
    %v787 = vrot.slane %v759, %v786
    %v788 = vcombine.high %v766, %v766
    %v789 = vcombine.high %v773, %v773
    %v790 = vcombine.high %v780, %v780
    %v791 = vcombine.high %v787, %v787
    %v792 = vcombine.high %v89, %v89
    %v794 = vunpack.c.l.s4 1966171168
    %v795 = vunpack.c.0.s8 %v794
    %v796 = vlaneseq
    %v797 = vshrl.u32 %v796, 7
    %v798 = vsub.s32 %v795, %v797
    %v799 = vrot.slane %v89, %v798
    %v801 = vunpack.c.l.s4 1966171168
    %v802 = vunpack.c.0.s8 %v801
    %v803 = vlaneseq
    %v804 = vshrl.u32 %v803, 7
    %v805 = vsub.s32 %v802, %v804
    %v806 = vrot.slane %v792, %v805
    %v807 = vcombine.high %v799, %v799
    %v808 = vcombine.high %v806, %v806
    %v810 = vunpack.c.l.s4 1966171168
    %v811 = vunpack.c.0.s8 %v810
    %v812 = vlaneseq
    %v813 = vshrl.u32 %v812, 7
    %v814 = vsub.s32 %v811, %v813
    %v815 = vrot.slane %v799, %v814
    %v817 = vunpack.c.l.s4 1966171168
    %v818 = vunpack.c.0.s8 %v817
    %v819 = vlaneseq
    %v820 = vshrl.u32 %v819, 7
    %v821 = vsub.s32 %v818, %v820
    %v822 = vrot.slane %v806, %v821
    %v824 = vunpack.c.l.s4 1966171168
    %v825 = vunpack.c.0.s8 %v824
    %v826 = vlaneseq
    %v827 = vshrl.u32 %v826, 7
    %v828 = vsub.s32 %v825, %v827
    %v829 = vrot.slane %v807, %v828
    %v831 = vunpack.c.l.s4 1966171168
    %v832 = vunpack.c.0.s8 %v831
    %v833 = vlaneseq
    %v834 = vshrl.u32 %v833, 7
    %v835 = vsub.s32 %v832, %v834
    %v836 = vrot.slane %v808, %v835
    %v837 = vcombine.high %v815, %v815
    %v838 = vcombine.high %v822, %v822
    %v839 = vcombine.high %v829, %v829
    %v840 = vcombine.high %v836, %v836
    %v841 = vcombine.high %v90, %v90
    %v843 = vunpack.c.l.s4 1966171168
    %v844 = vunpack.c.0.s8 %v843
    %v845 = vlaneseq
    %v846 = vshrl.u32 %v845, 7
    %v847 = vsub.s32 %v844, %v846
    %v848 = vrot.slane %v90, %v847
    %v850 = vunpack.c.l.s4 1966171168
    %v851 = vunpack.c.0.s8 %v850
    %v852 = vlaneseq
    %v853 = vshrl.u32 %v852, 7
    %v854 = vsub.s32 %v851, %v853
    %v855 = vrot.slane %v841, %v854
    %v856 = vcombine.high %v848, %v848
    %v857 = vcombine.high %v855, %v855
    %v859 = vunpack.c.l.s4 1966171168
    %v860 = vunpack.c.0.s8 %v859
    %v861 = vlaneseq
    %v862 = vshrl.u32 %v861, 7
    %v863 = vsub.s32 %v860, %v862
    %v864 = vrot.slane %v848, %v863
    %v866 = vunpack.c.l.s4 1966171168
    %v867 = vunpack.c.0.s8 %v866
    %v868 = vlaneseq
    %v869 = vshrl.u32 %v868, 7
    %v870 = vsub.s32 %v867, %v869
    %v871 = vrot.slane %v855, %v870
    %v873 = vunpack.c.l.s4 1966171168
    %v874 = vunpack.c.0.s8 %v873
    %v875 = vlaneseq
    %v876 = vshrl.u32 %v875, 7
    %v877 = vsub.s32 %v874, %v876
    %v878 = vrot.slane %v856, %v877
    %v880 = vunpack.c.l.s4 1966171168
    %v881 = vunpack.c.0.s8 %v880
    %v882 = vlaneseq
    %v883 = vshrl.u32 %v882, 7
    %v884 = vsub.s32 %v881, %v883
    %v885 = vrot.slane %v857, %v884
    %v886 = vcombine.high %v864, %v864
    %v887 = vcombine.high %v871, %v871
    %v888 = vcombine.high %v878, %v878
    %v889 = vcombine.high %v885, %v885
    %v890 = vcombine.high %v91, %v91
    %v892 = vunpack.c.l.s4 1966171168
    %v893 = vunpack.c.0.s8 %v892
    %v894 = vlaneseq
    %v895 = vshrl.u32 %v894, 7
    %v896 = vsub.s32 %v893, %v895
    %v897 = vrot.slane %v91, %v896
    %v899 = vunpack.c.l.s4 1966171168
    %v900 = vunpack.c.0.s8 %v899
    %v901 = vlaneseq
    %v902 = vshrl.u32 %v901, 7
    %v903 = vsub.s32 %v900, %v902
    %v904 = vrot.slane %v890, %v903
    %v905 = vcombine.high %v897, %v897
    %v906 = vcombine.high %v904, %v904
    %v908 = vunpack.c.l.s4 1966171168
    %v909 = vunpack.c.0.s8 %v908
    %v910 = vlaneseq
    %v911 = vshrl.u32 %v910, 7
    %v912 = vsub.s32 %v909, %v911
    %v913 = vrot.slane %v897, %v912
    %v915 = vunpack.c.l.s4 1966171168
    %v916 = vunpack.c.0.s8 %v915
    %v917 = vlaneseq
    %v918 = vshrl.u32 %v917, 7
    %v919 = vsub.s32 %v916, %v918
    %v920 = vrot.slane %v904, %v919
    %v922 = vunpack.c.l.s4 1966171168
    %v923 = vunpack.c.0.s8 %v922
    %v924 = vlaneseq
    %v925 = vshrl.u32 %v924, 7
    %v926 = vsub.s32 %v923, %v925
    %v927 = vrot.slane %v905, %v926
    %v929 = vunpack.c.l.s4 1966171168
    %v930 = vunpack.c.0.s8 %v929
    %v931 = vlaneseq
    %v932 = vshrl.u32 %v931, 7
    %v933 = vsub.s32 %v930, %v932
    %v934 = vrot.slane %v906, %v933
    %v935 = vcombine.high %v913, %v913
    %v936 = vcombine.high %v920, %v920
    %v937 = vcombine.high %v927, %v927
    %v938 = vcombine.high %v934, %v934
    %v939 = vcombine.high %v92, %v92
    %v941 = vunpack.c.l.s4 1966171168
    %v942 = vunpack.c.0.s8 %v941
    %v943 = vlaneseq
    %v944 = vshrl.u32 %v943, 7
    %v945 = vsub.s32 %v942, %v944
    %v946 = vrot.slane %v92, %v945
    %v948 = vunpack.c.l.s4 1966171168
    %v949 = vunpack.c.0.s8 %v948
    %v950 = vlaneseq
    %v951 = vshrl.u32 %v950, 7
    %v952 = vsub.s32 %v949, %v951
    %v953 = vrot.slane %v939, %v952
    %v954 = vcombine.high %v946, %v946
    %v955 = vcombine.high %v953, %v953
    %v957 = vunpack.c.l.s4 1966171168
    %v958 = vunpack.c.0.s8 %v957
    %v959 = vlaneseq
    %v960 = vshrl.u32 %v959, 7
    %v961 = vsub.s32 %v958, %v960
    %v962 = vrot.slane %v946, %v961
    %v964 = vunpack.c.l.s4 1966171168
    %v965 = vunpack.c.0.s8 %v964
    %v966 = vlaneseq
    %v967 = vshrl.u32 %v966, 7
    %v968 = vsub.s32 %v965, %v967
    %v969 = vrot.slane %v953, %v968
    %v971 = vunpack.c.l.s4 1966171168
    %v972 = vunpack.c.0.s8 %v971
    %v973 = vlaneseq
    %v974 = vshrl.u32 %v973, 7
    %v975 = vsub.s32 %v972, %v974
    %v976 = vrot.slane %v954, %v975
    %v978 = vunpack.c.l.s4 1966171168
    %v979 = vunpack.c.0.s8 %v978
    %v980 = vlaneseq
    %v981 = vshrl.u32 %v980, 7
    %v982 = vsub.s32 %v979, %v981
    %v983 = vrot.slane %v955, %v982
    %v984 = vcombine.high %v962, %v962
    %v985 = vcombine.high %v969, %v969
    %v986 = vcombine.high %v976, %v976
    %v987 = vcombine.high %v983, %v983
    %v988 = vcombine.high %v93, %v93
    %v990 = vunpack.c.l.s4 1966171168
    %v991 = vunpack.c.0.s8 %v990
    %v992 = vlaneseq
    %v993 = vshrl.u32 %v992, 7
    %v994 = vsub.s32 %v991, %v993
    %v995 = vrot.slane %v93, %v994
    %v997 = vunpack.c.l.s4 1966171168
    %v998 = vunpack.c.0.s8 %v997
    %v999 = vlaneseq
    %v1000 = vshrl.u32 %v999, 7
    %v1001 = vsub.s32 %v998, %v1000
    %v1002 = vrot.slane %v988, %v1001
    %v1003 = vcombine.high %v995, %v995
    %v1004 = vcombine.high %v1002, %v1002
    %v1006 = vunpack.c.l.s4 1966171168
    %v1007 = vunpack.c.0.s8 %v1006
    %v1008 = vlaneseq
    %v1009 = vshrl.u32 %v1008, 7
    %v1010 = vsub.s32 %v1007, %v1009
    %v1011 = vrot.slane %v995, %v1010
    %v1013 = vunpack.c.l.s4 1966171168
    %v1014 = vunpack.c.0.s8 %v1013
    %v1015 = vlaneseq
    %v1016 = vshrl.u32 %v1015, 7
    %v1017 = vsub.s32 %v1014, %v1016
    %v1018 = vrot.slane %v1002, %v1017
    %v1020 = vunpack.c.l.s4 1966171168
    %v1021 = vunpack.c.0.s8 %v1020
    %v1022 = vlaneseq
    %v1023 = vshrl.u32 %v1022, 7
    %v1024 = vsub.s32 %v1021, %v1023
    %v1025 = vrot.slane %v1003, %v1024
    %v1027 = vunpack.c.l.s4 1966171168
    %v1028 = vunpack.c.0.s8 %v1027
    %v1029 = vlaneseq
    %v1030 = vshrl.u32 %v1029, 7
    %v1031 = vsub.s32 %v1028, %v1030
    %v1032 = vrot.slane %v1004, %v1031
    %v1033 = vcombine.high %v1011, %v1011
    %v1034 = vcombine.high %v1018, %v1018
    %v1035 = vcombine.high %v1025, %v1025
    %v1036 = vcombine.high %v1032, %v1032
    %v1469 = vunpack.c.l.b16 %v94
    %v1470 = vunpack.c.h.b16 %v94
    %v1471 = vunpack.c.l.b16 %v95
    %v1472 = vunpack.c.h.b16 %v95
    %v1473 = vunpack.c.l.b16 %v96
    %v1474 = vunpack.c.h.b16 %v96
    %v1475 = vunpack.c.l.b16 %v97
    %v1476 = vunpack.c.h.b16 %v97
    %v1477 = vunpack.c.l.b16 %v98
    %v1478 = vunpack.c.h.b16 %v98
    %v1479 = vunpack.c.l.b16 %v99
    %v1480 = vunpack.c.h.b16 %v99
    %v1481 = vunpack.c.l.b16 %v100
    %v1482 = vunpack.c.h.b16 %v100
    %v1483 = vunpack.c.l.b16 %v101
    %v1484 = vunpack.c.h.b16 %v101
    %v1485 = vunpack.c.l.b16 %v102
    %v1486 = vunpack.c.h.b16 %v102
    %v1487 = vunpack.c.l.b16 %v103
    %v1488 = vunpack.c.h.b16 %v103
    %v1489 = vunpack.c.l.b16 %v104
    %v1490 = vunpack.c.h.b16 %v104
    %v1491 = vunpack.c.l.b16 %v105
    %v1492 = vunpack.c.h.b16 %v105
    %v1493 = vunpack.c.l.b16 %v106
    %v1494 = vunpack.c.h.b16 %v106
    %v1495 = vunpack.c.l.b16 %v107
    %v1496 = vunpack.c.h.b16 %v107
    %v1497 = vunpack.c.l.b16 %v108
    %v1498 = vunpack.c.h.b16 %v108
    %v1499 = vunpack.c.l.b16 %v109
    %v1500 = vunpack.c.h.b16 %v109
    %v1501 = vunpack.c.l.b16 %v110
    %v1502 = vunpack.c.h.b16 %v110
    %v1503 = vunpack.c.l.b16 %v111
    %v1504 = vunpack.c.h.b16 %v111
    %v1505 = vunpack.c.l.b16 %v112
    %v1506 = vunpack.c.h.b16 %v112
    %v1507 = vunpack.c.l.b16 %v113
    %v1508 = vunpack.c.h.b16 %v113
    %v1509 = vunpack.c.l.b16 %v114
    %v1510 = vunpack.c.h.b16 %v114
    %v1511 = vunpack.c.l.b16 %v115
    %v1512 = vunpack.c.h.b16 %v115
    %v1513 = vunpack.c.l.b16 %v116
    %v1514 = vunpack.c.h.b16 %v116
    %v1515 = vunpack.c.l.b16 %v117
    %v1516 = vunpack.c.h.b16 %v117
    %v1517 = vunpack.c.l.b16 %v118
    %v1518 = vunpack.c.h.b16 %v118
    %v1519 = vunpack.c.l.b16 %v119
    %v1520 = vunpack.c.h.b16 %v119
    %v1521 = vunpack.c.l.b16 %v120
    %v1522 = vunpack.c.h.b16 %v120
    %v1523 = vunpack.c.l.b16 %v121
    %v1524 = vunpack.c.h.b16 %v121
    %v1525 = vunpack.c.l.b16 %v122
    %v1526 = vunpack.c.h.b16 %v122
    %v1527 = vunpack.c.l.b16 %v123
    %v1528 = vunpack.c.h.b16 %v123
    %v1529 = vunpack.c.l.b16 %v124
    %v1530 = vunpack.c.h.b16 %v124
    %v1531 = vunpack.c.l.b16 %v125
    %v1532 = vunpack.c.h.b16 %v125
    %v1533 = vunpack.c.l.b16 %v126
    %v1534 = vunpack.c.h.b16 %v126
    %v1535 = vunpack.c.l.b16 %v127
    %v1536 = vunpack.c.h.b16 %v127
    %v1537 = vunpack.c.l.b16 %v128
    %v1538 = vunpack.c.h.b16 %v128
    %v1539 = vunpack.c.l.b16 %v129
    %v1540 = vunpack.c.h.b16 %v129
    %v1541 = vunpack.c.l.b16 %v130
    %v1542 = vunpack.c.h.b16 %v130
    %v1543 = vunpack.c.l.b16 %v131
    %v1544 = vunpack.c.h.b16 %v131
    %v1545 = vunpack.c.l.b16 %v132
    %v1546 = vunpack.c.h.b16 %v132
    %v1547 = vunpack.c.l.b16 %v133
    %v1548 = vunpack.c.h.b16 %v133
    %v1549 = vunpack.c.l.b16 %v134
    %v1550 = vunpack.c.h.b16 %v134
    %v1551 = vunpack.c.l.b16 %v135
    %v1552 = vunpack.c.h.b16 %v135
    %v1553 = vunpack.c.l.b16 %v136
    %v1554 = vunpack.c.h.b16 %v136
    %v1555 = vunpack.c.l.b16 %v137
    %v1556 = vunpack.c.h.b16 %v137
    %v1557 = vunpack.c.l.b16 %v138
    %v1558 = vunpack.c.h.b16 %v138
    %v1559 = vunpack.c.l.b16 %v139
    %v1560 = vunpack.c.h.b16 %v139
    %v1561 = vunpack.c.l.b16 %v140
    %v1562 = vunpack.c.h.b16 %v140
    %v1563 = vunpack.c.l.b16 %v141
    %v1564 = vunpack.c.h.b16 %v141
    %v1565 = vunpack.c.l.b16 %v142
    %v1566 = vunpack.c.h.b16 %v142
    %v1567 = vunpack.c.l.b16 %v143
    %v1568 = vunpack.c.h.b16 %v143
    %v1569 = vunpack.c.l.b16 %v144
    %v1570 = vunpack.c.h.b16 %v144
    %v1571 = vunpack.c.l.b16 %v145
    %v1572 = vunpack.c.h.b16 %v145
    %v1573 = vunpack.c.l.b16 %v146
    %v1574 = vunpack.c.h.b16 %v146
    %v1575 = vunpack.c.l.b16 %v147
    %v1576 = vunpack.c.h.b16 %v147
    %v1577 = vunpack.c.l.b16 %v148
    %v1578 = vunpack.c.h.b16 %v148
    %v1579 = vunpack.c.l.b16 %v149
    %v1580 = vunpack.c.h.b16 %v149
    %v1581 = vunpack.c.l.b16 %v150
    %v1582 = vunpack.c.h.b16 %v150
    %v1583 = vunpack.c.l.b16 %v151
    %v1584 = vunpack.c.h.b16 %v151
    %v1585 = vunpack.c.l.b16 %v152
    %v1586 = vunpack.c.h.b16 %v152
    %v1587 = vunpack.c.l.b16 %v153
    %v1588 = vunpack.c.h.b16 %v153
    %v1589 = vunpack.c.l.b16 %v154
    %v1590 = vunpack.c.h.b16 %v154
    %v1591 = vunpack.c.l.b16 %v155
    %v1592 = vunpack.c.h.b16 %v155
    %v1593 = vunpack.c.l.b16 %v156
    %v1594 = vunpack.c.h.b16 %v156
    %v1595 = vunpack.c.l.b16 %v157
    %v1596 = vunpack.c.h.b16 %v157
    %v1597 = vunpack.c.l.b16 %v158
    %v1598 = vunpack.c.h.b16 %v158
    %v1599 = vunpack.c.l.b16 %v159
    %v1600 = vunpack.c.h.b16 %v159
    %v1601 = vunpack.c.l.b16 %v160
    %v1602 = vunpack.c.h.b16 %v160
    %v1603 = vunpack.c.l.b16 %v161
    %v1604 = vunpack.c.h.b16 %v161
    %v1605 = vunpack.c.l.b16 %v162
    %v1606 = vunpack.c.h.b16 %v162
    %v1607 = vunpack.c.l.b16 %v163
    %v1608 = vunpack.c.h.b16 %v163
    %v1609 = vunpack.c.l.b16 %v164
    %v1610 = vunpack.c.h.b16 %v164
    %v1611 = vunpack.c.l.b16 %v165
    %v1612 = vunpack.c.h.b16 %v165
    %v1613 = vunpack.c.l.b16 %v166
    %v1614 = vunpack.c.h.b16 %v166
    %v1615 = vunpack.c.l.b16 %v167
    %v1616 = vunpack.c.h.b16 %v167
    %v1617 = vunpack.c.l.b16 %v168
    %v1618 = vunpack.c.h.b16 %v168
    %v1619 = vunpack.c.l.b16 %v169
    %v1620 = vunpack.c.h.b16 %v169
    %v1621 = vunpack.c.l.b16 %v170
    %v1622 = vunpack.c.h.b16 %v170
    %v1623 = vunpack.c.l.b16 %v171
    %v1624 = vunpack.c.h.b16 %v171
    %v1625 = vunpack.c.l.b16 %v172
    %v1626 = vunpack.c.h.b16 %v172
    %v1627 = vunpack.c.l.b16 %v173
    %v1628 = vunpack.c.h.b16 %v173
    %v1629 = vunpack.c.l.b16 %v174
    %v1630 = vunpack.c.h.b16 %v174
    %v1631 = vunpack.c.l.b16 %v175
    %v1632 = vunpack.c.h.b16 %v175
    %v1633 = vunpack.c.l.b16 %v176
    %v1634 = vunpack.c.h.b16 %v176
    %v1635 = vunpack.c.l.b16 %v177
    %v1636 = vunpack.c.h.b16 %v177
    %v1637 = vunpack.c.l.b16 %v178
    %v1638 = vunpack.c.h.b16 %v178
    %v1639 = vunpack.c.l.b16 %v179
    %v1640 = vunpack.c.h.b16 %v179
    %v1641 = vunpack.c.l.b16 %v180
    %v1642 = vunpack.c.h.b16 %v180
    %v1643 = vunpack.c.l.b16 %v181
    %v1644 = vunpack.c.h.b16 %v181
    %v1645 = vunpack.c.l.b16 %v182
    %v1646 = vunpack.c.h.b16 %v182
    %v1647 = vunpack.c.l.b16 %v183
    %v1648 = vunpack.c.h.b16 %v183
    %v1649 = vunpack.c.l.b16 %v184
    %v1650 = vunpack.c.h.b16 %v184
    %v1651 = vunpack.c.l.b16 %v185
    %v1652 = vunpack.c.h.b16 %v185
    %v1653 = vunpack.c.l.b16 %v186
    %v1654 = vunpack.c.h.b16 %v186
    %v1655 = vunpack.c.l.b16 %v187
    %v1656 = vunpack.c.h.b16 %v187
    %v1657 = vunpack.c.l.b16 %v188
    %v1658 = vunpack.c.h.b16 %v188
    %v1659 = vunpack.c.l.b16 %v189
    %v1660 = vunpack.c.h.b16 %v189
    %v1661 = vunpack.c.l.b16 %v190
    %v1662 = vunpack.c.h.b16 %v190
    %v1663 = vunpack.c.l.b16 %v191
    %v1664 = vunpack.c.h.b16 %v191
    %v1665 = vunpack.c.l.b16 %v192
    %v1666 = vunpack.c.h.b16 %v192
    %v1667 = vunpack.c.l.b16 %v193
    %v1668 = vunpack.c.h.b16 %v193
    %v1669 = vunpack.c.l.b16 %v194
    %v1670 = vunpack.c.h.b16 %v194
    %v1671 = vunpack.c.l.b16 %v195
    %v1672 = vunpack.c.h.b16 %v195
    %v1673 = vunpack.c.l.b16 %v196
    %v1674 = vunpack.c.h.b16 %v196
    %v1675 = vunpack.c.l.b16 %v197
    %v1676 = vunpack.c.h.b16 %v197
    %v1677 = vunpack.c.l.b16 %v198
    %v1678 = vunpack.c.h.b16 %v198
    %v1679 = vunpack.c.l.b16 %v199
    %v1680 = vunpack.c.h.b16 %v199
    %v1681 = vunpack.c.l.b16 %v200
    %v1682 = vunpack.c.h.b16 %v200
    %v1683 = vunpack.c.l.b16 %v201
    %v1684 = vunpack.c.h.b16 %v201
    %v1685 = vunpack.c.l.b16 %v202
    %v1686 = vunpack.c.h.b16 %v202
    %v1687 = vunpack.c.l.b16 %v203
    %v1688 = vunpack.c.h.b16 %v203
    %v1689 = vunpack.c.l.b16 %v204
    %v1690 = vunpack.c.h.b16 %v204
    %v1691 = vunpack.c.l.b16 %v205
    %v1692 = vunpack.c.h.b16 %v205
    %v1693 = vunpack.c.l.b16 %v206
    %v1694 = vunpack.c.h.b16 %v206
    %v1695 = vunpack.c.l.b16 %v207
    %v1696 = vunpack.c.h.b16 %v207
    %v1697 = vunpack.c.l.b16 %v208
    %v1698 = vunpack.c.h.b16 %v208
    %v1699 = vunpack.c.l.b16 %v209
    %v1700 = vunpack.c.h.b16 %v209
    %v1701 = vunpack.c.l.b16 %v210
    %v1702 = vunpack.c.h.b16 %v210
    %v1703 = vunpack.c.l.b16 %v211
    %v1704 = vunpack.c.h.b16 %v211
    %v1705 = vunpack.c.l.b16 %v212
    %v1706 = vunpack.c.h.b16 %v212
    %v1707 = vunpack.c.l.b16 %v213
    %v1708 = vunpack.c.h.b16 %v213
    %v1709 = vunpack.c.l.b16 %v214
    %v1710 = vunpack.c.h.b16 %v214
    %v1711 = vunpack.c.l.b16 %v215
    %v1712 = vunpack.c.h.b16 %v215
    %v1713 = vunpack.c.l.b16 %v216
    %v1714 = vunpack.c.h.b16 %v216
    %v1715 = vunpack.c.l.b16 %v217
    %v1716 = vunpack.c.h.b16 %v217
    %v1717 = vunpack.c.l.b16 %v218
    %v1718 = vunpack.c.h.b16 %v218
    %v1719 = vunpack.c.l.b16 %v219
    %v1720 = vunpack.c.h.b16 %v219
    %v1721 = vunpack.c.l.b16 %v220
    %v1722 = vunpack.c.h.b16 %v220
    %v1723 = vunpack.c.l.b16 %v221
    %v1724 = vunpack.c.h.b16 %v221
    %v1725 = vunpack.c.l.b16 %v222
    %v1726 = vunpack.c.h.b16 %v222
    %v1727 = vunpack.c.l.b16 %v223
    %v1728 = vunpack.c.h.b16 %v223
    %v1729 = vunpack.c.l.b16 %v224
    %v1730 = vunpack.c.h.b16 %v224
    %v1731 = vunpack.c.l.b16 %v225
    %v1732 = vunpack.c.h.b16 %v225
    %v1733 = vunpack.c.l.b16 %v226
    %v1734 = vunpack.c.h.b16 %v226
    %v1735 = vunpack.c.l.b16 %v227
    %v1736 = vunpack.c.h.b16 %v227
    %v1737 = vunpack.c.l.b16 %v228
    %v1738 = vunpack.c.h.b16 %v228
    %v1739 = vunpack.c.l.b16 %v229
    %v1740 = vunpack.c.h.b16 %v229
    %v1741 = vunpack.c.l.b16 %v230
    %v1742 = vunpack.c.h.b16 %v230
    %v1743 = vunpack.c.l.b16 %v231
    %v1744 = vunpack.c.h.b16 %v231
    %v1745 = vunpack.c.l.b16 %v232
    %v1746 = vunpack.c.h.b16 %v232
    %v1747 = vunpack.c.l.b16 %v233
    %v1748 = vunpack.c.h.b16 %v233
    %v1749 = vunpack.c.l.b16 %v234
    %v1750 = vunpack.c.h.b16 %v234
    %v1751 = vunpack.c.l.b16 %v235
    %v1752 = vunpack.c.h.b16 %v235
    %v1753 = vunpack.c.l.b16 %v236
    %v1754 = vunpack.c.h.b16 %v236
    %v1755 = vunpack.c.l.b16 %v237
    %v1756 = vunpack.c.h.b16 %v237
    %v1757 = vunpack.c.l.b16 %v238
    %v1758 = vunpack.c.h.b16 %v238
    %v1759 = vunpack.c.l.b16 %v239
    %v1760 = vunpack.c.h.b16 %v239
    %v1761 = vunpack.c.l.b16 %v240
    %v1762 = vunpack.c.h.b16 %v240
    %v1763 = vunpack.c.l.b16 %v241
    %v1764 = vunpack.c.h.b16 %v241
    %v1765 = vunpack.c.l.b16 %v242
    %v1766 = vunpack.c.h.b16 %v242
    %v1767 = vunpack.c.l.b16 %v243
    %v1768 = vunpack.c.h.b16 %v243
    %v1769 = vunpack.c.l.b16 %v244
    %v1770 = vunpack.c.h.b16 %v244
    %v1771 = vunpack.c.l.b16 %v245
    %v1772 = vunpack.c.h.b16 %v245
    %v1773 = vunpack.c.l.b16 %v246
    %v1774 = vunpack.c.h.b16 %v246
    %v1775 = vunpack.c.l.b16 %v247
    %v1776 = vunpack.c.h.b16 %v247
    %v1777 = vunpack.c.l.b16 %v248
    %v1778 = vunpack.c.h.b16 %v248
    %v1779 = vunpack.c.l.b16 %v249
    %v1780 = vunpack.c.h.b16 %v249
    %v1781 = vunpack.c.l.b16 %v250
    %v1782 = vunpack.c.h.b16 %v250
    %v1783 = vunpack.c.l.b16 %v251
    %v1784 = vunpack.c.h.b16 %v251
    %v1785 = vunpack.c.l.b16 %v252
    %v1786 = vunpack.c.h.b16 %v252
    %v1787 = vunpack.c.l.b16 %v253
    %v1788 = vunpack.c.h.b16 %v253
    %v1789 = vunpack.c.l.b16 %v254
    %v1790 = vunpack.c.h.b16 %v254
    %v1791 = vunpack.c.l.b16 %v255
    %v1792 = vunpack.c.h.b16 %v255
    %v1793 = vunpack.c.l.b16 %v256
    %v1794 = vunpack.c.h.b16 %v256
    %v1795 = vunpack.c.l.b16 %v257
    %v1796 = vunpack.c.h.b16 %v257
    %v1797 = vunpack.c.l.b16 %v258
    %v1798 = vunpack.c.h.b16 %v258
    %v1799 = vunpack.c.l.b16 %v259
    %v1800 = vunpack.c.h.b16 %v259
    %v1801 = vunpack.c.l.b16 %v260
    %v1802 = vunpack.c.h.b16 %v260
    %v1803 = vunpack.c.l.b16 %v261
    %v1804 = vunpack.c.h.b16 %v261
    %v1805 = vunpack.c.l.b16 %v262
    %v1806 = vunpack.c.h.b16 %v262
    %v1807 = vunpack.c.l.b16 %v263
    %v1808 = vunpack.c.h.b16 %v263
    %v1809 = vunpack.c.l.b16 %v264
    %v1810 = vunpack.c.h.b16 %v264
    %v1811 = vunpack.c.l.b16 %v265
    %v1812 = vunpack.c.h.b16 %v265
    %v1813 = vunpack.c.l.b16 %v266
    %v1814 = vunpack.c.h.b16 %v266
    %v1815 = vunpack.c.l.b16 %v267
    %v1816 = vunpack.c.h.b16 %v267
    %v1817 = vunpack.c.l.b16 %v268
    %v1818 = vunpack.c.h.b16 %v268
    %v1819 = vunpack.c.l.b16 %v269
    %v1820 = vunpack.c.h.b16 %v269
    %v1821 = vunpack.c.l.b16 %v270
    %v1822 = vunpack.c.h.b16 %v270
    %v1823 = vunpack.c.l.b16 %v271
    %v1824 = vunpack.c.h.b16 %v271
    %v1825 = vunpack.c.l.b16 %v272
    %v1826 = vunpack.c.h.b16 %v272
    %v1827 = vunpack.c.l.b16 %v273
    %v1828 = vunpack.c.h.b16 %v273
    %v1829 = vunpack.c.l.b16 %v274
    %v1830 = vunpack.c.h.b16 %v274
    %v1831 = vunpack.c.l.b16 %v275
    %v1832 = vunpack.c.h.b16 %v275
    %v1833 = vunpack.c.l.b16 %v276
    %v1834 = vunpack.c.h.b16 %v276
    %v1835 = vunpack.c.l.b16 %v277
    %v1836 = vunpack.c.h.b16 %v277
    %v1837 = vunpack.c.l.b16 %v278
    %v1838 = vunpack.c.h.b16 %v278
    %v1839 = vunpack.c.l.b16 %v279
    %v1840 = vunpack.c.h.b16 %v279
    %v1841 = vunpack.c.l.b16 %v280
    %v1842 = vunpack.c.h.b16 %v280
    %v1843 = vunpack.c.l.b16 %v281
    %v1844 = vunpack.c.h.b16 %v281
    %v1845 = vunpack.c.l.b16 %v282
    %v1846 = vunpack.c.h.b16 %v282
    %v1847 = vunpack.c.l.b16 %v283
    %v1848 = vunpack.c.h.b16 %v283
    %v1849 = vunpack.c.l.b16 %v284
    %v1850 = vunpack.c.h.b16 %v284
    %v1851 = vunpack.c.l.b16 %v285
    %v1852 = vunpack.c.h.b16 %v285
    %v1853 = vunpack.c.l.b16 %v286
    %v1854 = vunpack.c.h.b16 %v286
    %v1855 = vunpack.c.l.b16 %v287
    %v1856 = vunpack.c.h.b16 %v287
    %v1857 = vunpack.c.l.b16 %v288
    %v1858 = vunpack.c.h.b16 %v288
    %v1859 = vunpack.c.l.b16 %v289
    %v1860 = vunpack.c.h.b16 %v289
    %v1861 = vunpack.c.l.b16 %v290
    %v1862 = vunpack.c.h.b16 %v290
    %v1863 = vunpack.c.l.b16 %v291
    %v1864 = vunpack.c.h.b16 %v291
    %v1865 = vunpack.c.l.b16 %v292
    %v1866 = vunpack.c.h.b16 %v292
    %v1867 = vunpack.c.l.b16 %v293
    %v1868 = vunpack.c.h.b16 %v293
    %v1869 = vunpack.c.l.b16 %v294
    %v1870 = vunpack.c.h.b16 %v294
    %v1871 = vunpack.c.l.b16 %v295
    %v1872 = vunpack.c.h.b16 %v295
    %v1873 = vunpack.c.l.b16 %v296
    %v1874 = vunpack.c.h.b16 %v296
    %v1875 = vunpack.c.l.b16 %v297
    %v1876 = vunpack.c.h.b16 %v297
    %v1877 = vunpack.c.l.b16 %v298
    %v1878 = vunpack.c.h.b16 %v298
    %v1879 = vunpack.c.l.b16 %v299
    %v1880 = vunpack.c.h.b16 %v299
    %v1881 = vunpack.c.l.b16 %v300
    %v1882 = vunpack.c.h.b16 %v300
    %v1883 = vunpack.c.l.b16 %v301
    %v1884 = vunpack.c.h.b16 %v301
    %v1885 = vunpack.c.l.b16 %v302
    %v1886 = vunpack.c.h.b16 %v302
    %v1887 = vunpack.c.l.b16 %v303
    %v1888 = vunpack.c.h.b16 %v303
    %v1889 = vunpack.c.l.b16 %v304
    %v1890 = vunpack.c.h.b16 %v304
    %v1891 = vunpack.c.l.b16 %v305
    %v1892 = vunpack.c.h.b16 %v305
    %v1893 = vunpack.c.l.b16 %v306
    %v1894 = vunpack.c.h.b16 %v306
    %v1895 = vunpack.c.l.b16 %v307
    %v1896 = vunpack.c.h.b16 %v307
    %v1897 = vunpack.c.l.b16 %v308
    %v1898 = vunpack.c.h.b16 %v308
    %v1899 = vunpack.c.l.b16 %v309
    %v1900 = vunpack.c.h.b16 %v309
    %v1901 = vunpack.c.l.b16 %v310
    %v1902 = vunpack.c.h.b16 %v310
    %v1903 = vunpack.c.l.b16 %v311
    %v1904 = vunpack.c.h.b16 %v311
    %v1905 = vunpack.c.l.b16 %v312
    %v1906 = vunpack.c.h.b16 %v312
    %v1907 = vunpack.c.l.b16 %v313
    %v1908 = vunpack.c.h.b16 %v313
    %v1909 = vunpack.c.l.b16 %v314
    %v1910 = vunpack.c.h.b16 %v314
    %v1911 = vunpack.c.l.b16 %v315
    %v1912 = vunpack.c.h.b16 %v315
    %v1913 = vunpack.c.l.b16 %v316
    %v1914 = vunpack.c.h.b16 %v316
    %v1915 = vunpack.c.l.b16 %v317
    %v1916 = vunpack.c.h.b16 %v317
    %v1917 = vunpack.c.l.b16 %v318
    %v1918 = vunpack.c.h.b16 %v318
    %v1919 = vunpack.c.l.b16 %v319
    %v1920 = vunpack.c.h.b16 %v319
    %v1921 = vunpack.c.l.b16 %v320
    %v1922 = vunpack.c.h.b16 %v320
    %v1923 = vunpack.c.l.b16 %v321
    %v1924 = vunpack.c.h.b16 %v321
    %v1925 = vunpack.c.l.b16 %v322
    %v1926 = vunpack.c.h.b16 %v322
    %v1927 = vunpack.c.l.b16 %v323
    %v1928 = vunpack.c.h.b16 %v323
    %v1929 = vunpack.c.l.b16 %v324
    %v1930 = vunpack.c.h.b16 %v324
    %v1931 = vunpack.c.l.b16 %v325
    %v1932 = vunpack.c.h.b16 %v325
    %v1933 = vunpack.c.l.b16 %v326
    %v1934 = vunpack.c.h.b16 %v326
    %v1935 = vunpack.c.l.b16 %v327
    %v1936 = vunpack.c.h.b16 %v327
    %v1937 = vunpack.c.l.b16 %v328
    %v1938 = vunpack.c.h.b16 %v328
    %v1939 = vunpack.c.l.b16 %v329
    %v1940 = vunpack.c.h.b16 %v329
    %v1941 = vunpack.c.l.b16 %v330
    %v1942 = vunpack.c.h.b16 %v330
    %v1943 = vunpack.c.l.b16 %v331
    %v1944 = vunpack.c.h.b16 %v331
    %v1945 = vunpack.c.l.b16 %v332
    %v1946 = vunpack.c.h.b16 %v332
    %v1947 = vunpack.c.l.b16 %v333
    %v1948 = vunpack.c.h.b16 %v333
    %v1949 = vunpack.c.l.b16 %v334
    %v1950 = vunpack.c.h.b16 %v334
    %v1951 = vunpack.c.l.b16 %v335
    %v1952 = vunpack.c.h.b16 %v335
    %v1953 = vunpack.c.l.b16 %v336
    %v1954 = vunpack.c.h.b16 %v336
    %v1955 = vunpack.c.l.b16 %v337
    %v1956 = vunpack.c.h.b16 %v337
    %v1957 = vunpack.c.l.b16 %v338
    %v1958 = vunpack.c.h.b16 %v338
    %v1959 = vunpack.c.l.b16 %v339
    %v1960 = vunpack.c.h.b16 %v339
    %v1961 = vunpack.c.l.b16 %v340
    %v1962 = vunpack.c.h.b16 %v340
    %v1963 = vunpack.c.l.b16 %v341
    %v1964 = vunpack.c.h.b16 %v341
    %v1965 = vunpack.c.l.b16 %v342
    %v1966 = vunpack.c.h.b16 %v342
    %v1967 = vunpack.c.l.b16 %v343
    %v1968 = vunpack.c.h.b16 %v343
    %v1969 = vunpack.c.l.b16 %v344
    %v1970 = vunpack.c.h.b16 %v344
    %v1971 = vunpack.c.l.b16 %v345
    %v1972 = vunpack.c.h.b16 %v345
    %v1973 = vunpack.c.l.b16 %v346
    %v1974 = vunpack.c.h.b16 %v346
    %v1975 = vunpack.c.l.b16 %v347
    %v1976 = vunpack.c.h.b16 %v347
    %v1977 = vunpack.c.l.b16 %v348
    %v1978 = vunpack.c.h.b16 %v348
    %v1979 = vunpack.c.l.b16 %v349
    %v1980 = vunpack.c.h.b16 %v349
    %v1981 = vunpack.c.l.b16 %v350
    %v1982 = vunpack.c.h.b16 %v350
    %v1983 = vunpack.c.l.b16 %v351
    %v1984 = vunpack.c.h.b16 %v351
    %v1985 = vunpack.c.l.b16 %v352
    %v1986 = vunpack.c.h.b16 %v352
    %v1987 = vunpack.c.l.b16 %v353
    %v1988 = vunpack.c.h.b16 %v353
    %v1989 = vunpack.c.l.b16 %v354
    %v1990 = vunpack.c.h.b16 %v354
    %v1991 = vunpack.c.l.b16 %v355
    %v1992 = vunpack.c.h.b16 %v355
    %v1993 = vunpack.c.l.b16 %v356
    %v1994 = vunpack.c.h.b16 %v356
    %v1995 = vunpack.c.l.b16 %v357
    %v1996 = vunpack.c.h.b16 %v357
    %v1997 = vunpack.c.l.b16 %v358
    %v1998 = vunpack.c.h.b16 %v358
    %v1999 = vunpack.c.l.b16 %v359
    %v2000 = vunpack.c.h.b16 %v359
    %v2001 = vunpack.c.l.b16 %v360
    %v2002 = vunpack.c.h.b16 %v360
    %v2003 = vunpack.c.l.b16 %v361
    %v2004 = vunpack.c.h.b16 %v361
    %v2005 = vunpack.c.l.b16 %v362
    %v2006 = vunpack.c.h.b16 %v362
    %v2007 = vunpack.c.l.b16 %v363
    %v2008 = vunpack.c.h.b16 %v363
    %v2009 = vunpack.c.l.b16 %v364
    %v2010 = vunpack.c.h.b16 %v364
    %v2011 = vunpack.c.l.b16 %v365
    %v2012 = vunpack.c.h.b16 %v365
    %v2013 = vunpack.c.l.b16 %v366
    %v2014 = vunpack.c.h.b16 %v366
    %v2015 = vunpack.c.l.b16 %v367
    %v2016 = vunpack.c.h.b16 %v367
    %v2017 = vunpack.c.l.b16 %v368
    %v2018 = vunpack.c.h.b16 %v368
    %v2019 = vunpack.c.l.b16 %v369
    %v2020 = vunpack.c.h.b16 %v369
    %v2021 = vunpack.c.l.b16 %v370
    %v2022 = vunpack.c.h.b16 %v370
    %v2023 = vunpack.c.l.b16 %v371
    %v2024 = vunpack.c.h.b16 %v371
    %v2025 = vunpack.c.l.b16 %v372
    %v2026 = vunpack.c.h.b16 %v372
    %v2027 = vunpack.c.l.b16 %v373
    %v2028 = vunpack.c.h.b16 %v373
    %v2029 = vunpack.c.l.b16 %v374
    %v2030 = vunpack.c.h.b16 %v374
    %v2031 = vunpack.c.l.b16 %v375
    %v2032 = vunpack.c.h.b16 %v375
    %v2033 = vunpack.c.l.b16 %v376
    %v2034 = vunpack.c.h.b16 %v376
    %v2035 = vunpack.c.l.b16 %v377
    %v2036 = vunpack.c.h.b16 %v377
    %v2037 = vunpack.c.l.b16 %v378
    %v2038 = vunpack.c.h.b16 %v378
    %v2039 = vunpack.c.l.b16 %v379
    %v2040 = vunpack.c.h.b16 %v379
    %v2041 = vunpack.c.l.b16 %v380
    %v2042 = vunpack.c.h.b16 %v380
    %v2043 = vunpack.c.l.b16 %v381
    %v2044 = vunpack.c.h.b16 %v381
    %v2045 = vunpack.c.l.b16 %v382
    %v2046 = vunpack.c.h.b16 %v382
    %v2047 = vunpack.c.l.b16 %v383
    %v2048 = vunpack.c.h.b16 %v383
    %v2049 = vunpack.c.l.b16 %v384
    %v2050 = vunpack.c.h.b16 %v384
    %v2051 = vunpack.c.l.b16 %v385
    %v2052 = vunpack.c.h.b16 %v385
    %v2053 = vunpack.c.l.b16 %v386
    %v2054 = vunpack.c.h.b16 %v386
    %v2055 = vunpack.c.l.b16 %v387
    %v2056 = vunpack.c.h.b16 %v387
    %v2057 = vunpack.c.l.b16 %v388
    %v2058 = vunpack.c.h.b16 %v388
    %v2059 = vunpack.c.l.b16 %v389
    %v2060 = vunpack.c.h.b16 %v389
    %v2061 = vunpack.c.l.b16 %v390
    %v2062 = vunpack.c.h.b16 %v390
    %v2063 = vunpack.c.l.b16 %v391
    %v2064 = vunpack.c.h.b16 %v391
    %v2065 = vunpack.c.l.b16 %v392
    %v2066 = vunpack.c.h.b16 %v392
    %v2067 = vunpack.c.l.b16 %v393
    %v2068 = vunpack.c.h.b16 %v393
    %v2069 = vunpack.c.l.b16 %v394
    %v2070 = vunpack.c.h.b16 %v394
    %v2071 = vunpack.c.l.b16 %v395
    %v2072 = vunpack.c.h.b16 %v395
    %v2073 = vunpack.c.l.b16 %v396
    %v2074 = vunpack.c.h.b16 %v396
    %v2075 = vunpack.c.l.b16 %v397
    %v2076 = vunpack.c.h.b16 %v397
    %v2077 = vunpack.c.l.b16 %v398
    %v2078 = vunpack.c.h.b16 %v398
    %v2079 = vunpack.c.l.b16 %v399
    %v2080 = vunpack.c.h.b16 %v399
    %v2081 = vunpack.c.l.b16 %v400
    %v2082 = vunpack.c.h.b16 %v400
    %v2083 = vunpack.c.l.b16 %v401
    %v2084 = vunpack.c.h.b16 %v401
    %v2085 = vunpack.c.l.b16 %v402
    %v2086 = vunpack.c.h.b16 %v402
    %v2087 = vunpack.c.l.b16 %v403
    %v2088 = vunpack.c.h.b16 %v403
    %v2089 = vunpack.c.l.b16 %v404
    %v2090 = vunpack.c.h.b16 %v404
    %v2091 = vunpack.c.l.b16 %v405
    %v2092 = vunpack.c.h.b16 %v405
    %v2093 = vunpack.c.l.b16 %v406
    %v2094 = vunpack.c.h.b16 %v406
    %v2095 = vunpack.c.l.b16 %v407
    %v2096 = vunpack.c.h.b16 %v407
    %v2097 = vunpack.c.l.b16 %v408
    %v2098 = vunpack.c.h.b16 %v408
    %v2099 = vunpack.c.l.b16 %v409
    %v2100 = vunpack.c.h.b16 %v409
    %v2101 = vunpack.c.l.b16 %v410
    %v2102 = vunpack.c.h.b16 %v410
    %v2103 = vunpack.c.l.b16 %v411
    %v2104 = vunpack.c.h.b16 %v411
    %v2105 = vunpack.c.l.b16 %v412
    %v2106 = vunpack.c.h.b16 %v412
    %v2107 = vunpack.c.l.b16 %v413
    %v2108 = vunpack.c.h.b16 %v413
    %v2109 = vunpack.c.l.b16 %v414
    %v2110 = vunpack.c.h.b16 %v414
    %v2111 = vunpack.c.l.b16 %v415
    %v2112 = vunpack.c.h.b16 %v415
    %v2113 = vunpack.c.l.b16 %v416
    %v2114 = vunpack.c.h.b16 %v416
    %v2115 = vunpack.c.l.b16 %v417
    %v2116 = vunpack.c.h.b16 %v417
    %v2117 = vunpack.c.l.b16 %v418
    %v2118 = vunpack.c.h.b16 %v418
    %v2119 = vunpack.c.l.b16 %v419
    %v2120 = vunpack.c.h.b16 %v419
    %v2121 = vunpack.c.l.b16 %v420
    %v2122 = vunpack.c.h.b16 %v420
    %v2123 = vunpack.c.l.b16 %v421
    %v2124 = vunpack.c.h.b16 %v421
    %v2125 = vunpack.c.l.b16 %v422
    %v2126 = vunpack.c.h.b16 %v422
    %v2127 = vunpack.c.l.b16 %v423
    %v2128 = vunpack.c.h.b16 %v423
    %v2129 = vunpack.c.l.b16 %v424
    %v2130 = vunpack.c.h.b16 %v424
    %v2131 = vunpack.c.l.b16 %v425
    %v2132 = vunpack.c.h.b16 %v425
    %v2133 = vunpack.c.l.b16 %v426
    %v2134 = vunpack.c.h.b16 %v426
    %v2135 = vunpack.c.l.b16 %v427
    %v2136 = vunpack.c.h.b16 %v427
    %v2137 = vunpack.c.l.b16 %v428
    %v2138 = vunpack.c.h.b16 %v428
    %v2139 = vunpack.c.l.b16 %v429
    %v2140 = vunpack.c.h.b16 %v429
    %v2141 = vpack.c.b16 %v1565, %v1469
    %v2142 = vpack.c.b16 %v1566, %v1470
    %v2143 = vpack.c.b16 %v1567, %v1471
    %v2144 = vpack.c.b16 %v1568, %v1472
    %v2145 = vpack.c.b16 %v1569, %v1473
    %v2146 = vpack.c.b16 %v1570, %v1474
    %v2147 = vpack.c.b16 %v1571, %v1475
    %v2148 = vpack.c.b16 %v1572, %v1476
    %v2149 = vpack.c.b16 %v1573, %v1477
    %v2150 = vpack.c.b16 %v1574, %v1478
    %v2151 = vpack.c.b16 %v1575, %v1479
    %v2152 = vpack.c.b16 %v1576, %v1480
    %v2153 = vpack.c.b16 %v1577, %v1481
    %v2154 = vpack.c.b16 %v1578, %v1482
    %v2155 = vpack.c.b16 %v1579, %v1483
    %v2156 = vpack.c.b16 %v1580, %v1484
    %v2157 = vpack.c.b16 %v1581, %v1485
    %v2158 = vpack.c.b16 %v1582, %v1486
    %v2159 = vpack.c.b16 %v1583, %v1487
    %v2160 = vpack.c.b16 %v1584, %v1488
    %v2161 = vpack.c.b16 %v1585, %v1489
    %v2162 = vpack.c.b16 %v1586, %v1490
    %v2163 = vpack.c.b16 %v1587, %v1491
    %v2164 = vpack.c.b16 %v1588, %v1492
    %v2165 = vpack.c.b16 %v1589, %v1493
    %v2166 = vpack.c.b16 %v1590, %v1494
    %v2167 = vpack.c.b16 %v1591, %v1495
    %v2168 = vpack.c.b16 %v1592, %v1496
    %v2169 = vpack.c.b16 %v1593, %v1497
    %v2170 = vpack.c.b16 %v1594, %v1498
    %v2171 = vpack.c.b16 %v1595, %v1499
    %v2172 = vpack.c.b16 %v1596, %v1500
    %v2173 = vpack.c.b16 %v1597, %v1501
    %v2174 = vpack.c.b16 %v1598, %v1502
    %v2175 = vpack.c.b16 %v1599, %v1503
    %v2176 = vpack.c.b16 %v1600, %v1504
    %v2177 = vpack.c.b16 %v1601, %v1505
    %v2178 = vpack.c.b16 %v1602, %v1506
    %v2179 = vpack.c.b16 %v1603, %v1507
    %v2180 = vpack.c.b16 %v1604, %v1508
    %v2181 = vpack.c.b16 %v1605, %v1509
    %v2182 = vpack.c.b16 %v1606, %v1510
    %v2183 = vpack.c.b16 %v1607, %v1511
    %v2184 = vpack.c.b16 %v1608, %v1512
    %v2185 = vpack.c.b16 %v1609, %v1513
    %v2186 = vpack.c.b16 %v1610, %v1514
    %v2187 = vpack.c.b16 %v1611, %v1515
    %v2188 = vpack.c.b16 %v1612, %v1516
    %v2189 = vpack.c.b16 %v1613, %v1517
    %v2190 = vpack.c.b16 %v1614, %v1518
    %v2191 = vpack.c.b16 %v1615, %v1519
    %v2192 = vpack.c.b16 %v1616, %v1520
    %v2193 = vpack.c.b16 %v1617, %v1521
    %v2194 = vpack.c.b16 %v1618, %v1522
    %v2195 = vpack.c.b16 %v1619, %v1523
    %v2196 = vpack.c.b16 %v1620, %v1524
    %v2197 = vpack.c.b16 %v1621, %v1525
    %v2198 = vpack.c.b16 %v1622, %v1526
    %v2199 = vpack.c.b16 %v1623, %v1527
    %v2200 = vpack.c.b16 %v1624, %v1528
    %v2201 = vpack.c.b16 %v1625, %v1529
    %v2202 = vpack.c.b16 %v1626, %v1530
    %v2203 = vpack.c.b16 %v1627, %v1531
    %v2204 = vpack.c.b16 %v1628, %v1532
    %v2205 = vpack.c.b16 %v1629, %v1533
    %v2206 = vpack.c.b16 %v1630, %v1534
    %v2207 = vpack.c.b16 %v1631, %v1535
    %v2208 = vpack.c.b16 %v1632, %v1536
    %v2209 = vpack.c.b16 %v1633, %v1537
    %v2210 = vpack.c.b16 %v1634, %v1538
    %v2211 = vpack.c.b16 %v1635, %v1539
    %v2212 = vpack.c.b16 %v1636, %v1540
    %v2213 = vpack.c.b16 %v1637, %v1541
    %v2214 = vpack.c.b16 %v1638, %v1542
    %v2215 = vpack.c.b16 %v1639, %v1543
    %v2216 = vpack.c.b16 %v1640, %v1544
    %v2217 = vpack.c.b16 %v1641, %v1545
    %v2218 = vpack.c.b16 %v1642, %v1546
    %v2219 = vpack.c.b16 %v1643, %v1547
    %v2220 = vpack.c.b16 %v1644, %v1548
    %v2221 = vpack.c.b16 %v1645, %v1549
    %v2222 = vpack.c.b16 %v1646, %v1550
    %v2223 = vpack.c.b16 %v1647, %v1551
    %v2224 = vpack.c.b16 %v1648, %v1552
    %v2225 = vpack.c.b16 %v1649, %v1553
    %v2226 = vpack.c.b16 %v1650, %v1554
    %v2227 = vpack.c.b16 %v1651, %v1555
    %v2228 = vpack.c.b16 %v1652, %v1556
    %v2229 = vpack.c.b16 %v1653, %v1557
    %v2230 = vpack.c.b16 %v1654, %v1558
    %v2231 = vpack.c.b16 %v1655, %v1559
    %v2232 = vpack.c.b16 %v1656, %v1560
    %v2233 = vpack.c.b16 %v1657, %v1561
    %v2234 = vpack.c.b16 %v1658, %v1562
    %v2235 = vpack.c.b16 %v1659, %v1563
    %v2236 = vpack.c.b16 %v1660, %v1564
    %v2237 = vpack.c.b16 %v1757, %v1661
    %v2238 = vpack.c.b16 %v1758, %v1662
    %v2239 = vpack.c.b16 %v1759, %v1663
    %v2240 = vpack.c.b16 %v1760, %v1664
    %v2241 = vpack.c.b16 %v1761, %v1665
    %v2242 = vpack.c.b16 %v1762, %v1666
    %v2243 = vpack.c.b16 %v1763, %v1667
    %v2244 = vpack.c.b16 %v1764, %v1668
    %v2245 = vpack.c.b16 %v1765, %v1669
    %v2246 = vpack.c.b16 %v1766, %v1670
    %v2247 = vpack.c.b16 %v1767, %v1671
    %v2248 = vpack.c.b16 %v1768, %v1672
    %v2249 = vpack.c.b16 %v1769, %v1673
    %v2250 = vpack.c.b16 %v1770, %v1674
    %v2251 = vpack.c.b16 %v1771, %v1675
    %v2252 = vpack.c.b16 %v1772, %v1676
    %v2253 = vpack.c.b16 %v1773, %v1677
    %v2254 = vpack.c.b16 %v1774, %v1678
    %v2255 = vpack.c.b16 %v1775, %v1679
    %v2256 = vpack.c.b16 %v1776, %v1680
    %v2257 = vpack.c.b16 %v1777, %v1681
    %v2258 = vpack.c.b16 %v1778, %v1682
    %v2259 = vpack.c.b16 %v1779, %v1683
    %v2260 = vpack.c.b16 %v1780, %v1684
    %v2261 = vpack.c.b16 %v1781, %v1685
    %v2262 = vpack.c.b16 %v1782, %v1686
    %v2263 = vpack.c.b16 %v1783, %v1687
    %v2264 = vpack.c.b16 %v1784, %v1688
    %v2265 = vpack.c.b16 %v1785, %v1689
    %v2266 = vpack.c.b16 %v1786, %v1690
    %v2267 = vpack.c.b16 %v1787, %v1691
    %v2268 = vpack.c.b16 %v1788, %v1692
    %v2269 = vpack.c.b16 %v1789, %v1693
    %v2270 = vpack.c.b16 %v1790, %v1694
    %v2271 = vpack.c.b16 %v1791, %v1695
    %v2272 = vpack.c.b16 %v1792, %v1696
    %v2273 = vpack.c.b16 %v1793, %v1697
    %v2274 = vpack.c.b16 %v1794, %v1698
    %v2275 = vpack.c.b16 %v1795, %v1699
    %v2276 = vpack.c.b16 %v1796, %v1700
    %v2277 = vpack.c.b16 %v1797, %v1701
    %v2278 = vpack.c.b16 %v1798, %v1702
    %v2279 = vpack.c.b16 %v1799, %v1703
    %v2280 = vpack.c.b16 %v1800, %v1704
    %v2281 = vpack.c.b16 %v1801, %v1705
    %v2282 = vpack.c.b16 %v1802, %v1706
    %v2283 = vpack.c.b16 %v1803, %v1707
    %v2284 = vpack.c.b16 %v1804, %v1708
    %v2285 = vpack.c.b16 %v1805, %v1709
    %v2286 = vpack.c.b16 %v1806, %v1710
    %v2287 = vpack.c.b16 %v1807, %v1711
    %v2288 = vpack.c.b16 %v1808, %v1712
    %v2289 = vpack.c.b16 %v1809, %v1713
    %v2290 = vpack.c.b16 %v1810, %v1714
    %v2291 = vpack.c.b16 %v1811, %v1715
    %v2292 = vpack.c.b16 %v1812, %v1716
    %v2293 = vpack.c.b16 %v1813, %v1717
    %v2294 = vpack.c.b16 %v1814, %v1718
    %v2295 = vpack.c.b16 %v1815, %v1719
    %v2296 = vpack.c.b16 %v1816, %v1720
    %v2297 = vpack.c.b16 %v1817, %v1721
    %v2298 = vpack.c.b16 %v1818, %v1722
    %v2299 = vpack.c.b16 %v1819, %v1723
    %v2300 = vpack.c.b16 %v1820, %v1724
    %v2301 = vpack.c.b16 %v1821, %v1725
    %v2302 = vpack.c.b16 %v1822, %v1726
    %v2303 = vpack.c.b16 %v1823, %v1727
    %v2304 = vpack.c.b16 %v1824, %v1728
    %v2305 = vpack.c.b16 %v1825, %v1729
    %v2306 = vpack.c.b16 %v1826, %v1730
    %v2307 = vpack.c.b16 %v1827, %v1731
    %v2308 = vpack.c.b16 %v1828, %v1732
    %v2309 = vpack.c.b16 %v1829, %v1733
    %v2310 = vpack.c.b16 %v1830, %v1734
    %v2311 = vpack.c.b16 %v1831, %v1735
    %v2312 = vpack.c.b16 %v1832, %v1736
    %v2313 = vpack.c.b16 %v1833, %v1737
    %v2314 = vpack.c.b16 %v1834, %v1738
    %v2315 = vpack.c.b16 %v1835, %v1739
    %v2316 = vpack.c.b16 %v1836, %v1740
    %v2317 = vpack.c.b16 %v1837, %v1741
    %v2318 = vpack.c.b16 %v1838, %v1742
    %v2319 = vpack.c.b16 %v1839, %v1743
    %v2320 = vpack.c.b16 %v1840, %v1744
    %v2321 = vpack.c.b16 %v1841, %v1745
    %v2322 = vpack.c.b16 %v1842, %v1746
    %v2323 = vpack.c.b16 %v1843, %v1747
    %v2324 = vpack.c.b16 %v1844, %v1748
    %v2325 = vpack.c.b16 %v1845, %v1749
    %v2326 = vpack.c.b16 %v1846, %v1750
    %v2327 = vpack.c.b16 %v1847, %v1751
    %v2328 = vpack.c.b16 %v1848, %v1752
    %v2329 = vpack.c.b16 %v1849, %v1753
    %v2330 = vpack.c.b16 %v1850, %v1754
    %v2331 = vpack.c.b16 %v1851, %v1755
    %v2332 = vpack.c.b16 %v1852, %v1756
    %v2333 = vpack.c.b16 %v1949, %v1853
    %v2334 = vpack.c.b16 %v1950, %v1854
    %v2335 = vpack.c.b16 %v1951, %v1855
    %v2336 = vpack.c.b16 %v1952, %v1856
    %v2337 = vpack.c.b16 %v1953, %v1857
    %v2338 = vpack.c.b16 %v1954, %v1858
    %v2339 = vpack.c.b16 %v1955, %v1859
    %v2340 = vpack.c.b16 %v1956, %v1860
    %v2341 = vpack.c.b16 %v1957, %v1861
    %v2342 = vpack.c.b16 %v1958, %v1862
    %v2343 = vpack.c.b16 %v1959, %v1863
    %v2344 = vpack.c.b16 %v1960, %v1864
    %v2345 = vpack.c.b16 %v1961, %v1865
    %v2346 = vpack.c.b16 %v1962, %v1866
    %v2347 = vpack.c.b16 %v1963, %v1867
    %v2348 = vpack.c.b16 %v1964, %v1868
    %v2349 = vpack.c.b16 %v1965, %v1869
    %v2350 = vpack.c.b16 %v1966, %v1870
    %v2351 = vpack.c.b16 %v1967, %v1871
    %v2352 = vpack.c.b16 %v1968, %v1872
    %v2353 = vpack.c.b16 %v1969, %v1873
    %v2354 = vpack.c.b16 %v1970, %v1874
    %v2355 = vpack.c.b16 %v1971, %v1875
    %v2356 = vpack.c.b16 %v1972, %v1876
    %v2357 = vpack.c.b16 %v1973, %v1877
    %v2358 = vpack.c.b16 %v1974, %v1878
    %v2359 = vpack.c.b16 %v1975, %v1879
    %v2360 = vpack.c.b16 %v1976, %v1880
    %v2361 = vpack.c.b16 %v1977, %v1881
    %v2362 = vpack.c.b16 %v1978, %v1882
    %v2363 = vpack.c.b16 %v1979, %v1883
    %v2364 = vpack.c.b16 %v1980, %v1884
    %v2365 = vpack.c.b16 %v1981, %v1885
    %v2366 = vpack.c.b16 %v1982, %v1886
    %v2367 = vpack.c.b16 %v1983, %v1887
    %v2368 = vpack.c.b16 %v1984, %v1888
    %v2369 = vpack.c.b16 %v1985, %v1889
    %v2370 = vpack.c.b16 %v1986, %v1890
    %v2371 = vpack.c.b16 %v1987, %v1891
    %v2372 = vpack.c.b16 %v1988, %v1892
    %v2373 = vpack.c.b16 %v1989, %v1893
    %v2374 = vpack.c.b16 %v1990, %v1894
    %v2375 = vpack.c.b16 %v1991, %v1895
    %v2376 = vpack.c.b16 %v1992, %v1896
    %v2377 = vpack.c.b16 %v1993, %v1897
    %v2378 = vpack.c.b16 %v1994, %v1898
    %v2379 = vpack.c.b16 %v1995, %v1899
    %v2380 = vpack.c.b16 %v1996, %v1900
    %v2381 = vpack.c.b16 %v1997, %v1901
    %v2382 = vpack.c.b16 %v1998, %v1902
    %v2383 = vpack.c.b16 %v1999, %v1903
    %v2384 = vpack.c.b16 %v2000, %v1904
    %v2385 = vpack.c.b16 %v2001, %v1905
    %v2386 = vpack.c.b16 %v2002, %v1906
    %v2387 = vpack.c.b16 %v2003, %v1907
    %v2388 = vpack.c.b16 %v2004, %v1908
    %v2389 = vpack.c.b16 %v2005, %v1909
    %v2390 = vpack.c.b16 %v2006, %v1910
    %v2391 = vpack.c.b16 %v2007, %v1911
    %v2392 = vpack.c.b16 %v2008, %v1912
    %v2393 = vpack.c.b16 %v2009, %v1913
    %v2394 = vpack.c.b16 %v2010, %v1914
    %v2395 = vpack.c.b16 %v2011, %v1915
    %v2396 = vpack.c.b16 %v2012, %v1916
    %v2397 = vpack.c.b16 %v2013, %v1917
    %v2398 = vpack.c.b16 %v2014, %v1918
    %v2399 = vpack.c.b16 %v2015, %v1919
    %v2400 = vpack.c.b16 %v2016, %v1920
    %v2401 = vpack.c.b16 %v2017, %v1921
    %v2402 = vpack.c.b16 %v2018, %v1922
    %v2403 = vpack.c.b16 %v2019, %v1923
    %v2404 = vpack.c.b16 %v2020, %v1924
    %v2405 = vpack.c.b16 %v2021, %v1925
    %v2406 = vpack.c.b16 %v2022, %v1926
    %v2407 = vpack.c.b16 %v2023, %v1927
    %v2408 = vpack.c.b16 %v2024, %v1928
    %v2409 = vpack.c.b16 %v2025, %v1929
    %v2410 = vpack.c.b16 %v2026, %v1930
    %v2411 = vpack.c.b16 %v2027, %v1931
    %v2412 = vpack.c.b16 %v2028, %v1932
    %v2413 = vpack.c.b16 %v2029, %v1933
    %v2414 = vpack.c.b16 %v2030, %v1934
    %v2415 = vpack.c.b16 %v2031, %v1935
    %v2416 = vpack.c.b16 %v2032, %v1936
    %v2417 = vpack.c.b16 %v2033, %v1937
    %v2418 = vpack.c.b16 %v2034, %v1938
    %v2419 = vpack.c.b16 %v2035, %v1939
    %v2420 = vpack.c.b16 %v2036, %v1940
    %v2421 = vpack.c.b16 %v2037, %v1941
    %v2422 = vpack.c.b16 %v2038, %v1942
    %v2423 = vpack.c.b16 %v2039, %v1943
    %v2424 = vpack.c.b16 %v2040, %v1944
    %v2425 = vpack.c.b16 %v2041, %v1945
    %v2426 = vpack.c.b16 %v2042, %v1946
    %v2427 = vpack.c.b16 %v2043, %v1947
    %v2428 = vpack.c.b16 %v2044, %v1948
    %v2429 = vpack.c.b16 %v2045, %v2045
    %v2430 = vpack.c.b16 %v2046, %v2046
    %v2431 = vpack.c.b16 %v2047, %v2047
    %v2432 = vpack.c.b16 %v2048, %v2048
    %v2433 = vpack.c.b16 %v2049, %v2049
    %v2434 = vpack.c.b16 %v2050, %v2050
    %v2435 = vpack.c.b16 %v2051, %v2051
    %v2436 = vpack.c.b16 %v2052, %v2052
    %v2437 = vpack.c.b16 %v2053, %v2053
    %v2438 = vpack.c.b16 %v2054, %v2054
    %v2439 = vpack.c.b16 %v2055, %v2055
    %v2440 = vpack.c.b16 %v2056, %v2056
    %v2441 = vpack.c.b16 %v2057, %v2057
    %v2442 = vpack.c.b16 %v2058, %v2058
    %v2443 = vpack.c.b16 %v2059, %v2059
    %v2444 = vpack.c.b16 %v2060, %v2060
    %v2445 = vpack.c.b16 %v2061, %v2061
    %v2446 = vpack.c.b16 %v2062, %v2062
    %v2447 = vpack.c.b16 %v2063, %v2063
    %v2448 = vpack.c.b16 %v2064, %v2064
    %v2449 = vpack.c.b16 %v2065, %v2065
    %v2450 = vpack.c.b16 %v2066, %v2066
    %v2451 = vpack.c.b16 %v2067, %v2067
    %v2452 = vpack.c.b16 %v2068, %v2068
    %v2453 = vpack.c.b16 %v2069, %v2069
    %v2454 = vpack.c.b16 %v2070, %v2070
    %v2455 = vpack.c.b16 %v2071, %v2071
    %v2456 = vpack.c.b16 %v2072, %v2072
    %v2457 = vpack.c.b16 %v2073, %v2073
    %v2458 = vpack.c.b16 %v2074, %v2074
    %v2459 = vpack.c.b16 %v2075, %v2075
    %v2460 = vpack.c.b16 %v2076, %v2076
    %v2461 = vpack.c.b16 %v2077, %v2077
    %v2462 = vpack.c.b16 %v2078, %v2078
    %v2463 = vpack.c.b16 %v2079, %v2079
    %v2464 = vpack.c.b16 %v2080, %v2080
    %v2465 = vpack.c.b16 %v2081, %v2081
    %v2466 = vpack.c.b16 %v2082, %v2082
    %v2467 = vpack.c.b16 %v2083, %v2083
    %v2468 = vpack.c.b16 %v2084, %v2084
    %v2469 = vpack.c.b16 %v2085, %v2085
    %v2470 = vpack.c.b16 %v2086, %v2086
    %v2471 = vpack.c.b16 %v2087, %v2087
    %v2472 = vpack.c.b16 %v2088, %v2088
    %v2473 = vpack.c.b16 %v2089, %v2089
    %v2474 = vpack.c.b16 %v2090, %v2090
    %v2475 = vpack.c.b16 %v2091, %v2091
    %v2476 = vpack.c.b16 %v2092, %v2092
    %v2477 = vpack.c.b16 %v2093, %v2093
    %v2478 = vpack.c.b16 %v2094, %v2094
    %v2479 = vpack.c.b16 %v2095, %v2095
    %v2480 = vpack.c.b16 %v2096, %v2096
    %v2481 = vpack.c.b16 %v2097, %v2097
    %v2482 = vpack.c.b16 %v2098, %v2098
    %v2483 = vpack.c.b16 %v2099, %v2099
    %v2484 = vpack.c.b16 %v2100, %v2100
    %v2485 = vpack.c.b16 %v2101, %v2101
    %v2486 = vpack.c.b16 %v2102, %v2102
    %v2487 = vpack.c.b16 %v2103, %v2103
    %v2488 = vpack.c.b16 %v2104, %v2104
    %v2489 = vpack.c.b16 %v2105, %v2105
    %v2490 = vpack.c.b16 %v2106, %v2106
    %v2491 = vpack.c.b16 %v2107, %v2107
    %v2492 = vpack.c.b16 %v2108, %v2108
    %v2493 = vpack.c.b16 %v2109, %v2109
    %v2494 = vpack.c.b16 %v2110, %v2110
    %v2495 = vpack.c.b16 %v2111, %v2111
    %v2496 = vpack.c.b16 %v2112, %v2112
    %v2497 = vpack.c.b16 %v2113, %v2113
    %v2498 = vpack.c.b16 %v2114, %v2114
    %v2499 = vpack.c.b16 %v2115, %v2115
    %v2500 = vpack.c.b16 %v2116, %v2116
    %v2501 = vpack.c.b16 %v2117, %v2117
    %v2502 = vpack.c.b16 %v2118, %v2118
    %v2503 = vpack.c.b16 %v2119, %v2119
    %v2504 = vpack.c.b16 %v2120, %v2120
    %v2505 = vpack.c.b16 %v2121, %v2121
    %v2506 = vpack.c.b16 %v2122, %v2122
    %v2507 = vpack.c.b16 %v2123, %v2123
    %v2508 = vpack.c.b16 %v2124, %v2124
    %v2509 = vpack.c.b16 %v2125, %v2125
    %v2510 = vpack.c.b16 %v2126, %v2126
    %v2511 = vpack.c.b16 %v2127, %v2127
    %v2512 = vpack.c.b16 %v2128, %v2128
    %v2513 = vpack.c.b16 %v2129, %v2129
    %v2514 = vpack.c.b16 %v2130, %v2130
    %v2515 = vpack.c.b16 %v2131, %v2131
    %v2516 = vpack.c.b16 %v2132, %v2132
    %v2517 = vpack.c.b16 %v2133, %v2133
    %v2518 = vpack.c.b16 %v2134, %v2134
    %v2519 = vpack.c.b16 %v2135, %v2135
    %v2520 = vpack.c.b16 %v2136, %v2136
    %v2521 = vpack.c.b16 %v2137, %v2137
    %v2522 = vpack.c.b16 %v2138, %v2138
    %v2523 = vpack.c.b16 %v2139, %v2139
    %v2524 = vpack.c.b16 %v2140, %v2140
    %2909 = vmatprep.subr.bf16.mxu0 %v2142
    %2910 = vmatpush1.bf16.xpose.msra.mxu0 %v2141
    %2911 = vmatprep.subr.bf16.mxu0 %v2238
    %2912 = vmatpush1.bf16.xpose.msra.mxu0 %v2237
    %2913 = vmatprep.subr.bf16.mxu0 %v2334
    %2914 = vmatpush1.bf16.xpose.msra.mxu0 %v2333
    %2915 = vmatprep.subr.bf16.mxu0 %v2430
    %2916 = vmatpush1.bf16.xpose.msra.mxu0 %v2429
    %2917 = vmatprep.subr.bf16.mxu0 0
    %2918 = vmatpush1.bf16.xpose.msra.mxu0 0
    %2919 = vmatprep.subr.bf16.mxu0 0
    %2920 = vmatpush1.bf16.xpose.msra.mxu0 0
    %2921 = vmatprep.subr.bf16.mxu0 0
    %2922 = vmatpush1.bf16.xpose.msra.mxu0 0
    %2923 = vmatprep.subr.bf16.mxu0 0
    %2924 = vmatpush1.bf16.xpose.msra.mxu0 0
    %2925 = vmatprep.subr.bf16.mxu0 0
    %2926 = vmatpush1.bf16.xpose.msra.mxu0 0
    %2927 = vmatprep.subr.bf16.mxu0 0
    %2928 = vmatpush1.bf16.xpose.msra.mxu0 0
    %2929 = vmatprep.subr.bf16.mxu0 0
    %2930 = vmatpush1.bf16.xpose.msra.mxu0 0
    %2931 = vmatprep.subr.bf16.mxu0 0
    %2932 = vmatpush1.bf16.xpose.msra.mxu0 0
    %2933 = vmatprep.subr.bf16.mxu0 0
    %2934 = vmatpush1.bf16.xpose.msra.mxu0 0
    %2935 = vmatprep.subr.bf16.mxu0 0
    %2936 = vmatpush1.bf16.xpose.msra.mxu0 0
    %2937 = vmatprep.subr.bf16.mxu0 0
    %2938 = vmatpush1.bf16.xpose.msra.mxu0 0
    %2939 = vmatprep.subr.bf16.mxu0 0
    %2940 = vmatpush1.bf16.xpose.msra.mxu0 0
    %2941 = vmatprep.mubr.bf16.mxu0 %v486
    %2942 = vmatmul.mubr.bf16.gmra.mrb[0].mxu0 %v472
    %v2943 = vpop.f32.mrb[0].mxu0
    %v2944 = vadd.f32 %v435, %v2943
    %v2945 = vpop.f32.mrb[0].mxu0
    %v2946 = vpop.f32.mrb[0].mxu0
    %v2947 = vpop.f32.mrb[0].mxu0
    %2948 = vdwg.mxu0
    %2949 = vmatprep.subr.bf16.mxu0 %v2144
    %2950 = vmatpush1.bf16.xpose.msra.mxu0 %v2143
    %2951 = vmatprep.subr.bf16.mxu0 %v2240
    %2952 = vmatpush1.bf16.xpose.msra.mxu0 %v2239
    %2953 = vmatprep.subr.bf16.mxu0 %v2336
    %2954 = vmatpush1.bf16.xpose.msra.mxu0 %v2335
    %2955 = vmatprep.subr.bf16.mxu0 %v2432
    %2956 = vmatpush1.bf16.xpose.msra.mxu0 %v2431
    %2957 = vmatprep.subr.bf16.mxu0 0
    %2958 = vmatpush1.bf16.xpose.msra.mxu0 0
    %2959 = vmatprep.subr.bf16.mxu0 0
    %2960 = vmatpush1.bf16.xpose.msra.mxu0 0
    %2961 = vmatprep.subr.bf16.mxu0 0
    %2962 = vmatpush1.bf16.xpose.msra.mxu0 0
    %2963 = vmatprep.subr.bf16.mxu0 0
    %2964 = vmatpush1.bf16.xpose.msra.mxu0 0
    %2965 = vmatprep.subr.bf16.mxu0 0
    %2966 = vmatpush1.bf16.xpose.msra.mxu0 0
    %2967 = vmatprep.subr.bf16.mxu0 0
    %2968 = vmatpush1.bf16.xpose.msra.mxu0 0
    %2969 = vmatprep.subr.bf16.mxu0 0
    %2970 = vmatpush1.bf16.xpose.msra.mxu0 0
    %2971 = vmatprep.subr.bf16.mxu0 0
    %2972 = vmatpush1.bf16.xpose.msra.mxu0 0
    %2973 = vmatprep.subr.bf16.mxu0 0
    %2974 = vmatpush1.bf16.xpose.msra.mxu0 0
    %2975 = vmatprep.subr.bf16.mxu0 0
    %2976 = vmatpush1.bf16.xpose.msra.mxu0 0
    %2977 = vmatprep.subr.bf16.mxu0 0
    %2978 = vmatpush1.bf16.xpose.msra.mxu0 0
    %2979 = vmatprep.subr.bf16.mxu0 0
    %2980 = vmatpush1.bf16.xpose.msra.mxu0 0
    %2981 = vmatprep.mubr.bf16.mxu0 %v496
    %2982 = vmatmul.mubr.bf16.gmra.mrb[0].mxu0 %v494
    %v2983 = vpop.f32.mrb[0].mxu0
    %v2984 = vadd.f32 %v2944, %v2983
    %v2985 = vpop.f32.mrb[0].mxu0
    %v2986 = vpop.f32.mrb[0].mxu0
    %v2987 = vpop.f32.mrb[0].mxu0
    %2988 = vdwg.mxu0
    %2989 = vmatprep.subr.bf16.mxu0 %v2146
    %2990 = vmatpush1.bf16.xpose.msra.mxu0 %v2145
    %2991 = vmatprep.subr.bf16.mxu0 %v2242
    %2992 = vmatpush1.bf16.xpose.msra.mxu0 %v2241
    %2993 = vmatprep.subr.bf16.mxu0 %v2338
    %2994 = vmatpush1.bf16.xpose.msra.mxu0 %v2337
    %2995 = vmatprep.subr.bf16.mxu0 %v2434
    %2996 = vmatpush1.bf16.xpose.msra.mxu0 %v2433
    %2997 = vmatprep.subr.bf16.mxu0 0
    %2998 = vmatpush1.bf16.xpose.msra.mxu0 0
    %2999 = vmatprep.subr.bf16.mxu0 0
    %3000 = vmatpush1.bf16.xpose.msra.mxu0 0
    %3001 = vmatprep.subr.bf16.mxu0 0
    %3002 = vmatpush1.bf16.xpose.msra.mxu0 0
    %3003 = vmatprep.subr.bf16.mxu0 0
    %3004 = vmatpush1.bf16.xpose.msra.mxu0 0
    %3005 = vmatprep.subr.bf16.mxu0 0
    %3006 = vmatpush1.bf16.xpose.msra.mxu0 0
    %3007 = vmatprep.subr.bf16.mxu0 0
    %3008 = vmatpush1.bf16.xpose.msra.mxu0 0
    %3009 = vmatprep.subr.bf16.mxu0 0
    %3010 = vmatpush1.bf16.xpose.msra.mxu0 0
    %3011 = vmatprep.subr.bf16.mxu0 0
    %3012 = vmatpush1.bf16.xpose.msra.mxu0 0
    %3013 = vmatprep.subr.bf16.mxu0 0
    %3014 = vmatpush1.bf16.xpose.msra.mxu0 0
    %3015 = vmatprep.subr.bf16.mxu0 0
    %3016 = vmatpush1.bf16.xpose.msra.mxu0 0
    %3017 = vmatprep.subr.bf16.mxu0 0
    %3018 = vmatpush1.bf16.xpose.msra.mxu0 0
    %3019 = vmatprep.subr.bf16.mxu0 0
    %3020 = vmatpush1.bf16.xpose.msra.mxu0 0
    %3021 = vmatprep.mubr.bf16.mxu0 %v493
    %3022 = vmatmul.mubr.bf16.gmra.mrb[0].mxu0 %v479
    %v3023 = vpop.f32.mrb[0].mxu0
    %v3024 = vadd.f32 %v2984, %v3023
    %v3025 = vpop.f32.mrb[0].mxu0
    %v3026 = vpop.f32.mrb[0].mxu0
    %v3027 = vpop.f32.mrb[0].mxu0
    %3028 = vdwg.mxu0
    %3029 = vmatprep.subr.bf16.mxu0 %v2148
    %3030 = vmatpush1.bf16.xpose.msra.mxu0 %v2147
    %3031 = vmatprep.subr.bf16.mxu0 %v2244
    %3032 = vmatpush1.bf16.xpose.msra.mxu0 %v2243
    %3033 = vmatprep.subr.bf16.mxu0 %v2340
    %3034 = vmatpush1.bf16.xpose.msra.mxu0 %v2339
    %3035 = vmatprep.subr.bf16.mxu0 %v2436
    %3036 = vmatpush1.bf16.xpose.msra.mxu0 %v2435
    %3037 = vmatprep.subr.bf16.mxu0 0
    %3038 = vmatpush1.bf16.xpose.msra.mxu0 0
    %3039 = vmatprep.subr.bf16.mxu0 0
    %3040 = vmatpush1.bf16.xpose.msra.mxu0 0
    %3041 = vmatprep.subr.bf16.mxu0 0
    %3042 = vmatpush1.bf16.xpose.msra.mxu0 0
    %3043 = vmatprep.subr.bf16.mxu0 0
    %3044 = vmatpush1.bf16.xpose.msra.mxu0 0
    %3045 = vmatprep.subr.bf16.mxu0 0
    %3046 = vmatpush1.bf16.xpose.msra.mxu0 0
    %3047 = vmatprep.subr.bf16.mxu0 0
    %3048 = vmatpush1.bf16.xpose.msra.mxu0 0
    %3049 = vmatprep.subr.bf16.mxu0 0
    %3050 = vmatpush1.bf16.xpose.msra.mxu0 0
    %3051 = vmatprep.subr.bf16.mxu0 0
    %3052 = vmatpush1.bf16.xpose.msra.mxu0 0
    %3053 = vmatprep.subr.bf16.mxu0 0
    %3054 = vmatpush1.bf16.xpose.msra.mxu0 0
    %3055 = vmatprep.subr.bf16.mxu0 0
    %3056 = vmatpush1.bf16.xpose.msra.mxu0 0
    %3057 = vmatprep.subr.bf16.mxu0 0
    %3058 = vmatpush1.bf16.xpose.msra.mxu0 0
    %3059 = vmatprep.subr.bf16.mxu0 0
    %3060 = vmatpush1.bf16.xpose.msra.mxu0 0
    %3061 = vmatprep.mubr.bf16.mxu0 %v497
    %3062 = vmatmul.mubr.bf16.gmra.mrb[0].mxu0 %v495
    %v3063 = vpop.f32.mrb[0].mxu0
    %v3064 = vadd.f32 %v3024, %v3063
    %v3065 = vpop.f32.mrb[0].mxu0
    %v3066 = vpop.f32.mrb[0].mxu0
    %v3067 = vpop.f32.mrb[0].mxu0
    %3068 = vdwg.mxu0
    %3069 = vmatprep.subr.bf16.mxu0 %v2150
    %3070 = vmatpush1.bf16.xpose.msra.mxu0 %v2149
    %3071 = vmatprep.subr.bf16.mxu0 %v2246
    %3072 = vmatpush1.bf16.xpose.msra.mxu0 %v2245
    %3073 = vmatprep.subr.bf16.mxu0 %v2342
    %3074 = vmatpush1.bf16.xpose.msra.mxu0 %v2341
    %3075 = vmatprep.subr.bf16.mxu0 %v2438
    %3076 = vmatpush1.bf16.xpose.msra.mxu0 %v2437
    %3077 = vmatprep.subr.bf16.mxu0 0
    %3078 = vmatpush1.bf16.xpose.msra.mxu0 0
    %3079 = vmatprep.subr.bf16.mxu0 0
    %3080 = vmatpush1.bf16.xpose.msra.mxu0 0
    %3081 = vmatprep.subr.bf16.mxu0 0
    %3082 = vmatpush1.bf16.xpose.msra.mxu0 0
    %3083 = vmatprep.subr.bf16.mxu0 0
    %3084 = vmatpush1.bf16.xpose.msra.mxu0 0
    %3085 = vmatprep.subr.bf16.mxu0 0
    %3086 = vmatpush1.bf16.xpose.msra.mxu0 0
    %3087 = vmatprep.subr.bf16.mxu0 0
    %3088 = vmatpush1.bf16.xpose.msra.mxu0 0
    %3089 = vmatprep.subr.bf16.mxu0 0
    %3090 = vmatpush1.bf16.xpose.msra.mxu0 0
    %3091 = vmatprep.subr.bf16.mxu0 0
    %3092 = vmatpush1.bf16.xpose.msra.mxu0 0
    %3093 = vmatprep.subr.bf16.mxu0 0
    %3094 = vmatpush1.bf16.xpose.msra.mxu0 0
    %3095 = vmatprep.subr.bf16.mxu0 0
    %3096 = vmatpush1.bf16.xpose.msra.mxu0 0
    %3097 = vmatprep.subr.bf16.mxu0 0
    %3098 = vmatpush1.bf16.xpose.msra.mxu0 0
    %3099 = vmatprep.subr.bf16.mxu0 0
    %3100 = vmatpush1.bf16.xpose.msra.mxu0 0
    %3101 = vmatprep.mubr.bf16.mxu0 %v535
    %3102 = vmatmul.mubr.bf16.gmra.mrb[0].mxu0 %v521
    %v3103 = vpop.f32.mrb[0].mxu0
    %v3104 = vadd.f32 %v3064, %v3103
    %v3105 = vpop.f32.mrb[0].mxu0
    %v3106 = vpop.f32.mrb[0].mxu0
    %v3107 = vpop.f32.mrb[0].mxu0
    %3108 = vdwg.mxu0
    %3109 = vmatprep.subr.bf16.mxu0 %v2152
    %3110 = vmatpush1.bf16.xpose.msra.mxu0 %v2151
    %3111 = vmatprep.subr.bf16.mxu0 %v2248
    %3112 = vmatpush1.bf16.xpose.msra.mxu0 %v2247
    %3113 = vmatprep.subr.bf16.mxu0 %v2344
    %3114 = vmatpush1.bf16.xpose.msra.mxu0 %v2343
    %3115 = vmatprep.subr.bf16.mxu0 %v2440
    %3116 = vmatpush1.bf16.xpose.msra.mxu0 %v2439
    %3117 = vmatprep.subr.bf16.mxu0 0
    %3118 = vmatpush1.bf16.xpose.msra.mxu0 0
    %3119 = vmatprep.subr.bf16.mxu0 0
    %3120 = vmatpush1.bf16.xpose.msra.mxu0 0
    %3121 = vmatprep.subr.bf16.mxu0 0
    %3122 = vmatpush1.bf16.xpose.msra.mxu0 0
    %3123 = vmatprep.subr.bf16.mxu0 0
    %3124 = vmatpush1.bf16.xpose.msra.mxu0 0
    %3125 = vmatprep.subr.bf16.mxu0 0
    %3126 = vmatpush1.bf16.xpose.msra.mxu0 0
    %3127 = vmatprep.subr.bf16.mxu0 0
    %3128 = vmatpush1.bf16.xpose.msra.mxu0 0
    %3129 = vmatprep.subr.bf16.mxu0 0
    %3130 = vmatpush1.bf16.xpose.msra.mxu0 0
    %3131 = vmatprep.subr.bf16.mxu0 0
    %3132 = vmatpush1.bf16.xpose.msra.mxu0 0
    %3133 = vmatprep.subr.bf16.mxu0 0
    %3134 = vmatpush1.bf16.xpose.msra.mxu0 0
    %3135 = vmatprep.subr.bf16.mxu0 0
    %3136 = vmatpush1.bf16.xpose.msra.mxu0 0
    %3137 = vmatprep.subr.bf16.mxu0 0
    %3138 = vmatpush1.bf16.xpose.msra.mxu0 0
    %3139 = vmatprep.subr.bf16.mxu0 0
    %3140 = vmatpush1.bf16.xpose.msra.mxu0 0
    %3141 = vmatprep.mubr.bf16.mxu0 %v545
    %3142 = vmatmul.mubr.bf16.gmra.mrb[0].mxu0 %v543
    %v3143 = vpop.f32.mrb[0].mxu0
    %v3144 = vadd.f32 %v3104, %v3143
    %v3145 = vpop.f32.mrb[0].mxu0
    %v3146 = vpop.f32.mrb[0].mxu0
    %v3147 = vpop.f32.mrb[0].mxu0
    %3148 = vdwg.mxu0
    %3149 = vmatprep.subr.bf16.mxu0 %v2154
    %3150 = vmatpush1.bf16.xpose.msra.mxu0 %v2153
    %3151 = vmatprep.subr.bf16.mxu0 %v2250
    %3152 = vmatpush1.bf16.xpose.msra.mxu0 %v2249
    %3153 = vmatprep.subr.bf16.mxu0 %v2346
    %3154 = vmatpush1.bf16.xpose.msra.mxu0 %v2345
    %3155 = vmatprep.subr.bf16.mxu0 %v2442
    %3156 = vmatpush1.bf16.xpose.msra.mxu0 %v2441
    %3157 = vmatprep.subr.bf16.mxu0 0
    %3158 = vmatpush1.bf16.xpose.msra.mxu0 0
    %3159 = vmatprep.subr.bf16.mxu0 0
    %3160 = vmatpush1.bf16.xpose.msra.mxu0 0
    %3161 = vmatprep.subr.bf16.mxu0 0
    %3162 = vmatpush1.bf16.xpose.msra.mxu0 0
    %3163 = vmatprep.subr.bf16.mxu0 0
    %3164 = vmatpush1.bf16.xpose.msra.mxu0 0
    %3165 = vmatprep.subr.bf16.mxu0 0
    %3166 = vmatpush1.bf16.xpose.msra.mxu0 0
    %3167 = vmatprep.subr.bf16.mxu0 0
    %3168 = vmatpush1.bf16.xpose.msra.mxu0 0
    %3169 = vmatprep.subr.bf16.mxu0 0
    %3170 = vmatpush1.bf16.xpose.msra.mxu0 0
    %3171 = vmatprep.subr.bf16.mxu0 0
    %3172 = vmatpush1.bf16.xpose.msra.mxu0 0
    %3173 = vmatprep.subr.bf16.mxu0 0
    %3174 = vmatpush1.bf16.xpose.msra.mxu0 0
    %3175 = vmatprep.subr.bf16.mxu0 0
    %3176 = vmatpush1.bf16.xpose.msra.mxu0 0
    %3177 = vmatprep.subr.bf16.mxu0 0
    %3178 = vmatpush1.bf16.xpose.msra.mxu0 0
    %3179 = vmatprep.subr.bf16.mxu0 0
    %3180 = vmatpush1.bf16.xpose.msra.mxu0 0
    %3181 = vmatprep.mubr.bf16.mxu0 %v542
    %3182 = vmatmul.mubr.bf16.gmra.mrb[0].mxu0 %v528
    %v3183 = vpop.f32.mrb[0].mxu0
    %v3184 = vadd.f32 %v3144, %v3183
    %v3185 = vpop.f32.mrb[0].mxu0
    %v3186 = vpop.f32.mrb[0].mxu0
    %v3187 = vpop.f32.mrb[0].mxu0
    %3188 = vdwg.mxu0
    %3189 = vmatprep.subr.bf16.mxu0 %v2156
    %3190 = vmatpush1.bf16.xpose.msra.mxu0 %v2155
    %3191 = vmatprep.subr.bf16.mxu0 %v2252
    %3192 = vmatpush1.bf16.xpose.msra.mxu0 %v2251
    %3193 = vmatprep.subr.bf16.mxu0 %v2348
    %3194 = vmatpush1.bf16.xpose.msra.mxu0 %v2347
    %3195 = vmatprep.subr.bf16.mxu0 %v2444
    %3196 = vmatpush1.bf16.xpose.msra.mxu0 %v2443
    %3197 = vmatprep.subr.bf16.mxu0 0
    %3198 = vmatpush1.bf16.xpose.msra.mxu0 0
    %3199 = vmatprep.subr.bf16.mxu0 0
    %3200 = vmatpush1.bf16.xpose.msra.mxu0 0
    %3201 = vmatprep.subr.bf16.mxu0 0
    %3202 = vmatpush1.bf16.xpose.msra.mxu0 0
    %3203 = vmatprep.subr.bf16.mxu0 0
    %3204 = vmatpush1.bf16.xpose.msra.mxu0 0
    %3205 = vmatprep.subr.bf16.mxu0 0
    %3206 = vmatpush1.bf16.xpose.msra.mxu0 0
    %3207 = vmatprep.subr.bf16.mxu0 0
    %3208 = vmatpush1.bf16.xpose.msra.mxu0 0
    %3209 = vmatprep.subr.bf16.mxu0 0
    %3210 = vmatpush1.bf16.xpose.msra.mxu0 0
    %3211 = vmatprep.subr.bf16.mxu0 0
    %3212 = vmatpush1.bf16.xpose.msra.mxu0 0
    %3213 = vmatprep.subr.bf16.mxu0 0
    %3214 = vmatpush1.bf16.xpose.msra.mxu0 0
    %3215 = vmatprep.subr.bf16.mxu0 0
    %3216 = vmatpush1.bf16.xpose.msra.mxu0 0
    %3217 = vmatprep.subr.bf16.mxu0 0
    %3218 = vmatpush1.bf16.xpose.msra.mxu0 0
    %3219 = vmatprep.subr.bf16.mxu0 0
    %3220 = vmatpush1.bf16.xpose.msra.mxu0 0
    %3221 = vmatprep.mubr.bf16.mxu0 %v546
    %3222 = vmatmul.mubr.bf16.gmra.mrb[0].mxu0 %v544
    %v3223 = vpop.f32.mrb[0].mxu0
    %v3224 = vadd.f32 %v3184, %v3223
    %v3225 = vpop.f32.mrb[0].mxu0
    %v3226 = vpop.f32.mrb[0].mxu0
    %v3227 = vpop.f32.mrb[0].mxu0
    %3228 = vdwg.mxu0
    %3229 = vmatprep.subr.bf16.mxu0 %v2158
    %3230 = vmatpush1.bf16.xpose.msra.mxu0 %v2157
    %3231 = vmatprep.subr.bf16.mxu0 %v2254
    %3232 = vmatpush1.bf16.xpose.msra.mxu0 %v2253
    %3233 = vmatprep.subr.bf16.mxu0 %v2350
    %3234 = vmatpush1.bf16.xpose.msra.mxu0 %v2349
    %3235 = vmatprep.subr.bf16.mxu0 %v2446
    %3236 = vmatpush1.bf16.xpose.msra.mxu0 %v2445
    %3237 = vmatprep.subr.bf16.mxu0 0
    %3238 = vmatpush1.bf16.xpose.msra.mxu0 0
    %3239 = vmatprep.subr.bf16.mxu0 0
    %3240 = vmatpush1.bf16.xpose.msra.mxu0 0
    %3241 = vmatprep.subr.bf16.mxu0 0
    %3242 = vmatpush1.bf16.xpose.msra.mxu0 0
    %3243 = vmatprep.subr.bf16.mxu0 0
    %3244 = vmatpush1.bf16.xpose.msra.mxu0 0
    %3245 = vmatprep.subr.bf16.mxu0 0
    %3246 = vmatpush1.bf16.xpose.msra.mxu0 0
    %3247 = vmatprep.subr.bf16.mxu0 0
    %3248 = vmatpush1.bf16.xpose.msra.mxu0 0
    %3249 = vmatprep.subr.bf16.mxu0 0
    %3250 = vmatpush1.bf16.xpose.msra.mxu0 0
    %3251 = vmatprep.subr.bf16.mxu0 0
    %3252 = vmatpush1.bf16.xpose.msra.mxu0 0
    %3253 = vmatprep.subr.bf16.mxu0 0
    %3254 = vmatpush1.bf16.xpose.msra.mxu0 0
    %3255 = vmatprep.subr.bf16.mxu0 0
    %3256 = vmatpush1.bf16.xpose.msra.mxu0 0
    %3257 = vmatprep.subr.bf16.mxu0 0
    %3258 = vmatpush1.bf16.xpose.msra.mxu0 0
    %3259 = vmatprep.subr.bf16.mxu0 0
    %3260 = vmatpush1.bf16.xpose.msra.mxu0 0
    %3261 = vmatprep.mubr.bf16.mxu0 %v584
    %3262 = vmatmul.mubr.bf16.gmra.mrb[0].mxu0 %v570
    %v3263 = vpop.f32.mrb[0].mxu0
    %v3264 = vadd.f32 %v3224, %v3263
    %v3265 = vpop.f32.mrb[0].mxu0
    %v3266 = vpop.f32.mrb[0].mxu0
    %v3267 = vpop.f32.mrb[0].mxu0
    %3268 = vdwg.mxu0
    %3269 = vmatprep.subr.bf16.mxu0 %v2160
    %3270 = vmatpush1.bf16.xpose.msra.mxu0 %v2159
    %3271 = vmatprep.subr.bf16.mxu0 %v2256
    %3272 = vmatpush1.bf16.xpose.msra.mxu0 %v2255
    %3273 = vmatprep.subr.bf16.mxu0 %v2352
    %3274 = vmatpush1.bf16.xpose.msra.mxu0 %v2351
    %3275 = vmatprep.subr.bf16.mxu0 %v2448
    %3276 = vmatpush1.bf16.xpose.msra.mxu0 %v2447
    %3277 = vmatprep.subr.bf16.mxu0 0
    %3278 = vmatpush1.bf16.xpose.msra.mxu0 0
    %3279 = vmatprep.subr.bf16.mxu0 0
    %3280 = vmatpush1.bf16.xpose.msra.mxu0 0
    %3281 = vmatprep.subr.bf16.mxu0 0
    %3282 = vmatpush1.bf16.xpose.msra.mxu0 0
    %3283 = vmatprep.subr.bf16.mxu0 0
    %3284 = vmatpush1.bf16.xpose.msra.mxu0 0
    %3285 = vmatprep.subr.bf16.mxu0 0
    %3286 = vmatpush1.bf16.xpose.msra.mxu0 0
    %3287 = vmatprep.subr.bf16.mxu0 0
    %3288 = vmatpush1.bf16.xpose.msra.mxu0 0
    %3289 = vmatprep.subr.bf16.mxu0 0
    %3290 = vmatpush1.bf16.xpose.msra.mxu0 0
    %3291 = vmatprep.subr.bf16.mxu0 0
    %3292 = vmatpush1.bf16.xpose.msra.mxu0 0
    %3293 = vmatprep.subr.bf16.mxu0 0
    %3294 = vmatpush1.bf16.xpose.msra.mxu0 0
    %3295 = vmatprep.subr.bf16.mxu0 0
    %3296 = vmatpush1.bf16.xpose.msra.mxu0 0
    %3297 = vmatprep.subr.bf16.mxu0 0
    %3298 = vmatpush1.bf16.xpose.msra.mxu0 0
    %3299 = vmatprep.subr.bf16.mxu0 0
    %3300 = vmatpush1.bf16.xpose.msra.mxu0 0
    %3301 = vmatprep.mubr.bf16.mxu0 %v594
    %3302 = vmatmul.mubr.bf16.gmra.mrb[0].mxu0 %v592
    %v3303 = vpop.f32.mrb[0].mxu0
    %v3304 = vadd.f32 %v3264, %v3303
    %v3305 = vpop.f32.mrb[0].mxu0
    %v3306 = vpop.f32.mrb[0].mxu0
    %v3307 = vpop.f32.mrb[0].mxu0
    %3308 = vdwg.mxu0
    %3309 = vmatprep.subr.bf16.mxu0 %v2162
    %3310 = vmatpush1.bf16.xpose.msra.mxu0 %v2161
    %3311 = vmatprep.subr.bf16.mxu0 %v2258
    %3312 = vmatpush1.bf16.xpose.msra.mxu0 %v2257
    %3313 = vmatprep.subr.bf16.mxu0 %v2354
    %3314 = vmatpush1.bf16.xpose.msra.mxu0 %v2353
    %3315 = vmatprep.subr.bf16.mxu0 %v2450
    %3316 = vmatpush1.bf16.xpose.msra.mxu0 %v2449
    %3317 = vmatprep.subr.bf16.mxu0 0
    %3318 = vmatpush1.bf16.xpose.msra.mxu0 0
    %3319 = vmatprep.subr.bf16.mxu0 0
    %3320 = vmatpush1.bf16.xpose.msra.mxu0 0
    %3321 = vmatprep.subr.bf16.mxu0 0
    %3322 = vmatpush1.bf16.xpose.msra.mxu0 0
    %3323 = vmatprep.subr.bf16.mxu0 0
    %3324 = vmatpush1.bf16.xpose.msra.mxu0 0
    %3325 = vmatprep.subr.bf16.mxu0 0
    %3326 = vmatpush1.bf16.xpose.msra.mxu0 0
    %3327 = vmatprep.subr.bf16.mxu0 0
    %3328 = vmatpush1.bf16.xpose.msra.mxu0 0
    %3329 = vmatprep.subr.bf16.mxu0 0
    %3330 = vmatpush1.bf16.xpose.msra.mxu0 0
    %3331 = vmatprep.subr.bf16.mxu0 0
    %3332 = vmatpush1.bf16.xpose.msra.mxu0 0
    %3333 = vmatprep.subr.bf16.mxu0 0
    %3334 = vmatpush1.bf16.xpose.msra.mxu0 0
    %3335 = vmatprep.subr.bf16.mxu0 0
    %3336 = vmatpush1.bf16.xpose.msra.mxu0 0
    %3337 = vmatprep.subr.bf16.mxu0 0
    %3338 = vmatpush1.bf16.xpose.msra.mxu0 0
    %3339 = vmatprep.subr.bf16.mxu0 0
    %3340 = vmatpush1.bf16.xpose.msra.mxu0 0
    %3341 = vmatprep.mubr.bf16.mxu0 %v591
    %3342 = vmatmul.mubr.bf16.gmra.mrb[0].mxu0 %v577
    %v3343 = vpop.f32.mrb[0].mxu0
    %v3344 = vadd.f32 %v3304, %v3343
    %v3345 = vpop.f32.mrb[0].mxu0
    %v3346 = vpop.f32.mrb[0].mxu0
    %v3347 = vpop.f32.mrb[0].mxu0
    %3348 = vdwg.mxu0
    %3349 = vmatprep.subr.bf16.mxu0 %v2164
    %3350 = vmatpush1.bf16.xpose.msra.mxu0 %v2163
    %3351 = vmatprep.subr.bf16.mxu0 %v2260
    %3352 = vmatpush1.bf16.xpose.msra.mxu0 %v2259
    %3353 = vmatprep.subr.bf16.mxu0 %v2356
    %3354 = vmatpush1.bf16.xpose.msra.mxu0 %v2355
    %3355 = vmatprep.subr.bf16.mxu0 %v2452
    %3356 = vmatpush1.bf16.xpose.msra.mxu0 %v2451
    %3357 = vmatprep.subr.bf16.mxu0 0
    %3358 = vmatpush1.bf16.xpose.msra.mxu0 0
    %3359 = vmatprep.subr.bf16.mxu0 0
    %3360 = vmatpush1.bf16.xpose.msra.mxu0 0
    %3361 = vmatprep.subr.bf16.mxu0 0
    %3362 = vmatpush1.bf16.xpose.msra.mxu0 0
    %3363 = vmatprep.subr.bf16.mxu0 0
    %3364 = vmatpush1.bf16.xpose.msra.mxu0 0
    %3365 = vmatprep.subr.bf16.mxu0 0
    %3366 = vmatpush1.bf16.xpose.msra.mxu0 0
    %3367 = vmatprep.subr.bf16.mxu0 0
    %3368 = vmatpush1.bf16.xpose.msra.mxu0 0
    %3369 = vmatprep.subr.bf16.mxu0 0
    %3370 = vmatpush1.bf16.xpose.msra.mxu0 0
    %3371 = vmatprep.subr.bf16.mxu0 0
    %3372 = vmatpush1.bf16.xpose.msra.mxu0 0
    %3373 = vmatprep.subr.bf16.mxu0 0
    %3374 = vmatpush1.bf16.xpose.msra.mxu0 0
    %3375 = vmatprep.subr.bf16.mxu0 0
    %3376 = vmatpush1.bf16.xpose.msra.mxu0 0
    %3377 = vmatprep.subr.bf16.mxu0 0
    %3378 = vmatpush1.bf16.xpose.msra.mxu0 0
    %3379 = vmatprep.subr.bf16.mxu0 0
    %3380 = vmatpush1.bf16.xpose.msra.mxu0 0
    %3381 = vmatprep.mubr.bf16.mxu0 %v595
    %3382 = vmatmul.mubr.bf16.gmra.mrb[0].mxu0 %v593
    %v3383 = vpop.f32.mrb[0].mxu0
    %v3384 = vadd.f32 %v3344, %v3383
    %v3385 = vpop.f32.mrb[0].mxu0
    %v3386 = vpop.f32.mrb[0].mxu0
    %v3387 = vpop.f32.mrb[0].mxu0
    %3388 = vdwg.mxu0
    %3389 = vmatprep.subr.bf16.mxu0 %v2166
    %3390 = vmatpush1.bf16.xpose.msra.mxu0 %v2165
    %3391 = vmatprep.subr.bf16.mxu0 %v2262
    %3392 = vmatpush1.bf16.xpose.msra.mxu0 %v2261
    %3393 = vmatprep.subr.bf16.mxu0 %v2358
    %3394 = vmatpush1.bf16.xpose.msra.mxu0 %v2357
    %3395 = vmatprep.subr.bf16.mxu0 %v2454
    %3396 = vmatpush1.bf16.xpose.msra.mxu0 %v2453
    %3397 = vmatprep.subr.bf16.mxu0 0
    %3398 = vmatpush1.bf16.xpose.msra.mxu0 0
    %3399 = vmatprep.subr.bf16.mxu0 0
    %3400 = vmatpush1.bf16.xpose.msra.mxu0 0
    %3401 = vmatprep.subr.bf16.mxu0 0
    %3402 = vmatpush1.bf16.xpose.msra.mxu0 0
    %3403 = vmatprep.subr.bf16.mxu0 0
    %3404 = vmatpush1.bf16.xpose.msra.mxu0 0
    %3405 = vmatprep.subr.bf16.mxu0 0
    %3406 = vmatpush1.bf16.xpose.msra.mxu0 0
    %3407 = vmatprep.subr.bf16.mxu0 0
    %3408 = vmatpush1.bf16.xpose.msra.mxu0 0
    %3409 = vmatprep.subr.bf16.mxu0 0
    %3410 = vmatpush1.bf16.xpose.msra.mxu0 0
    %3411 = vmatprep.subr.bf16.mxu0 0
    %3412 = vmatpush1.bf16.xpose.msra.mxu0 0
    %3413 = vmatprep.subr.bf16.mxu0 0
    %3414 = vmatpush1.bf16.xpose.msra.mxu0 0
    %3415 = vmatprep.subr.bf16.mxu0 0
    %3416 = vmatpush1.bf16.xpose.msra.mxu0 0
    %3417 = vmatprep.subr.bf16.mxu0 0
    %3418 = vmatpush1.bf16.xpose.msra.mxu0 0
    %3419 = vmatprep.subr.bf16.mxu0 0
    %3420 = vmatpush1.bf16.xpose.msra.mxu0 0
    %3421 = vmatprep.mubr.bf16.mxu0 %v633
    %3422 = vmatmul.mubr.bf16.gmra.mrb[0].mxu0 %v619
    %v3423 = vpop.f32.mrb[0].mxu0
    %v3424 = vadd.f32 %v3384, %v3423
    %v3425 = vpop.f32.mrb[0].mxu0
    %v3426 = vpop.f32.mrb[0].mxu0
    %v3427 = vpop.f32.mrb[0].mxu0
    %3428 = vdwg.mxu0
    %3429 = vmatprep.subr.bf16.mxu0 %v2168
    %3430 = vmatpush1.bf16.xpose.msra.mxu0 %v2167
    %3431 = vmatprep.subr.bf16.mxu0 %v2264
    %3432 = vmatpush1.bf16.xpose.msra.mxu0 %v2263
    %3433 = vmatprep.subr.bf16.mxu0 %v2360
    %3434 = vmatpush1.bf16.xpose.msra.mxu0 %v2359
    %3435 = vmatprep.subr.bf16.mxu0 %v2456
    %3436 = vmatpush1.bf16.xpose.msra.mxu0 %v2455
    %3437 = vmatprep.subr.bf16.mxu0 0
    %3438 = vmatpush1.bf16.xpose.msra.mxu0 0
    %3439 = vmatprep.subr.bf16.mxu0 0
    %3440 = vmatpush1.bf16.xpose.msra.mxu0 0
    %3441 = vmatprep.subr.bf16.mxu0 0
    %3442 = vmatpush1.bf16.xpose.msra.mxu0 0
    %3443 = vmatprep.subr.bf16.mxu0 0
    %3444 = vmatpush1.bf16.xpose.msra.mxu0 0
    %3445 = vmatprep.subr.bf16.mxu0 0
    %3446 = vmatpush1.bf16.xpose.msra.mxu0 0
    %3447 = vmatprep.subr.bf16.mxu0 0
    %3448 = vmatpush1.bf16.xpose.msra.mxu0 0
    %3449 = vmatprep.subr.bf16.mxu0 0
    %3450 = vmatpush1.bf16.xpose.msra.mxu0 0
    %3451 = vmatprep.subr.bf16.mxu0 0
    %3452 = vmatpush1.bf16.xpose.msra.mxu0 0
    %3453 = vmatprep.subr.bf16.mxu0 0
    %3454 = vmatpush1.bf16.xpose.msra.mxu0 0
    %3455 = vmatprep.subr.bf16.mxu0 0
    %3456 = vmatpush1.bf16.xpose.msra.mxu0 0
    %3457 = vmatprep.subr.bf16.mxu0 0
    %3458 = vmatpush1.bf16.xpose.msra.mxu0 0
    %3459 = vmatprep.subr.bf16.mxu0 0
    %3460 = vmatpush1.bf16.xpose.msra.mxu0 0
    %3461 = vmatprep.mubr.bf16.mxu0 %v643
    %3462 = vmatmul.mubr.bf16.gmra.mrb[0].mxu0 %v641
    %v3463 = vpop.f32.mrb[0].mxu0
    %v3464 = vadd.f32 %v3424, %v3463
    %v3465 = vpop.f32.mrb[0].mxu0
    %v3466 = vpop.f32.mrb[0].mxu0
    %v3467 = vpop.f32.mrb[0].mxu0
    %3468 = vdwg.mxu0
    %3469 = vmatprep.subr.bf16.mxu0 %v2170
    %3470 = vmatpush1.bf16.xpose.msra.mxu0 %v2169
    %3471 = vmatprep.subr.bf16.mxu0 %v2266
    %3472 = vmatpush1.bf16.xpose.msra.mxu0 %v2265
    %3473 = vmatprep.subr.bf16.mxu0 %v2362
    %3474 = vmatpush1.bf16.xpose.msra.mxu0 %v2361
    %3475 = vmatprep.subr.bf16.mxu0 %v2458
    %3476 = vmatpush1.bf16.xpose.msra.mxu0 %v2457
    %3477 = vmatprep.subr.bf16.mxu0 0
    %3478 = vmatpush1.bf16.xpose.msra.mxu0 0
    %3479 = vmatprep.subr.bf16.mxu0 0
    %3480 = vmatpush1.bf16.xpose.msra.mxu0 0
    %3481 = vmatprep.subr.bf16.mxu0 0
    %3482 = vmatpush1.bf16.xpose.msra.mxu0 0
    %3483 = vmatprep.subr.bf16.mxu0 0
    %3484 = vmatpush1.bf16.xpose.msra.mxu0 0
    %3485 = vmatprep.subr.bf16.mxu0 0
    %3486 = vmatpush1.bf16.xpose.msra.mxu0 0
    %3487 = vmatprep.subr.bf16.mxu0 0
    %3488 = vmatpush1.bf16.xpose.msra.mxu0 0
    %3489 = vmatprep.subr.bf16.mxu0 0
    %3490 = vmatpush1.bf16.xpose.msra.mxu0 0
    %3491 = vmatprep.subr.bf16.mxu0 0
    %3492 = vmatpush1.bf16.xpose.msra.mxu0 0
    %3493 = vmatprep.subr.bf16.mxu0 0
    %3494 = vmatpush1.bf16.xpose.msra.mxu0 0
    %3495 = vmatprep.subr.bf16.mxu0 0
    %3496 = vmatpush1.bf16.xpose.msra.mxu0 0
    %3497 = vmatprep.subr.bf16.mxu0 0
    %3498 = vmatpush1.bf16.xpose.msra.mxu0 0
    %3499 = vmatprep.subr.bf16.mxu0 0
    %3500 = vmatpush1.bf16.xpose.msra.mxu0 0
    %3501 = vmatprep.mubr.bf16.mxu0 %v640
    %3502 = vmatmul.mubr.bf16.gmra.mrb[0].mxu0 %v626
    %v3503 = vpop.f32.mrb[0].mxu0
    %v3504 = vadd.f32 %v3464, %v3503
    %v3505 = vpop.f32.mrb[0].mxu0
    %v3506 = vpop.f32.mrb[0].mxu0
    %v3507 = vpop.f32.mrb[0].mxu0
    %3508 = vdwg.mxu0
    %3509 = vmatprep.subr.bf16.mxu0 %v2172
    %3510 = vmatpush1.bf16.xpose.msra.mxu0 %v2171
    %3511 = vmatprep.subr.bf16.mxu0 %v2268
    %3512 = vmatpush1.bf16.xpose.msra.mxu0 %v2267
    %3513 = vmatprep.subr.bf16.mxu0 %v2364
    %3514 = vmatpush1.bf16.xpose.msra.mxu0 %v2363
    %3515 = vmatprep.subr.bf16.mxu0 %v2460
    %3516 = vmatpush1.bf16.xpose.msra.mxu0 %v2459
    %3517 = vmatprep.subr.bf16.mxu0 0
    %3518 = vmatpush1.bf16.xpose.msra.mxu0 0
    %3519 = vmatprep.subr.bf16.mxu0 0
    %3520 = vmatpush1.bf16.xpose.msra.mxu0 0
    %3521 = vmatprep.subr.bf16.mxu0 0
    %3522 = vmatpush1.bf16.xpose.msra.mxu0 0
    %3523 = vmatprep.subr.bf16.mxu0 0
    %3524 = vmatpush1.bf16.xpose.msra.mxu0 0
    %3525 = vmatprep.subr.bf16.mxu0 0
    %3526 = vmatpush1.bf16.xpose.msra.mxu0 0
    %3527 = vmatprep.subr.bf16.mxu0 0
    %3528 = vmatpush1.bf16.xpose.msra.mxu0 0
    %3529 = vmatprep.subr.bf16.mxu0 0
    %3530 = vmatpush1.bf16.xpose.msra.mxu0 0
    %3531 = vmatprep.subr.bf16.mxu0 0
    %3532 = vmatpush1.bf16.xpose.msra.mxu0 0
    %3533 = vmatprep.subr.bf16.mxu0 0
    %3534 = vmatpush1.bf16.xpose.msra.mxu0 0
    %3535 = vmatprep.subr.bf16.mxu0 0
    %3536 = vmatpush1.bf16.xpose.msra.mxu0 0
    %3537 = vmatprep.subr.bf16.mxu0 0
    %3538 = vmatpush1.bf16.xpose.msra.mxu0 0
    %3539 = vmatprep.subr.bf16.mxu0 0
    %3540 = vmatpush1.bf16.xpose.msra.mxu0 0
    %3541 = vmatprep.mubr.bf16.mxu0 %v644
    %3542 = vmatmul.mubr.bf16.gmra.mrb[0].mxu0 %v642
    %v3543 = vpop.f32.mrb[0].mxu0
    %v3544 = vadd.f32 %v3504, %v3543
    %v3545 = vpop.f32.mrb[0].mxu0
    %v3546 = vpop.f32.mrb[0].mxu0
    %v3547 = vpop.f32.mrb[0].mxu0
    %3548 = vdwg.mxu0
    %3549 = vmatprep.subr.bf16.mxu0 %v2174
    %3550 = vmatpush1.bf16.xpose.msra.mxu0 %v2173
    %3551 = vmatprep.subr.bf16.mxu0 %v2270
    %3552 = vmatpush1.bf16.xpose.msra.mxu0 %v2269
    %3553 = vmatprep.subr.bf16.mxu0 %v2366
    %3554 = vmatpush1.bf16.xpose.msra.mxu0 %v2365
    %3555 = vmatprep.subr.bf16.mxu0 %v2462
    %3556 = vmatpush1.bf16.xpose.msra.mxu0 %v2461
    %3557 = vmatprep.subr.bf16.mxu0 0
    %3558 = vmatpush1.bf16.xpose.msra.mxu0 0
    %3559 = vmatprep.subr.bf16.mxu0 0
    %3560 = vmatpush1.bf16.xpose.msra.mxu0 0
    %3561 = vmatprep.subr.bf16.mxu0 0
    %3562 = vmatpush1.bf16.xpose.msra.mxu0 0
    %3563 = vmatprep.subr.bf16.mxu0 0
    %3564 = vmatpush1.bf16.xpose.msra.mxu0 0
    %3565 = vmatprep.subr.bf16.mxu0 0
    %3566 = vmatpush1.bf16.xpose.msra.mxu0 0
    %3567 = vmatprep.subr.bf16.mxu0 0
    %3568 = vmatpush1.bf16.xpose.msra.mxu0 0
    %3569 = vmatprep.subr.bf16.mxu0 0
    %3570 = vmatpush1.bf16.xpose.msra.mxu0 0
    %3571 = vmatprep.subr.bf16.mxu0 0
    %3572 = vmatpush1.bf16.xpose.msra.mxu0 0
    %3573 = vmatprep.subr.bf16.mxu0 0
    %3574 = vmatpush1.bf16.xpose.msra.mxu0 0
    %3575 = vmatprep.subr.bf16.mxu0 0
    %3576 = vmatpush1.bf16.xpose.msra.mxu0 0
    %3577 = vmatprep.subr.bf16.mxu0 0
    %3578 = vmatpush1.bf16.xpose.msra.mxu0 0
    %3579 = vmatprep.subr.bf16.mxu0 0
    %3580 = vmatpush1.bf16.xpose.msra.mxu0 0
    %3581 = vmatprep.mubr.bf16.mxu0 %v682
    %3582 = vmatmul.mubr.bf16.gmra.mrb[0].mxu0 %v668
    %v3583 = vpop.f32.mrb[0].mxu0
    %v3584 = vadd.f32 %v3544, %v3583
    %v3585 = vpop.f32.mrb[0].mxu0
    %v3586 = vpop.f32.mrb[0].mxu0
    %v3587 = vpop.f32.mrb[0].mxu0
    %3588 = vdwg.mxu0
    %3589 = vmatprep.subr.bf16.mxu0 %v2176
    %3590 = vmatpush1.bf16.xpose.msra.mxu0 %v2175
    %3591 = vmatprep.subr.bf16.mxu0 %v2272
    %3592 = vmatpush1.bf16.xpose.msra.mxu0 %v2271
    %3593 = vmatprep.subr.bf16.mxu0 %v2368
    %3594 = vmatpush1.bf16.xpose.msra.mxu0 %v2367
    %3595 = vmatprep.subr.bf16.mxu0 %v2464
    %3596 = vmatpush1.bf16.xpose.msra.mxu0 %v2463
    %3597 = vmatprep.subr.bf16.mxu0 0
    %3598 = vmatpush1.bf16.xpose.msra.mxu0 0
    %3599 = vmatprep.subr.bf16.mxu0 0
    %3600 = vmatpush1.bf16.xpose.msra.mxu0 0
    %3601 = vmatprep.subr.bf16.mxu0 0
    %3602 = vmatpush1.bf16.xpose.msra.mxu0 0
    %3603 = vmatprep.subr.bf16.mxu0 0
    %3604 = vmatpush1.bf16.xpose.msra.mxu0 0
    %3605 = vmatprep.subr.bf16.mxu0 0
    %3606 = vmatpush1.bf16.xpose.msra.mxu0 0
    %3607 = vmatprep.subr.bf16.mxu0 0
    %3608 = vmatpush1.bf16.xpose.msra.mxu0 0
    %3609 = vmatprep.subr.bf16.mxu0 0
    %3610 = vmatpush1.bf16.xpose.msra.mxu0 0
    %3611 = vmatprep.subr.bf16.mxu0 0
    %3612 = vmatpush1.bf16.xpose.msra.mxu0 0
    %3613 = vmatprep.subr.bf16.mxu0 0
    %3614 = vmatpush1.bf16.xpose.msra.mxu0 0
    %3615 = vmatprep.subr.bf16.mxu0 0
    %3616 = vmatpush1.bf16.xpose.msra.mxu0 0
    %3617 = vmatprep.subr.bf16.mxu0 0
    %3618 = vmatpush1.bf16.xpose.msra.mxu0 0
    %3619 = vmatprep.subr.bf16.mxu0 0
    %3620 = vmatpush1.bf16.xpose.msra.mxu0 0
    %3621 = vmatprep.mubr.bf16.mxu0 %v692
    %3622 = vmatmul.mubr.bf16.gmra.mrb[0].mxu0 %v690
    %v3623 = vpop.f32.mrb[0].mxu0
    %v3624 = vadd.f32 %v3584, %v3623
    %v3625 = vpop.f32.mrb[0].mxu0
    %v3626 = vpop.f32.mrb[0].mxu0
    %v3627 = vpop.f32.mrb[0].mxu0
    %3628 = vdwg.mxu0
    %3629 = vmatprep.subr.bf16.mxu0 %v2178
    %3630 = vmatpush1.bf16.xpose.msra.mxu0 %v2177
    %3631 = vmatprep.subr.bf16.mxu0 %v2274
    %3632 = vmatpush1.bf16.xpose.msra.mxu0 %v2273
    %3633 = vmatprep.subr.bf16.mxu0 %v2370
    %3634 = vmatpush1.bf16.xpose.msra.mxu0 %v2369
    %3635 = vmatprep.subr.bf16.mxu0 %v2466
    %3636 = vmatpush1.bf16.xpose.msra.mxu0 %v2465
    %3637 = vmatprep.subr.bf16.mxu0 0
    %3638 = vmatpush1.bf16.xpose.msra.mxu0 0
    %3639 = vmatprep.subr.bf16.mxu0 0
    %3640 = vmatpush1.bf16.xpose.msra.mxu0 0
    %3641 = vmatprep.subr.bf16.mxu0 0
    %3642 = vmatpush1.bf16.xpose.msra.mxu0 0
    %3643 = vmatprep.subr.bf16.mxu0 0
    %3644 = vmatpush1.bf16.xpose.msra.mxu0 0
    %3645 = vmatprep.subr.bf16.mxu0 0
    %3646 = vmatpush1.bf16.xpose.msra.mxu0 0
    %3647 = vmatprep.subr.bf16.mxu0 0
    %3648 = vmatpush1.bf16.xpose.msra.mxu0 0
    %3649 = vmatprep.subr.bf16.mxu0 0
    %3650 = vmatpush1.bf16.xpose.msra.mxu0 0
    %3651 = vmatprep.subr.bf16.mxu0 0
    %3652 = vmatpush1.bf16.xpose.msra.mxu0 0
    %3653 = vmatprep.subr.bf16.mxu0 0
    %3654 = vmatpush1.bf16.xpose.msra.mxu0 0
    %3655 = vmatprep.subr.bf16.mxu0 0
    %3656 = vmatpush1.bf16.xpose.msra.mxu0 0
    %3657 = vmatprep.subr.bf16.mxu0 0
    %3658 = vmatpush1.bf16.xpose.msra.mxu0 0
    %3659 = vmatprep.subr.bf16.mxu0 0
    %3660 = vmatpush1.bf16.xpose.msra.mxu0 0
    %3661 = vmatprep.mubr.bf16.mxu0 %v689
    %3662 = vmatmul.mubr.bf16.gmra.mrb[0].mxu0 %v675
    %v3663 = vpop.f32.mrb[0].mxu0
    %v3664 = vadd.f32 %v3624, %v3663
    %v3665 = vpop.f32.mrb[0].mxu0
    %v3666 = vpop.f32.mrb[0].mxu0
    %v3667 = vpop.f32.mrb[0].mxu0
    %3668 = vdwg.mxu0
    %3669 = vmatprep.subr.bf16.mxu0 %v2180
    %3670 = vmatpush1.bf16.xpose.msra.mxu0 %v2179
    %3671 = vmatprep.subr.bf16.mxu0 %v2276
    %3672 = vmatpush1.bf16.xpose.msra.mxu0 %v2275
    %3673 = vmatprep.subr.bf16.mxu0 %v2372
    %3674 = vmatpush1.bf16.xpose.msra.mxu0 %v2371
    %3675 = vmatprep.subr.bf16.mxu0 %v2468
    %3676 = vmatpush1.bf16.xpose.msra.mxu0 %v2467
    %3677 = vmatprep.subr.bf16.mxu0 0
    %3678 = vmatpush1.bf16.xpose.msra.mxu0 0
    %3679 = vmatprep.subr.bf16.mxu0 0
    %3680 = vmatpush1.bf16.xpose.msra.mxu0 0
    %3681 = vmatprep.subr.bf16.mxu0 0
    %3682 = vmatpush1.bf16.xpose.msra.mxu0 0
    %3683 = vmatprep.subr.bf16.mxu0 0
    %3684 = vmatpush1.bf16.xpose.msra.mxu0 0
    %3685 = vmatprep.subr.bf16.mxu0 0
    %3686 = vmatpush1.bf16.xpose.msra.mxu0 0
    %3687 = vmatprep.subr.bf16.mxu0 0
    %3688 = vmatpush1.bf16.xpose.msra.mxu0 0
    %3689 = vmatprep.subr.bf16.mxu0 0
    %3690 = vmatpush1.bf16.xpose.msra.mxu0 0
    %3691 = vmatprep.subr.bf16.mxu0 0
    %3692 = vmatpush1.bf16.xpose.msra.mxu0 0
    %3693 = vmatprep.subr.bf16.mxu0 0
    %3694 = vmatpush1.bf16.xpose.msra.mxu0 0
    %3695 = vmatprep.subr.bf16.mxu0 0
    %3696 = vmatpush1.bf16.xpose.msra.mxu0 0
    %3697 = vmatprep.subr.bf16.mxu0 0
    %3698 = vmatpush1.bf16.xpose.msra.mxu0 0
    %3699 = vmatprep.subr.bf16.mxu0 0
    %3700 = vmatpush1.bf16.xpose.msra.mxu0 0
    %3701 = vmatprep.mubr.bf16.mxu0 %v693
    %3702 = vmatmul.mubr.bf16.gmra.mrb[0].mxu0 %v691
    %v3703 = vpop.f32.mrb[0].mxu0
    %v3704 = vadd.f32 %v3664, %v3703
    %v3705 = vpop.f32.mrb[0].mxu0
    %v3706 = vpop.f32.mrb[0].mxu0
    %v3707 = vpop.f32.mrb[0].mxu0
    %3708 = vdwg.mxu0
    %3709 = vmatprep.subr.bf16.mxu0 %v2182
    %3710 = vmatpush1.bf16.xpose.msra.mxu0 %v2181
    %3711 = vmatprep.subr.bf16.mxu0 %v2278
    %3712 = vmatpush1.bf16.xpose.msra.mxu0 %v2277
    %3713 = vmatprep.subr.bf16.mxu0 %v2374
    %3714 = vmatpush1.bf16.xpose.msra.mxu0 %v2373
    %3715 = vmatprep.subr.bf16.mxu0 %v2470
    %3716 = vmatpush1.bf16.xpose.msra.mxu0 %v2469
    %3717 = vmatprep.subr.bf16.mxu0 0
    %3718 = vmatpush1.bf16.xpose.msra.mxu0 0
    %3719 = vmatprep.subr.bf16.mxu0 0
    %3720 = vmatpush1.bf16.xpose.msra.mxu0 0
    %3721 = vmatprep.subr.bf16.mxu0 0
    %3722 = vmatpush1.bf16.xpose.msra.mxu0 0
    %3723 = vmatprep.subr.bf16.mxu0 0
    %3724 = vmatpush1.bf16.xpose.msra.mxu0 0
    %3725 = vmatprep.subr.bf16.mxu0 0
    %3726 = vmatpush1.bf16.xpose.msra.mxu0 0
    %3727 = vmatprep.subr.bf16.mxu0 0
    %3728 = vmatpush1.bf16.xpose.msra.mxu0 0
    %3729 = vmatprep.subr.bf16.mxu0 0
    %3730 = vmatpush1.bf16.xpose.msra.mxu0 0
    %3731 = vmatprep.subr.bf16.mxu0 0
    %3732 = vmatpush1.bf16.xpose.msra.mxu0 0
    %3733 = vmatprep.subr.bf16.mxu0 0
    %3734 = vmatpush1.bf16.xpose.msra.mxu0 0
    %3735 = vmatprep.subr.bf16.mxu0 0
    %3736 = vmatpush1.bf16.xpose.msra.mxu0 0
    %3737 = vmatprep.subr.bf16.mxu0 0
    %3738 = vmatpush1.bf16.xpose.msra.mxu0 0
    %3739 = vmatprep.subr.bf16.mxu0 0
    %3740 = vmatpush1.bf16.xpose.msra.mxu0 0
    %3741 = vmatprep.mubr.bf16.mxu0 %v731
    %3742 = vmatmul.mubr.bf16.gmra.mrb[0].mxu0 %v717
    %v3743 = vpop.f32.mrb[0].mxu0
    %v3744 = vadd.f32 %v3704, %v3743
    %v3745 = vpop.f32.mrb[0].mxu0
    %v3746 = vpop.f32.mrb[0].mxu0
    %v3747 = vpop.f32.mrb[0].mxu0
    %3748 = vdwg.mxu0
    %3749 = vmatprep.subr.bf16.mxu0 %v2184
    %3750 = vmatpush1.bf16.xpose.msra.mxu0 %v2183
    %3751 = vmatprep.subr.bf16.mxu0 %v2280
    %3752 = vmatpush1.bf16.xpose.msra.mxu0 %v2279
    %3753 = vmatprep.subr.bf16.mxu0 %v2376
    %3754 = vmatpush1.bf16.xpose.msra.mxu0 %v2375
    %3755 = vmatprep.subr.bf16.mxu0 %v2472
    %3756 = vmatpush1.bf16.xpose.msra.mxu0 %v2471
    %3757 = vmatprep.subr.bf16.mxu0 0
    %3758 = vmatpush1.bf16.xpose.msra.mxu0 0
    %3759 = vmatprep.subr.bf16.mxu0 0
    %3760 = vmatpush1.bf16.xpose.msra.mxu0 0
    %3761 = vmatprep.subr.bf16.mxu0 0
    %3762 = vmatpush1.bf16.xpose.msra.mxu0 0
    %3763 = vmatprep.subr.bf16.mxu0 0
    %3764 = vmatpush1.bf16.xpose.msra.mxu0 0
    %3765 = vmatprep.subr.bf16.mxu0 0
    %3766 = vmatpush1.bf16.xpose.msra.mxu0 0
    %3767 = vmatprep.subr.bf16.mxu0 0
    %3768 = vmatpush1.bf16.xpose.msra.mxu0 0
    %3769 = vmatprep.subr.bf16.mxu0 0
    %3770 = vmatpush1.bf16.xpose.msra.mxu0 0
    %3771 = vmatprep.subr.bf16.mxu0 0
    %3772 = vmatpush1.bf16.xpose.msra.mxu0 0
    %3773 = vmatprep.subr.bf16.mxu0 0
    %3774 = vmatpush1.bf16.xpose.msra.mxu0 0
    %3775 = vmatprep.subr.bf16.mxu0 0
    %3776 = vmatpush1.bf16.xpose.msra.mxu0 0
    %3777 = vmatprep.subr.bf16.mxu0 0
    %3778 = vmatpush1.bf16.xpose.msra.mxu0 0
    %3779 = vmatprep.subr.bf16.mxu0 0
    %3780 = vmatpush1.bf16.xpose.msra.mxu0 0
    %3781 = vmatprep.mubr.bf16.mxu0 %v741
    %3782 = vmatmul.mubr.bf16.gmra.mrb[0].mxu0 %v739
    %v3783 = vpop.f32.mrb[0].mxu0
    %v3784 = vadd.f32 %v3744, %v3783
    %v3785 = vpop.f32.mrb[0].mxu0
    %v3786 = vpop.f32.mrb[0].mxu0
    %v3787 = vpop.f32.mrb[0].mxu0
    %3788 = vdwg.mxu0
    %3789 = vmatprep.subr.bf16.mxu0 %v2186
    %3790 = vmatpush1.bf16.xpose.msra.mxu0 %v2185
    %3791 = vmatprep.subr.bf16.mxu0 %v2282
    %3792 = vmatpush1.bf16.xpose.msra.mxu0 %v2281
    %3793 = vmatprep.subr.bf16.mxu0 %v2378
    %3794 = vmatpush1.bf16.xpose.msra.mxu0 %v2377
    %3795 = vmatprep.subr.bf16.mxu0 %v2474
    %3796 = vmatpush1.bf16.xpose.msra.mxu0 %v2473
    %3797 = vmatprep.subr.bf16.mxu0 0
    %3798 = vmatpush1.bf16.xpose.msra.mxu0 0
    %3799 = vmatprep.subr.bf16.mxu0 0
    %3800 = vmatpush1.bf16.xpose.msra.mxu0 0
    %3801 = vmatprep.subr.bf16.mxu0 0
    %3802 = vmatpush1.bf16.xpose.msra.mxu0 0
    %3803 = vmatprep.subr.bf16.mxu0 0
    %3804 = vmatpush1.bf16.xpose.msra.mxu0 0
    %3805 = vmatprep.subr.bf16.mxu0 0
    %3806 = vmatpush1.bf16.xpose.msra.mxu0 0
    %3807 = vmatprep.subr.bf16.mxu0 0
    %3808 = vmatpush1.bf16.xpose.msra.mxu0 0
    %3809 = vmatprep.subr.bf16.mxu0 0
    %3810 = vmatpush1.bf16.xpose.msra.mxu0 0
    %3811 = vmatprep.subr.bf16.mxu0 0
    %3812 = vmatpush1.bf16.xpose.msra.mxu0 0
    %3813 = vmatprep.subr.bf16.mxu0 0
    %3814 = vmatpush1.bf16.xpose.msra.mxu0 0
    %3815 = vmatprep.subr.bf16.mxu0 0
    %3816 = vmatpush1.bf16.xpose.msra.mxu0 0
    %3817 = vmatprep.subr.bf16.mxu0 0
    %3818 = vmatpush1.bf16.xpose.msra.mxu0 0
    %3819 = vmatprep.subr.bf16.mxu0 0
    %3820 = vmatpush1.bf16.xpose.msra.mxu0 0
    %3821 = vmatprep.mubr.bf16.mxu0 %v738
    %3822 = vmatmul.mubr.bf16.gmra.mrb[0].mxu0 %v724
    %v3823 = vpop.f32.mrb[0].mxu0
    %v3824 = vadd.f32 %v3784, %v3823
    %v3825 = vpop.f32.mrb[0].mxu0
    %v3826 = vpop.f32.mrb[0].mxu0
    %v3827 = vpop.f32.mrb[0].mxu0
    %3828 = vdwg.mxu0
    %3829 = vmatprep.subr.bf16.mxu0 %v2188
    %3830 = vmatpush1.bf16.xpose.msra.mxu0 %v2187
    %3831 = vmatprep.subr.bf16.mxu0 %v2284
    %3832 = vmatpush1.bf16.xpose.msra.mxu0 %v2283
    %3833 = vmatprep.subr.bf16.mxu0 %v2380
    %3834 = vmatpush1.bf16.xpose.msra.mxu0 %v2379
    %3835 = vmatprep.subr.bf16.mxu0 %v2476
    %3836 = vmatpush1.bf16.xpose.msra.mxu0 %v2475
    %3837 = vmatprep.subr.bf16.mxu0 0
    %3838 = vmatpush1.bf16.xpose.msra.mxu0 0
    %3839 = vmatprep.subr.bf16.mxu0 0
    %3840 = vmatpush1.bf16.xpose.msra.mxu0 0
    %3841 = vmatprep.subr.bf16.mxu0 0
    %3842 = vmatpush1.bf16.xpose.msra.mxu0 0
    %3843 = vmatprep.subr.bf16.mxu0 0
    %3844 = vmatpush1.bf16.xpose.msra.mxu0 0
    %3845 = vmatprep.subr.bf16.mxu0 0
    %3846 = vmatpush1.bf16.xpose.msra.mxu0 0
    %3847 = vmatprep.subr.bf16.mxu0 0
    %3848 = vmatpush1.bf16.xpose.msra.mxu0 0
    %3849 = vmatprep.subr.bf16.mxu0 0
    %3850 = vmatpush1.bf16.xpose.msra.mxu0 0
    %3851 = vmatprep.subr.bf16.mxu0 0
    %3852 = vmatpush1.bf16.xpose.msra.mxu0 0
    %3853 = vmatprep.subr.bf16.mxu0 0
    %3854 = vmatpush1.bf16.xpose.msra.mxu0 0
    %3855 = vmatprep.subr.bf16.mxu0 0
    %3856 = vmatpush1.bf16.xpose.msra.mxu0 0
    %3857 = vmatprep.subr.bf16.mxu0 0
    %3858 = vmatpush1.bf16.xpose.msra.mxu0 0
    %3859 = vmatprep.subr.bf16.mxu0 0
    %3860 = vmatpush1.bf16.xpose.msra.mxu0 0
    %3861 = vmatprep.mubr.bf16.mxu0 %v742
    %3862 = vmatmul.mubr.bf16.gmra.mrb[0].mxu0 %v740
    %v3863 = vpop.f32.mrb[0].mxu0
    %v3864 = vadd.f32 %v3824, %v3863
    %v3865 = vpop.f32.mrb[0].mxu0
    %v3866 = vpop.f32.mrb[0].mxu0
    %v3867 = vpop.f32.mrb[0].mxu0
    %3868 = vdwg.mxu0
    %3869 = vmatprep.subr.bf16.mxu0 %v2190
    %3870 = vmatpush1.bf16.xpose.msra.mxu0 %v2189
    %3871 = vmatprep.subr.bf16.mxu0 %v2286
    %3872 = vmatpush1.bf16.xpose.msra.mxu0 %v2285
    %3873 = vmatprep.subr.bf16.mxu0 %v2382
    %3874 = vmatpush1.bf16.xpose.msra.mxu0 %v2381
    %3875 = vmatprep.subr.bf16.mxu0 %v2478
    %3876 = vmatpush1.bf16.xpose.msra.mxu0 %v2477
    %3877 = vmatprep.subr.bf16.mxu0 0
    %3878 = vmatpush1.bf16.xpose.msra.mxu0 0
    %3879 = vmatprep.subr.bf16.mxu0 0
    %3880 = vmatpush1.bf16.xpose.msra.mxu0 0
    %3881 = vmatprep.subr.bf16.mxu0 0
    %3882 = vmatpush1.bf16.xpose.msra.mxu0 0
    %3883 = vmatprep.subr.bf16.mxu0 0
    %3884 = vmatpush1.bf16.xpose.msra.mxu0 0
    %3885 = vmatprep.subr.bf16.mxu0 0
    %3886 = vmatpush1.bf16.xpose.msra.mxu0 0
    %3887 = vmatprep.subr.bf16.mxu0 0
    %3888 = vmatpush1.bf16.xpose.msra.mxu0 0
    %3889 = vmatprep.subr.bf16.mxu0 0
    %3890 = vmatpush1.bf16.xpose.msra.mxu0 0
    %3891 = vmatprep.subr.bf16.mxu0 0
    %3892 = vmatpush1.bf16.xpose.msra.mxu0 0
    %3893 = vmatprep.subr.bf16.mxu0 0
    %3894 = vmatpush1.bf16.xpose.msra.mxu0 0
    %3895 = vmatprep.subr.bf16.mxu0 0
    %3896 = vmatpush1.bf16.xpose.msra.mxu0 0
    %3897 = vmatprep.subr.bf16.mxu0 0
    %3898 = vmatpush1.bf16.xpose.msra.mxu0 0
    %3899 = vmatprep.subr.bf16.mxu0 0
    %3900 = vmatpush1.bf16.xpose.msra.mxu0 0
    %3901 = vmatprep.mubr.bf16.mxu0 %v780
    %3902 = vmatmul.mubr.bf16.gmra.mrb[0].mxu0 %v766
    %v3903 = vpop.f32.mrb[0].mxu0
    %v3904 = vadd.f32 %v3864, %v3903
    %v3905 = vpop.f32.mrb[0].mxu0
    %v3906 = vpop.f32.mrb[0].mxu0
    %v3907 = vpop.f32.mrb[0].mxu0
    %3908 = vdwg.mxu0
    %3909 = vmatprep.subr.bf16.mxu0 %v2192
    %3910 = vmatpush1.bf16.xpose.msra.mxu0 %v2191
    %3911 = vmatprep.subr.bf16.mxu0 %v2288
    %3912 = vmatpush1.bf16.xpose.msra.mxu0 %v2287
    %3913 = vmatprep.subr.bf16.mxu0 %v2384
    %3914 = vmatpush1.bf16.xpose.msra.mxu0 %v2383
    %3915 = vmatprep.subr.bf16.mxu0 %v2480
    %3916 = vmatpush1.bf16.xpose.msra.mxu0 %v2479
    %3917 = vmatprep.subr.bf16.mxu0 0
    %3918 = vmatpush1.bf16.xpose.msra.mxu0 0
    %3919 = vmatprep.subr.bf16.mxu0 0
    %3920 = vmatpush1.bf16.xpose.msra.mxu0 0
    %3921 = vmatprep.subr.bf16.mxu0 0
    %3922 = vmatpush1.bf16.xpose.msra.mxu0 0
    %3923 = vmatprep.subr.bf16.mxu0 0
    %3924 = vmatpush1.bf16.xpose.msra.mxu0 0
    %3925 = vmatprep.subr.bf16.mxu0 0
    %3926 = vmatpush1.bf16.xpose.msra.mxu0 0
    %3927 = vmatprep.subr.bf16.mxu0 0
    %3928 = vmatpush1.bf16.xpose.msra.mxu0 0
    %3929 = vmatprep.subr.bf16.mxu0 0
    %3930 = vmatpush1.bf16.xpose.msra.mxu0 0
    %3931 = vmatprep.subr.bf16.mxu0 0
    %3932 = vmatpush1.bf16.xpose.msra.mxu0 0
    %3933 = vmatprep.subr.bf16.mxu0 0
    %3934 = vmatpush1.bf16.xpose.msra.mxu0 0
    %3935 = vmatprep.subr.bf16.mxu0 0
    %3936 = vmatpush1.bf16.xpose.msra.mxu0 0
    %3937 = vmatprep.subr.bf16.mxu0 0
    %3938 = vmatpush1.bf16.xpose.msra.mxu0 0
    %3939 = vmatprep.subr.bf16.mxu0 0
    %3940 = vmatpush1.bf16.xpose.msra.mxu0 0
    %3941 = vmatprep.mubr.bf16.mxu0 %v790
    %3942 = vmatmul.mubr.bf16.gmra.mrb[0].mxu0 %v788
    %v3943 = vpop.f32.mrb[0].mxu0
    %v3944 = vadd.f32 %v3904, %v3943
    %v3945 = vpop.f32.mrb[0].mxu0
    %v3946 = vpop.f32.mrb[0].mxu0
    %v3947 = vpop.f32.mrb[0].mxu0
    %3948 = vdwg.mxu0
    %3949 = vmatprep.subr.bf16.mxu0 %v2194
    %3950 = vmatpush1.bf16.xpose.msra.mxu0 %v2193
    %3951 = vmatprep.subr.bf16.mxu0 %v2290
    %3952 = vmatpush1.bf16.xpose.msra.mxu0 %v2289
    %3953 = vmatprep.subr.bf16.mxu0 %v2386
    %3954 = vmatpush1.bf16.xpose.msra.mxu0 %v2385
    %3955 = vmatprep.subr.bf16.mxu0 %v2482
    %3956 = vmatpush1.bf16.xpose.msra.mxu0 %v2481
    %3957 = vmatprep.subr.bf16.mxu0 0
    %3958 = vmatpush1.bf16.xpose.msra.mxu0 0
    %3959 = vmatprep.subr.bf16.mxu0 0
    %3960 = vmatpush1.bf16.xpose.msra.mxu0 0
    %3961 = vmatprep.subr.bf16.mxu0 0
    %3962 = vmatpush1.bf16.xpose.msra.mxu0 0
    %3963 = vmatprep.subr.bf16.mxu0 0
    %3964 = vmatpush1.bf16.xpose.msra.mxu0 0
    %3965 = vmatprep.subr.bf16.mxu0 0
    %3966 = vmatpush1.bf16.xpose.msra.mxu0 0
    %3967 = vmatprep.subr.bf16.mxu0 0
    %3968 = vmatpush1.bf16.xpose.msra.mxu0 0
    %3969 = vmatprep.subr.bf16.mxu0 0
    %3970 = vmatpush1.bf16.xpose.msra.mxu0 0
    %3971 = vmatprep.subr.bf16.mxu0 0
    %3972 = vmatpush1.bf16.xpose.msra.mxu0 0
    %3973 = vmatprep.subr.bf16.mxu0 0
    %3974 = vmatpush1.bf16.xpose.msra.mxu0 0
    %3975 = vmatprep.subr.bf16.mxu0 0
    %3976 = vmatpush1.bf16.xpose.msra.mxu0 0
    %3977 = vmatprep.subr.bf16.mxu0 0
    %3978 = vmatpush1.bf16.xpose.msra.mxu0 0
    %3979 = vmatprep.subr.bf16.mxu0 0
    %3980 = vmatpush1.bf16.xpose.msra.mxu0 0
    %3981 = vmatprep.mubr.bf16.mxu0 %v787
    %3982 = vmatmul.mubr.bf16.gmra.mrb[0].mxu0 %v773
    %v3983 = vpop.f32.mrb[0].mxu0
    %v3984 = vadd.f32 %v3944, %v3983
    %v3985 = vpop.f32.mrb[0].mxu0
    %v3986 = vpop.f32.mrb[0].mxu0
    %v3987 = vpop.f32.mrb[0].mxu0
    %3988 = vdwg.mxu0
    %3989 = vmatprep.subr.bf16.mxu0 %v2196
    %3990 = vmatpush1.bf16.xpose.msra.mxu0 %v2195
    %3991 = vmatprep.subr.bf16.mxu0 %v2292
    %3992 = vmatpush1.bf16.xpose.msra.mxu0 %v2291
    %3993 = vmatprep.subr.bf16.mxu0 %v2388
    %3994 = vmatpush1.bf16.xpose.msra.mxu0 %v2387
    %3995 = vmatprep.subr.bf16.mxu0 %v2484
    %3996 = vmatpush1.bf16.xpose.msra.mxu0 %v2483
    %3997 = vmatprep.subr.bf16.mxu0 0
    %3998 = vmatpush1.bf16.xpose.msra.mxu0 0
    %3999 = vmatprep.subr.bf16.mxu0 0
    %4000 = vmatpush1.bf16.xpose.msra.mxu0 0
    %4001 = vmatprep.subr.bf16.mxu0 0
    %4002 = vmatpush1.bf16.xpose.msra.mxu0 0
    %4003 = vmatprep.subr.bf16.mxu0 0
    %4004 = vmatpush1.bf16.xpose.msra.mxu0 0
    %4005 = vmatprep.subr.bf16.mxu0 0
    %4006 = vmatpush1.bf16.xpose.msra.mxu0 0
    %4007 = vmatprep.subr.bf16.mxu0 0
    %4008 = vmatpush1.bf16.xpose.msra.mxu0 0
    %4009 = vmatprep.subr.bf16.mxu0 0
    %4010 = vmatpush1.bf16.xpose.msra.mxu0 0
    %4011 = vmatprep.subr.bf16.mxu0 0
    %4012 = vmatpush1.bf16.xpose.msra.mxu0 0
    %4013 = vmatprep.subr.bf16.mxu0 0
    %4014 = vmatpush1.bf16.xpose.msra.mxu0 0
    %4015 = vmatprep.subr.bf16.mxu0 0
    %4016 = vmatpush1.bf16.xpose.msra.mxu0 0
    %4017 = vmatprep.subr.bf16.mxu0 0
    %4018 = vmatpush1.bf16.xpose.msra.mxu0 0
    %4019 = vmatprep.subr.bf16.mxu0 0
    %4020 = vmatpush1.bf16.xpose.msra.mxu0 0
    %4021 = vmatprep.mubr.bf16.mxu0 %v791
    %4022 = vmatmul.mubr.bf16.gmra.mrb[0].mxu0 %v789
    %v4023 = vpop.f32.mrb[0].mxu0
    %v4024 = vadd.f32 %v3984, %v4023
    %v4025 = vpop.f32.mrb[0].mxu0
    %v4026 = vpop.f32.mrb[0].mxu0
    %v4027 = vpop.f32.mrb[0].mxu0
    %4028 = vdwg.mxu0
    %4029 = vmatprep.subr.bf16.mxu0 %v2198
    %4030 = vmatpush1.bf16.xpose.msra.mxu0 %v2197
    %4031 = vmatprep.subr.bf16.mxu0 %v2294
    %4032 = vmatpush1.bf16.xpose.msra.mxu0 %v2293
    %4033 = vmatprep.subr.bf16.mxu0 %v2390
    %4034 = vmatpush1.bf16.xpose.msra.mxu0 %v2389
    %4035 = vmatprep.subr.bf16.mxu0 %v2486
    %4036 = vmatpush1.bf16.xpose.msra.mxu0 %v2485
    %4037 = vmatprep.subr.bf16.mxu0 0
    %4038 = vmatpush1.bf16.xpose.msra.mxu0 0
    %4039 = vmatprep.subr.bf16.mxu0 0
    %4040 = vmatpush1.bf16.xpose.msra.mxu0 0
    %4041 = vmatprep.subr.bf16.mxu0 0
    %4042 = vmatpush1.bf16.xpose.msra.mxu0 0
    %4043 = vmatprep.subr.bf16.mxu0 0
    %4044 = vmatpush1.bf16.xpose.msra.mxu0 0
    %4045 = vmatprep.subr.bf16.mxu0 0
    %4046 = vmatpush1.bf16.xpose.msra.mxu0 0
    %4047 = vmatprep.subr.bf16.mxu0 0
    %4048 = vmatpush1.bf16.xpose.msra.mxu0 0
    %4049 = vmatprep.subr.bf16.mxu0 0
    %4050 = vmatpush1.bf16.xpose.msra.mxu0 0
    %4051 = vmatprep.subr.bf16.mxu0 0
    %4052 = vmatpush1.bf16.xpose.msra.mxu0 0
    %4053 = vmatprep.subr.bf16.mxu0 0
    %4054 = vmatpush1.bf16.xpose.msra.mxu0 0
    %4055 = vmatprep.subr.bf16.mxu0 0
    %4056 = vmatpush1.bf16.xpose.msra.mxu0 0
    %4057 = vmatprep.subr.bf16.mxu0 0
    %4058 = vmatpush1.bf16.xpose.msra.mxu0 0
    %4059 = vmatprep.subr.bf16.mxu0 0
    %4060 = vmatpush1.bf16.xpose.msra.mxu0 0
    %4061 = vmatprep.mubr.bf16.mxu0 %v829
    %4062 = vmatmul.mubr.bf16.gmra.mrb[0].mxu0 %v815
    %v4063 = vpop.f32.mrb[0].mxu0
    %v4064 = vadd.f32 %v4024, %v4063
    %v4065 = vpop.f32.mrb[0].mxu0
    %v4066 = vpop.f32.mrb[0].mxu0
    %v4067 = vpop.f32.mrb[0].mxu0
    %4068 = vdwg.mxu0
    %4069 = vmatprep.subr.bf16.mxu0 %v2200
    %4070 = vmatpush1.bf16.xpose.msra.mxu0 %v2199
    %4071 = vmatprep.subr.bf16.mxu0 %v2296
    %4072 = vmatpush1.bf16.xpose.msra.mxu0 %v2295
    %4073 = vmatprep.subr.bf16.mxu0 %v2392
    %4074 = vmatpush1.bf16.xpose.msra.mxu0 %v2391
    %4075 = vmatprep.subr.bf16.mxu0 %v2488
    %4076 = vmatpush1.bf16.xpose.msra.mxu0 %v2487
    %4077 = vmatprep.subr.bf16.mxu0 0
    %4078 = vmatpush1.bf16.xpose.msra.mxu0 0
    %4079 = vmatprep.subr.bf16.mxu0 0
    %4080 = vmatpush1.bf16.xpose.msra.mxu0 0
    %4081 = vmatprep.subr.bf16.mxu0 0
    %4082 = vmatpush1.bf16.xpose.msra.mxu0 0
    %4083 = vmatprep.subr.bf16.mxu0 0
    %4084 = vmatpush1.bf16.xpose.msra.mxu0 0
    %4085 = vmatprep.subr.bf16.mxu0 0
    %4086 = vmatpush1.bf16.xpose.msra.mxu0 0
    %4087 = vmatprep.subr.bf16.mxu0 0
    %4088 = vmatpush1.bf16.xpose.msra.mxu0 0
    %4089 = vmatprep.subr.bf16.mxu0 0
    %4090 = vmatpush1.bf16.xpose.msra.mxu0 0
    %4091 = vmatprep.subr.bf16.mxu0 0
    %4092 = vmatpush1.bf16.xpose.msra.mxu0 0
    %4093 = vmatprep.subr.bf16.mxu0 0
    %4094 = vmatpush1.bf16.xpose.msra.mxu0 0
    %4095 = vmatprep.subr.bf16.mxu0 0
    %4096 = vmatpush1.bf16.xpose.msra.mxu0 0
    %4097 = vmatprep.subr.bf16.mxu0 0
    %4098 = vmatpush1.bf16.xpose.msra.mxu0 0
    %4099 = vmatprep.subr.bf16.mxu0 0
    %4100 = vmatpush1.bf16.xpose.msra.mxu0 0
    %4101 = vmatprep.mubr.bf16.mxu0 %v839
    %4102 = vmatmul.mubr.bf16.gmra.mrb[0].mxu0 %v837
    %v4103 = vpop.f32.mrb[0].mxu0
    %v4104 = vadd.f32 %v4064, %v4103
    %v4105 = vpop.f32.mrb[0].mxu0
    %v4106 = vpop.f32.mrb[0].mxu0
    %v4107 = vpop.f32.mrb[0].mxu0
    %4108 = vdwg.mxu0
    %4109 = vmatprep.subr.bf16.mxu0 %v2202
    %4110 = vmatpush1.bf16.xpose.msra.mxu0 %v2201
    %4111 = vmatprep.subr.bf16.mxu0 %v2298
    %4112 = vmatpush1.bf16.xpose.msra.mxu0 %v2297
    %4113 = vmatprep.subr.bf16.mxu0 %v2394
    %4114 = vmatpush1.bf16.xpose.msra.mxu0 %v2393
    %4115 = vmatprep.subr.bf16.mxu0 %v2490
    %4116 = vmatpush1.bf16.xpose.msra.mxu0 %v2489
    %4117 = vmatprep.subr.bf16.mxu0 0
    %4118 = vmatpush1.bf16.xpose.msra.mxu0 0
    %4119 = vmatprep.subr.bf16.mxu0 0
    %4120 = vmatpush1.bf16.xpose.msra.mxu0 0
    %4121 = vmatprep.subr.bf16.mxu0 0
    %4122 = vmatpush1.bf16.xpose.msra.mxu0 0
    %4123 = vmatprep.subr.bf16.mxu0 0
    %4124 = vmatpush1.bf16.xpose.msra.mxu0 0
    %4125 = vmatprep.subr.bf16.mxu0 0
    %4126 = vmatpush1.bf16.xpose.msra.mxu0 0
    %4127 = vmatprep.subr.bf16.mxu0 0
    %4128 = vmatpush1.bf16.xpose.msra.mxu0 0
    %4129 = vmatprep.subr.bf16.mxu0 0
    %4130 = vmatpush1.bf16.xpose.msra.mxu0 0
    %4131 = vmatprep.subr.bf16.mxu0 0
    %4132 = vmatpush1.bf16.xpose.msra.mxu0 0
    %4133 = vmatprep.subr.bf16.mxu0 0
    %4134 = vmatpush1.bf16.xpose.msra.mxu0 0
    %4135 = vmatprep.subr.bf16.mxu0 0
    %4136 = vmatpush1.bf16.xpose.msra.mxu0 0
    %4137 = vmatprep.subr.bf16.mxu0 0
    %4138 = vmatpush1.bf16.xpose.msra.mxu0 0
    %4139 = vmatprep.subr.bf16.mxu0 0
    %4140 = vmatpush1.bf16.xpose.msra.mxu0 0
    %4141 = vmatprep.mubr.bf16.mxu0 %v836
    %4142 = vmatmul.mubr.bf16.gmra.mrb[0].mxu0 %v822
    %v4143 = vpop.f32.mrb[0].mxu0
    %v4144 = vadd.f32 %v4104, %v4143
    %v4145 = vpop.f32.mrb[0].mxu0
    %v4146 = vpop.f32.mrb[0].mxu0
    %v4147 = vpop.f32.mrb[0].mxu0
    %4148 = vdwg.mxu0
    %4149 = vmatprep.subr.bf16.mxu0 %v2204
    %4150 = vmatpush1.bf16.xpose.msra.mxu0 %v2203
    %4151 = vmatprep.subr.bf16.mxu0 %v2300
    %4152 = vmatpush1.bf16.xpose.msra.mxu0 %v2299
    %4153 = vmatprep.subr.bf16.mxu0 %v2396
    %4154 = vmatpush1.bf16.xpose.msra.mxu0 %v2395
    %4155 = vmatprep.subr.bf16.mxu0 %v2492
    %4156 = vmatpush1.bf16.xpose.msra.mxu0 %v2491
    %4157 = vmatprep.subr.bf16.mxu0 0
    %4158 = vmatpush1.bf16.xpose.msra.mxu0 0
    %4159 = vmatprep.subr.bf16.mxu0 0
    %4160 = vmatpush1.bf16.xpose.msra.mxu0 0
    %4161 = vmatprep.subr.bf16.mxu0 0
    %4162 = vmatpush1.bf16.xpose.msra.mxu0 0
    %4163 = vmatprep.subr.bf16.mxu0 0
    %4164 = vmatpush1.bf16.xpose.msra.mxu0 0
    %4165 = vmatprep.subr.bf16.mxu0 0
    %4166 = vmatpush1.bf16.xpose.msra.mxu0 0
    %4167 = vmatprep.subr.bf16.mxu0 0
    %4168 = vmatpush1.bf16.xpose.msra.mxu0 0
    %4169 = vmatprep.subr.bf16.mxu0 0
    %4170 = vmatpush1.bf16.xpose.msra.mxu0 0
    %4171 = vmatprep.subr.bf16.mxu0 0
    %4172 = vmatpush1.bf16.xpose.msra.mxu0 0
    %4173 = vmatprep.subr.bf16.mxu0 0
    %4174 = vmatpush1.bf16.xpose.msra.mxu0 0
    %4175 = vmatprep.subr.bf16.mxu0 0
    %4176 = vmatpush1.bf16.xpose.msra.mxu0 0
    %4177 = vmatprep.subr.bf16.mxu0 0
    %4178 = vmatpush1.bf16.xpose.msra.mxu0 0
    %4179 = vmatprep.subr.bf16.mxu0 0
    %4180 = vmatpush1.bf16.xpose.msra.mxu0 0
    %4181 = vmatprep.mubr.bf16.mxu0 %v840
    %4182 = vmatmul.mubr.bf16.gmra.mrb[0].mxu0 %v838
    %v4183 = vpop.f32.mrb[0].mxu0
    %v4184 = vadd.f32 %v4144, %v4183
    %v4185 = vpop.f32.mrb[0].mxu0
    %v4186 = vpop.f32.mrb[0].mxu0
    %v4187 = vpop.f32.mrb[0].mxu0
    %4188 = vdwg.mxu0
    %4189 = vmatprep.subr.bf16.mxu0 %v2206
    %4190 = vmatpush1.bf16.xpose.msra.mxu0 %v2205
    %4191 = vmatprep.subr.bf16.mxu0 %v2302
    %4192 = vmatpush1.bf16.xpose.msra.mxu0 %v2301
    %4193 = vmatprep.subr.bf16.mxu0 %v2398
    %4194 = vmatpush1.bf16.xpose.msra.mxu0 %v2397
    %4195 = vmatprep.subr.bf16.mxu0 %v2494
    %4196 = vmatpush1.bf16.xpose.msra.mxu0 %v2493
    %4197 = vmatprep.subr.bf16.mxu0 0
    %4198 = vmatpush1.bf16.xpose.msra.mxu0 0
    %4199 = vmatprep.subr.bf16.mxu0 0
    %4200 = vmatpush1.bf16.xpose.msra.mxu0 0
    %4201 = vmatprep.subr.bf16.mxu0 0
    %4202 = vmatpush1.bf16.xpose.msra.mxu0 0
    %4203 = vmatprep.subr.bf16.mxu0 0
    %4204 = vmatpush1.bf16.xpose.msra.mxu0 0
    %4205 = vmatprep.subr.bf16.mxu0 0
    %4206 = vmatpush1.bf16.xpose.msra.mxu0 0
    %4207 = vmatprep.subr.bf16.mxu0 0
    %4208 = vmatpush1.bf16.xpose.msra.mxu0 0
    %4209 = vmatprep.subr.bf16.mxu0 0
    %4210 = vmatpush1.bf16.xpose.msra.mxu0 0
    %4211 = vmatprep.subr.bf16.mxu0 0
    %4212 = vmatpush1.bf16.xpose.msra.mxu0 0
    %4213 = vmatprep.subr.bf16.mxu0 0
    %4214 = vmatpush1.bf16.xpose.msra.mxu0 0
    %4215 = vmatprep.subr.bf16.mxu0 0
    %4216 = vmatpush1.bf16.xpose.msra.mxu0 0
    %4217 = vmatprep.subr.bf16.mxu0 0
    %4218 = vmatpush1.bf16.xpose.msra.mxu0 0
    %4219 = vmatprep.subr.bf16.mxu0 0
    %4220 = vmatpush1.bf16.xpose.msra.mxu0 0
    %4221 = vmatprep.mubr.bf16.mxu0 %v878
    %4222 = vmatmul.mubr.bf16.gmra.mrb[0].mxu0 %v864
    %v4223 = vpop.f32.mrb[0].mxu0
    %v4224 = vadd.f32 %v4184, %v4223
    %v4225 = vpop.f32.mrb[0].mxu0
    %v4226 = vpop.f32.mrb[0].mxu0
    %v4227 = vpop.f32.mrb[0].mxu0
    %4228 = vdwg.mxu0
    %4229 = vmatprep.subr.bf16.mxu0 %v2208
    %4230 = vmatpush1.bf16.xpose.msra.mxu0 %v2207
    %4231 = vmatprep.subr.bf16.mxu0 %v2304
    %4232 = vmatpush1.bf16.xpose.msra.mxu0 %v2303
    %4233 = vmatprep.subr.bf16.mxu0 %v2400
    %4234 = vmatpush1.bf16.xpose.msra.mxu0 %v2399
    %4235 = vmatprep.subr.bf16.mxu0 %v2496
    %4236 = vmatpush1.bf16.xpose.msra.mxu0 %v2495
    %4237 = vmatprep.subr.bf16.mxu0 0
    %4238 = vmatpush1.bf16.xpose.msra.mxu0 0
    %4239 = vmatprep.subr.bf16.mxu0 0
    %4240 = vmatpush1.bf16.xpose.msra.mxu0 0
    %4241 = vmatprep.subr.bf16.mxu0 0
    %4242 = vmatpush1.bf16.xpose.msra.mxu0 0
    %4243 = vmatprep.subr.bf16.mxu0 0
    %4244 = vmatpush1.bf16.xpose.msra.mxu0 0
    %4245 = vmatprep.subr.bf16.mxu0 0
    %4246 = vmatpush1.bf16.xpose.msra.mxu0 0
    %4247 = vmatprep.subr.bf16.mxu0 0
    %4248 = vmatpush1.bf16.xpose.msra.mxu0 0
    %4249 = vmatprep.subr.bf16.mxu0 0
    %4250 = vmatpush1.bf16.xpose.msra.mxu0 0
    %4251 = vmatprep.subr.bf16.mxu0 0
    %4252 = vmatpush1.bf16.xpose.msra.mxu0 0
    %4253 = vmatprep.subr.bf16.mxu0 0
    %4254 = vmatpush1.bf16.xpose.msra.mxu0 0
    %4255 = vmatprep.subr.bf16.mxu0 0
    %4256 = vmatpush1.bf16.xpose.msra.mxu0 0
    %4257 = vmatprep.subr.bf16.mxu0 0
    %4258 = vmatpush1.bf16.xpose.msra.mxu0 0
    %4259 = vmatprep.subr.bf16.mxu0 0
    %4260 = vmatpush1.bf16.xpose.msra.mxu0 0
    %4261 = vmatprep.mubr.bf16.mxu0 %v888
    %4262 = vmatmul.mubr.bf16.gmra.mrb[0].mxu0 %v886
    %v4263 = vpop.f32.mrb[0].mxu0
    %v4264 = vadd.f32 %v4224, %v4263
    %v4265 = vpop.f32.mrb[0].mxu0
    %v4266 = vpop.f32.mrb[0].mxu0
    %v4267 = vpop.f32.mrb[0].mxu0
    %4268 = vdwg.mxu0
    %4269 = vmatprep.subr.bf16.mxu0 %v2210
    %4270 = vmatpush1.bf16.xpose.msra.mxu0 %v2209
    %4271 = vmatprep.subr.bf16.mxu0 %v2306
    %4272 = vmatpush1.bf16.xpose.msra.mxu0 %v2305
    %4273 = vmatprep.subr.bf16.mxu0 %v2402
    %4274 = vmatpush1.bf16.xpose.msra.mxu0 %v2401
    %4275 = vmatprep.subr.bf16.mxu0 %v2498
    %4276 = vmatpush1.bf16.xpose.msra.mxu0 %v2497
    %4277 = vmatprep.subr.bf16.mxu0 0
    %4278 = vmatpush1.bf16.xpose.msra.mxu0 0
    %4279 = vmatprep.subr.bf16.mxu0 0
    %4280 = vmatpush1.bf16.xpose.msra.mxu0 0
    %4281 = vmatprep.subr.bf16.mxu0 0
    %4282 = vmatpush1.bf16.xpose.msra.mxu0 0
    %4283 = vmatprep.subr.bf16.mxu0 0
    %4284 = vmatpush1.bf16.xpose.msra.mxu0 0
    %4285 = vmatprep.subr.bf16.mxu0 0
    %4286 = vmatpush1.bf16.xpose.msra.mxu0 0
    %4287 = vmatprep.subr.bf16.mxu0 0
    %4288 = vmatpush1.bf16.xpose.msra.mxu0 0
    %4289 = vmatprep.subr.bf16.mxu0 0
    %4290 = vmatpush1.bf16.xpose.msra.mxu0 0
    %4291 = vmatprep.subr.bf16.mxu0 0
    %4292 = vmatpush1.bf16.xpose.msra.mxu0 0
    %4293 = vmatprep.subr.bf16.mxu0 0
    %4294 = vmatpush1.bf16.xpose.msra.mxu0 0
    %4295 = vmatprep.subr.bf16.mxu0 0
    %4296 = vmatpush1.bf16.xpose.msra.mxu0 0
    %4297 = vmatprep.subr.bf16.mxu0 0
    %4298 = vmatpush1.bf16.xpose.msra.mxu0 0
    %4299 = vmatprep.subr.bf16.mxu0 0
    %4300 = vmatpush1.bf16.xpose.msra.mxu0 0
    %4301 = vmatprep.mubr.bf16.mxu0 %v885
    %4302 = vmatmul.mubr.bf16.gmra.mrb[0].mxu0 %v871
    %v4303 = vpop.f32.mrb[0].mxu0
    %v4304 = vadd.f32 %v4264, %v4303
    %v4305 = vpop.f32.mrb[0].mxu0
    %v4306 = vpop.f32.mrb[0].mxu0
    %v4307 = vpop.f32.mrb[0].mxu0
    %4308 = vdwg.mxu0
    %4309 = vmatprep.subr.bf16.mxu0 %v2212
    %4310 = vmatpush1.bf16.xpose.msra.mxu0 %v2211
    %4311 = vmatprep.subr.bf16.mxu0 %v2308
    %4312 = vmatpush1.bf16.xpose.msra.mxu0 %v2307
    %4313 = vmatprep.subr.bf16.mxu0 %v2404
    %4314 = vmatpush1.bf16.xpose.msra.mxu0 %v2403
    %4315 = vmatprep.subr.bf16.mxu0 %v2500
    %4316 = vmatpush1.bf16.xpose.msra.mxu0 %v2499
    %4317 = vmatprep.subr.bf16.mxu0 0
    %4318 = vmatpush1.bf16.xpose.msra.mxu0 0
    %4319 = vmatprep.subr.bf16.mxu0 0
    %4320 = vmatpush1.bf16.xpose.msra.mxu0 0
    %4321 = vmatprep.subr.bf16.mxu0 0
    %4322 = vmatpush1.bf16.xpose.msra.mxu0 0
    %4323 = vmatprep.subr.bf16.mxu0 0
    %4324 = vmatpush1.bf16.xpose.msra.mxu0 0
    %4325 = vmatprep.subr.bf16.mxu0 0
    %4326 = vmatpush1.bf16.xpose.msra.mxu0 0
    %4327 = vmatprep.subr.bf16.mxu0 0
    %4328 = vmatpush1.bf16.xpose.msra.mxu0 0
    %4329 = vmatprep.subr.bf16.mxu0 0
    %4330 = vmatpush1.bf16.xpose.msra.mxu0 0
    %4331 = vmatprep.subr.bf16.mxu0 0
    %4332 = vmatpush1.bf16.xpose.msra.mxu0 0
    %4333 = vmatprep.subr.bf16.mxu0 0
    %4334 = vmatpush1.bf16.xpose.msra.mxu0 0
    %4335 = vmatprep.subr.bf16.mxu0 0
    %4336 = vmatpush1.bf16.xpose.msra.mxu0 0
    %4337 = vmatprep.subr.bf16.mxu0 0
    %4338 = vmatpush1.bf16.xpose.msra.mxu0 0
    %4339 = vmatprep.subr.bf16.mxu0 0
    %4340 = vmatpush1.bf16.xpose.msra.mxu0 0
    %4341 = vmatprep.mubr.bf16.mxu0 %v889
    %4342 = vmatmul.mubr.bf16.gmra.mrb[0].mxu0 %v887
    %v4343 = vpop.f32.mrb[0].mxu0
    %v4344 = vadd.f32 %v4304, %v4343
    %v4345 = vpop.f32.mrb[0].mxu0
    %v4346 = vpop.f32.mrb[0].mxu0
    %v4347 = vpop.f32.mrb[0].mxu0
    %4348 = vdwg.mxu0
    %4349 = vmatprep.subr.bf16.mxu0 %v2214
    %4350 = vmatpush1.bf16.xpose.msra.mxu0 %v2213
    %4351 = vmatprep.subr.bf16.mxu0 %v2310
    %4352 = vmatpush1.bf16.xpose.msra.mxu0 %v2309
    %4353 = vmatprep.subr.bf16.mxu0 %v2406
    %4354 = vmatpush1.bf16.xpose.msra.mxu0 %v2405
    %4355 = vmatprep.subr.bf16.mxu0 %v2502
    %4356 = vmatpush1.bf16.xpose.msra.mxu0 %v2501
    %4357 = vmatprep.subr.bf16.mxu0 0
    %4358 = vmatpush1.bf16.xpose.msra.mxu0 0
    %4359 = vmatprep.subr.bf16.mxu0 0
    %4360 = vmatpush1.bf16.xpose.msra.mxu0 0
    %4361 = vmatprep.subr.bf16.mxu0 0
    %4362 = vmatpush1.bf16.xpose.msra.mxu0 0
    %4363 = vmatprep.subr.bf16.mxu0 0
    %4364 = vmatpush1.bf16.xpose.msra.mxu0 0
    %4365 = vmatprep.subr.bf16.mxu0 0
    %4366 = vmatpush1.bf16.xpose.msra.mxu0 0
    %4367 = vmatprep.subr.bf16.mxu0 0
    %4368 = vmatpush1.bf16.xpose.msra.mxu0 0
    %4369 = vmatprep.subr.bf16.mxu0 0
    %4370 = vmatpush1.bf16.xpose.msra.mxu0 0
    %4371 = vmatprep.subr.bf16.mxu0 0
    %4372 = vmatpush1.bf16.xpose.msra.mxu0 0
    %4373 = vmatprep.subr.bf16.mxu0 0
    %4374 = vmatpush1.bf16.xpose.msra.mxu0 0
    %4375 = vmatprep.subr.bf16.mxu0 0
    %4376 = vmatpush1.bf16.xpose.msra.mxu0 0
    %4377 = vmatprep.subr.bf16.mxu0 0
    %4378 = vmatpush1.bf16.xpose.msra.mxu0 0
    %4379 = vmatprep.subr.bf16.mxu0 0
    %4380 = vmatpush1.bf16.xpose.msra.mxu0 0
    %4381 = vmatprep.mubr.bf16.mxu0 %v927
    %4382 = vmatmul.mubr.bf16.gmra.mrb[0].mxu0 %v913
    %v4383 = vpop.f32.mrb[0].mxu0
    %v4384 = vadd.f32 %v4344, %v4383
    %v4385 = vpop.f32.mrb[0].mxu0
    %v4386 = vpop.f32.mrb[0].mxu0
    %v4387 = vpop.f32.mrb[0].mxu0
    %4388 = vdwg.mxu0
    %4389 = vmatprep.subr.bf16.mxu0 %v2216
    %4390 = vmatpush1.bf16.xpose.msra.mxu0 %v2215
    %4391 = vmatprep.subr.bf16.mxu0 %v2312
    %4392 = vmatpush1.bf16.xpose.msra.mxu0 %v2311
    %4393 = vmatprep.subr.bf16.mxu0 %v2408
    %4394 = vmatpush1.bf16.xpose.msra.mxu0 %v2407
    %4395 = vmatprep.subr.bf16.mxu0 %v2504
    %4396 = vmatpush1.bf16.xpose.msra.mxu0 %v2503
    %4397 = vmatprep.subr.bf16.mxu0 0
    %4398 = vmatpush1.bf16.xpose.msra.mxu0 0
    %4399 = vmatprep.subr.bf16.mxu0 0
    %4400 = vmatpush1.bf16.xpose.msra.mxu0 0
    %4401 = vmatprep.subr.bf16.mxu0 0
    %4402 = vmatpush1.bf16.xpose.msra.mxu0 0
    %4403 = vmatprep.subr.bf16.mxu0 0
    %4404 = vmatpush1.bf16.xpose.msra.mxu0 0
    %4405 = vmatprep.subr.bf16.mxu0 0
    %4406 = vmatpush1.bf16.xpose.msra.mxu0 0
    %4407 = vmatprep.subr.bf16.mxu0 0
    %4408 = vmatpush1.bf16.xpose.msra.mxu0 0
    %4409 = vmatprep.subr.bf16.mxu0 0
    %4410 = vmatpush1.bf16.xpose.msra.mxu0 0
    %4411 = vmatprep.subr.bf16.mxu0 0
    %4412 = vmatpush1.bf16.xpose.msra.mxu0 0
    %4413 = vmatprep.subr.bf16.mxu0 0
    %4414 = vmatpush1.bf16.xpose.msra.mxu0 0
    %4415 = vmatprep.subr.bf16.mxu0 0
    %4416 = vmatpush1.bf16.xpose.msra.mxu0 0
    %4417 = vmatprep.subr.bf16.mxu0 0
    %4418 = vmatpush1.bf16.xpose.msra.mxu0 0
    %4419 = vmatprep.subr.bf16.mxu0 0
    %4420 = vmatpush1.bf16.xpose.msra.mxu0 0
    %4421 = vmatprep.mubr.bf16.mxu0 %v937
    %4422 = vmatmul.mubr.bf16.gmra.mrb[0].mxu0 %v935
    %v4423 = vpop.f32.mrb[0].mxu0
    %v4424 = vadd.f32 %v4384, %v4423
    %v4425 = vpop.f32.mrb[0].mxu0
    %v4426 = vpop.f32.mrb[0].mxu0
    %v4427 = vpop.f32.mrb[0].mxu0
    %4428 = vdwg.mxu0
    %4429 = vmatprep.subr.bf16.mxu0 %v2218
    %4430 = vmatpush1.bf16.xpose.msra.mxu0 %v2217
    %4431 = vmatprep.subr.bf16.mxu0 %v2314
    %4432 = vmatpush1.bf16.xpose.msra.mxu0 %v2313
    %4433 = vmatprep.subr.bf16.mxu0 %v2410
    %4434 = vmatpush1.bf16.xpose.msra.mxu0 %v2409
    %4435 = vmatprep.subr.bf16.mxu0 %v2506
    %4436 = vmatpush1.bf16.xpose.msra.mxu0 %v2505
    %4437 = vmatprep.subr.bf16.mxu0 0
    %4438 = vmatpush1.bf16.xpose.msra.mxu0 0
    %4439 = vmatprep.subr.bf16.mxu0 0
    %4440 = vmatpush1.bf16.xpose.msra.mxu0 0
    %4441 = vmatprep.subr.bf16.mxu0 0
    %4442 = vmatpush1.bf16.xpose.msra.mxu0 0
    %4443 = vmatprep.subr.bf16.mxu0 0
    %4444 = vmatpush1.bf16.xpose.msra.mxu0 0
    %4445 = vmatprep.subr.bf16.mxu0 0
    %4446 = vmatpush1.bf16.xpose.msra.mxu0 0
    %4447 = vmatprep.subr.bf16.mxu0 0
    %4448 = vmatpush1.bf16.xpose.msra.mxu0 0
    %4449 = vmatprep.subr.bf16.mxu0 0
    %4450 = vmatpush1.bf16.xpose.msra.mxu0 0
    %4451 = vmatprep.subr.bf16.mxu0 0
    %4452 = vmatpush1.bf16.xpose.msra.mxu0 0
    %4453 = vmatprep.subr.bf16.mxu0 0
    %4454 = vmatpush1.bf16.xpose.msra.mxu0 0
    %4455 = vmatprep.subr.bf16.mxu0 0
    %4456 = vmatpush1.bf16.xpose.msra.mxu0 0
    %4457 = vmatprep.subr.bf16.mxu0 0
    %4458 = vmatpush1.bf16.xpose.msra.mxu0 0
    %4459 = vmatprep.subr.bf16.mxu0 0
    %4460 = vmatpush1.bf16.xpose.msra.mxu0 0
    %4461 = vmatprep.mubr.bf16.mxu0 %v934
    %4462 = vmatmul.mubr.bf16.gmra.mrb[0].mxu0 %v920
    %v4463 = vpop.f32.mrb[0].mxu0
    %v4464 = vadd.f32 %v4424, %v4463
    %v4465 = vpop.f32.mrb[0].mxu0
    %v4466 = vpop.f32.mrb[0].mxu0
    %v4467 = vpop.f32.mrb[0].mxu0
    %4468 = vdwg.mxu0
    %4469 = vmatprep.subr.bf16.mxu0 %v2220
    %4470 = vmatpush1.bf16.xpose.msra.mxu0 %v2219
    %4471 = vmatprep.subr.bf16.mxu0 %v2316
    %4472 = vmatpush1.bf16.xpose.msra.mxu0 %v2315
    %4473 = vmatprep.subr.bf16.mxu0 %v2412
    %4474 = vmatpush1.bf16.xpose.msra.mxu0 %v2411
    %4475 = vmatprep.subr.bf16.mxu0 %v2508
    %4476 = vmatpush1.bf16.xpose.msra.mxu0 %v2507
    %4477 = vmatprep.subr.bf16.mxu0 0
    %4478 = vmatpush1.bf16.xpose.msra.mxu0 0
    %4479 = vmatprep.subr.bf16.mxu0 0
    %4480 = vmatpush1.bf16.xpose.msra.mxu0 0
    %4481 = vmatprep.subr.bf16.mxu0 0
    %4482 = vmatpush1.bf16.xpose.msra.mxu0 0
    %4483 = vmatprep.subr.bf16.mxu0 0
    %4484 = vmatpush1.bf16.xpose.msra.mxu0 0
    %4485 = vmatprep.subr.bf16.mxu0 0
    %4486 = vmatpush1.bf16.xpose.msra.mxu0 0
    %4487 = vmatprep.subr.bf16.mxu0 0
    %4488 = vmatpush1.bf16.xpose.msra.mxu0 0
    %4489 = vmatprep.subr.bf16.mxu0 0
    %4490 = vmatpush1.bf16.xpose.msra.mxu0 0
    %4491 = vmatprep.subr.bf16.mxu0 0
    %4492 = vmatpush1.bf16.xpose.msra.mxu0 0
    %4493 = vmatprep.subr.bf16.mxu0 0
    %4494 = vmatpush1.bf16.xpose.msra.mxu0 0
    %4495 = vmatprep.subr.bf16.mxu0 0
    %4496 = vmatpush1.bf16.xpose.msra.mxu0 0
    %4497 = vmatprep.subr.bf16.mxu0 0
    %4498 = vmatpush1.bf16.xpose.msra.mxu0 0
    %4499 = vmatprep.subr.bf16.mxu0 0
    %4500 = vmatpush1.bf16.xpose.msra.mxu0 0
    %4501 = vmatprep.mubr.bf16.mxu0 %v938
    %4502 = vmatmul.mubr.bf16.gmra.mrb[0].mxu0 %v936
    %v4503 = vpop.f32.mrb[0].mxu0
    %v4504 = vadd.f32 %v4464, %v4503
    %v4505 = vpop.f32.mrb[0].mxu0
    %v4506 = vpop.f32.mrb[0].mxu0
    %v4507 = vpop.f32.mrb[0].mxu0
    %4508 = vdwg.mxu0
    %4509 = vmatprep.subr.bf16.mxu0 %v2222
    %4510 = vmatpush1.bf16.xpose.msra.mxu0 %v2221
    %4511 = vmatprep.subr.bf16.mxu0 %v2318
    %4512 = vmatpush1.bf16.xpose.msra.mxu0 %v2317
    %4513 = vmatprep.subr.bf16.mxu0 %v2414
    %4514 = vmatpush1.bf16.xpose.msra.mxu0 %v2413
    %4515 = vmatprep.subr.bf16.mxu0 %v2510
    %4516 = vmatpush1.bf16.xpose.msra.mxu0 %v2509
    %4517 = vmatprep.subr.bf16.mxu0 0
    %4518 = vmatpush1.bf16.xpose.msra.mxu0 0
    %4519 = vmatprep.subr.bf16.mxu0 0
    %4520 = vmatpush1.bf16.xpose.msra.mxu0 0
    %4521 = vmatprep.subr.bf16.mxu0 0
    %4522 = vmatpush1.bf16.xpose.msra.mxu0 0
    %4523 = vmatprep.subr.bf16.mxu0 0
    %4524 = vmatpush1.bf16.xpose.msra.mxu0 0
    %4525 = vmatprep.subr.bf16.mxu0 0
    %4526 = vmatpush1.bf16.xpose.msra.mxu0 0
    %4527 = vmatprep.subr.bf16.mxu0 0
    %4528 = vmatpush1.bf16.xpose.msra.mxu0 0
    %4529 = vmatprep.subr.bf16.mxu0 0
    %4530 = vmatpush1.bf16.xpose.msra.mxu0 0
    %4531 = vmatprep.subr.bf16.mxu0 0
    %4532 = vmatpush1.bf16.xpose.msra.mxu0 0
    %4533 = vmatprep.subr.bf16.mxu0 0
    %4534 = vmatpush1.bf16.xpose.msra.mxu0 0
    %4535 = vmatprep.subr.bf16.mxu0 0
    %4536 = vmatpush1.bf16.xpose.msra.mxu0 0
    %4537 = vmatprep.subr.bf16.mxu0 0
    %4538 = vmatpush1.bf16.xpose.msra.mxu0 0
    %4539 = vmatprep.subr.bf16.mxu0 0
    %4540 = vmatpush1.bf16.xpose.msra.mxu0 0
    %4541 = vmatprep.mubr.bf16.mxu0 %v976
    %4542 = vmatmul.mubr.bf16.gmra.mrb[0].mxu0 %v962
    %v4543 = vpop.f32.mrb[0].mxu0
    %v4544 = vadd.f32 %v4504, %v4543
    %v4545 = vpop.f32.mrb[0].mxu0
    %v4546 = vpop.f32.mrb[0].mxu0
    %v4547 = vpop.f32.mrb[0].mxu0
    %4548 = vdwg.mxu0
    %4549 = vmatprep.subr.bf16.mxu0 %v2224
    %4550 = vmatpush1.bf16.xpose.msra.mxu0 %v2223
    %4551 = vmatprep.subr.bf16.mxu0 %v2320
    %4552 = vmatpush1.bf16.xpose.msra.mxu0 %v2319
    %4553 = vmatprep.subr.bf16.mxu0 %v2416
    %4554 = vmatpush1.bf16.xpose.msra.mxu0 %v2415
    %4555 = vmatprep.subr.bf16.mxu0 %v2512
    %4556 = vmatpush1.bf16.xpose.msra.mxu0 %v2511
    %4557 = vmatprep.subr.bf16.mxu0 0
    %4558 = vmatpush1.bf16.xpose.msra.mxu0 0
    %4559 = vmatprep.subr.bf16.mxu0 0
    %4560 = vmatpush1.bf16.xpose.msra.mxu0 0
    %4561 = vmatprep.subr.bf16.mxu0 0
    %4562 = vmatpush1.bf16.xpose.msra.mxu0 0
    %4563 = vmatprep.subr.bf16.mxu0 0
    %4564 = vmatpush1.bf16.xpose.msra.mxu0 0
    %4565 = vmatprep.subr.bf16.mxu0 0
    %4566 = vmatpush1.bf16.xpose.msra.mxu0 0
    %4567 = vmatprep.subr.bf16.mxu0 0
    %4568 = vmatpush1.bf16.xpose.msra.mxu0 0
    %4569 = vmatprep.subr.bf16.mxu0 0
    %4570 = vmatpush1.bf16.xpose.msra.mxu0 0
    %4571 = vmatprep.subr.bf16.mxu0 0
    %4572 = vmatpush1.bf16.xpose.msra.mxu0 0
    %4573 = vmatprep.subr.bf16.mxu0 0
    %4574 = vmatpush1.bf16.xpose.msra.mxu0 0
    %4575 = vmatprep.subr.bf16.mxu0 0
    %4576 = vmatpush1.bf16.xpose.msra.mxu0 0
    %4577 = vmatprep.subr.bf16.mxu0 0
    %4578 = vmatpush1.bf16.xpose.msra.mxu0 0
    %4579 = vmatprep.subr.bf16.mxu0 0
    %4580 = vmatpush1.bf16.xpose.msra.mxu0 0
    %4581 = vmatprep.mubr.bf16.mxu0 %v986
    %4582 = vmatmul.mubr.bf16.gmra.mrb[0].mxu0 %v984
    %v4583 = vpop.f32.mrb[0].mxu0
    %v4584 = vadd.f32 %v4544, %v4583
    %v4585 = vpop.f32.mrb[0].mxu0
    %v4586 = vpop.f32.mrb[0].mxu0
    %v4587 = vpop.f32.mrb[0].mxu0
    %4588 = vdwg.mxu0
    %4589 = vmatprep.subr.bf16.mxu0 %v2226
    %4590 = vmatpush1.bf16.xpose.msra.mxu0 %v2225
    %4591 = vmatprep.subr.bf16.mxu0 %v2322
    %4592 = vmatpush1.bf16.xpose.msra.mxu0 %v2321
    %4593 = vmatprep.subr.bf16.mxu0 %v2418
    %4594 = vmatpush1.bf16.xpose.msra.mxu0 %v2417
    %4595 = vmatprep.subr.bf16.mxu0 %v2514
    %4596 = vmatpush1.bf16.xpose.msra.mxu0 %v2513
    %4597 = vmatprep.subr.bf16.mxu0 0
    %4598 = vmatpush1.bf16.xpose.msra.mxu0 0
    %4599 = vmatprep.subr.bf16.mxu0 0
    %4600 = vmatpush1.bf16.xpose.msra.mxu0 0
    %4601 = vmatprep.subr.bf16.mxu0 0
    %4602 = vmatpush1.bf16.xpose.msra.mxu0 0
    %4603 = vmatprep.subr.bf16.mxu0 0
    %4604 = vmatpush1.bf16.xpose.msra.mxu0 0
    %4605 = vmatprep.subr.bf16.mxu0 0
    %4606 = vmatpush1.bf16.xpose.msra.mxu0 0
    %4607 = vmatprep.subr.bf16.mxu0 0
    %4608 = vmatpush1.bf16.xpose.msra.mxu0 0
    %4609 = vmatprep.subr.bf16.mxu0 0
    %4610 = vmatpush1.bf16.xpose.msra.mxu0 0
    %4611 = vmatprep.subr.bf16.mxu0 0
    %4612 = vmatpush1.bf16.xpose.msra.mxu0 0
    %4613 = vmatprep.subr.bf16.mxu0 0
    %4614 = vmatpush1.bf16.xpose.msra.mxu0 0
    %4615 = vmatprep.subr.bf16.mxu0 0
    %4616 = vmatpush1.bf16.xpose.msra.mxu0 0
    %4617 = vmatprep.subr.bf16.mxu0 0
    %4618 = vmatpush1.bf16.xpose.msra.mxu0 0
    %4619 = vmatprep.subr.bf16.mxu0 0
    %4620 = vmatpush1.bf16.xpose.msra.mxu0 0
    %4621 = vmatprep.mubr.bf16.mxu0 %v983
    %4622 = vmatmul.mubr.bf16.gmra.mrb[0].mxu0 %v969
    %v4623 = vpop.f32.mrb[0].mxu0
    %v4624 = vadd.f32 %v4584, %v4623
    %v4625 = vpop.f32.mrb[0].mxu0
    %v4626 = vpop.f32.mrb[0].mxu0
    %v4627 = vpop.f32.mrb[0].mxu0
    %4628 = vdwg.mxu0
    %4629 = vmatprep.subr.bf16.mxu0 %v2228
    %4630 = vmatpush1.bf16.xpose.msra.mxu0 %v2227
    %4631 = vmatprep.subr.bf16.mxu0 %v2324
    %4632 = vmatpush1.bf16.xpose.msra.mxu0 %v2323
    %4633 = vmatprep.subr.bf16.mxu0 %v2420
    %4634 = vmatpush1.bf16.xpose.msra.mxu0 %v2419
    %4635 = vmatprep.subr.bf16.mxu0 %v2516
    %4636 = vmatpush1.bf16.xpose.msra.mxu0 %v2515
    %4637 = vmatprep.subr.bf16.mxu0 0
    %4638 = vmatpush1.bf16.xpose.msra.mxu0 0
    %4639 = vmatprep.subr.bf16.mxu0 0
    %4640 = vmatpush1.bf16.xpose.msra.mxu0 0
    %4641 = vmatprep.subr.bf16.mxu0 0
    %4642 = vmatpush1.bf16.xpose.msra.mxu0 0
    %4643 = vmatprep.subr.bf16.mxu0 0
    %4644 = vmatpush1.bf16.xpose.msra.mxu0 0
    %4645 = vmatprep.subr.bf16.mxu0 0
    %4646 = vmatpush1.bf16.xpose.msra.mxu0 0
    %4647 = vmatprep.subr.bf16.mxu0 0
    %4648 = vmatpush1.bf16.xpose.msra.mxu0 0
    %4649 = vmatprep.subr.bf16.mxu0 0
    %4650 = vmatpush1.bf16.xpose.msra.mxu0 0
    %4651 = vmatprep.subr.bf16.mxu0 0
    %4652 = vmatpush1.bf16.xpose.msra.mxu0 0
    %4653 = vmatprep.subr.bf16.mxu0 0
    %4654 = vmatpush1.bf16.xpose.msra.mxu0 0
    %4655 = vmatprep.subr.bf16.mxu0 0
    %4656 = vmatpush1.bf16.xpose.msra.mxu0 0
    %4657 = vmatprep.subr.bf16.mxu0 0
    %4658 = vmatpush1.bf16.xpose.msra.mxu0 0
    %4659 = vmatprep.subr.bf16.mxu0 0
    %4660 = vmatpush1.bf16.xpose.msra.mxu0 0
    %4661 = vmatprep.mubr.bf16.mxu0 %v987
    %4662 = vmatmul.mubr.bf16.gmra.mrb[0].mxu0 %v985
    %v4663 = vpop.f32.mrb[0].mxu0
    %v4664 = vadd.f32 %v4624, %v4663
    %v4665 = vpop.f32.mrb[0].mxu0
    %v4666 = vpop.f32.mrb[0].mxu0
    %v4667 = vpop.f32.mrb[0].mxu0
    %4668 = vdwg.mxu0
    %4669 = vmatprep.subr.bf16.mxu0 %v2230
    %4670 = vmatpush1.bf16.xpose.msra.mxu0 %v2229
    %4671 = vmatprep.subr.bf16.mxu0 %v2326
    %4672 = vmatpush1.bf16.xpose.msra.mxu0 %v2325
    %4673 = vmatprep.subr.bf16.mxu0 %v2422
    %4674 = vmatpush1.bf16.xpose.msra.mxu0 %v2421
    %4675 = vmatprep.subr.bf16.mxu0 %v2518
    %4676 = vmatpush1.bf16.xpose.msra.mxu0 %v2517
    %4677 = vmatprep.subr.bf16.mxu0 0
    %4678 = vmatpush1.bf16.xpose.msra.mxu0 0
    %4679 = vmatprep.subr.bf16.mxu0 0
    %4680 = vmatpush1.bf16.xpose.msra.mxu0 0
    %4681 = vmatprep.subr.bf16.mxu0 0
    %4682 = vmatpush1.bf16.xpose.msra.mxu0 0
    %4683 = vmatprep.subr.bf16.mxu0 0
    %4684 = vmatpush1.bf16.xpose.msra.mxu0 0
    %4685 = vmatprep.subr.bf16.mxu0 0
    %4686 = vmatpush1.bf16.xpose.msra.mxu0 0
    %4687 = vmatprep.subr.bf16.mxu0 0
    %4688 = vmatpush1.bf16.xpose.msra.mxu0 0
    %4689 = vmatprep.subr.bf16.mxu0 0
    %4690 = vmatpush1.bf16.xpose.msra.mxu0 0
    %4691 = vmatprep.subr.bf16.mxu0 0
    %4692 = vmatpush1.bf16.xpose.msra.mxu0 0
    %4693 = vmatprep.subr.bf16.mxu0 0
    %4694 = vmatpush1.bf16.xpose.msra.mxu0 0
    %4695 = vmatprep.subr.bf16.mxu0 0
    %4696 = vmatpush1.bf16.xpose.msra.mxu0 0
    %4697 = vmatprep.subr.bf16.mxu0 0
    %4698 = vmatpush1.bf16.xpose.msra.mxu0 0
    %4699 = vmatprep.subr.bf16.mxu0 0
    %4700 = vmatpush1.bf16.xpose.msra.mxu0 0
    %4701 = vmatprep.mubr.bf16.mxu0 %v1025
    %4702 = vmatmul.mubr.bf16.gmra.mrb[0].mxu0 %v1011
    %v4703 = vpop.f32.mrb[0].mxu0
    %v4704 = vadd.f32 %v4664, %v4703
    %v4705 = vpop.f32.mrb[0].mxu0
    %v4706 = vpop.f32.mrb[0].mxu0
    %v4707 = vpop.f32.mrb[0].mxu0
    %4708 = vdwg.mxu0
    %4709 = vmatprep.subr.bf16.mxu0 %v2232
    %4710 = vmatpush1.bf16.xpose.msra.mxu0 %v2231
    %4711 = vmatprep.subr.bf16.mxu0 %v2328
    %4712 = vmatpush1.bf16.xpose.msra.mxu0 %v2327
    %4713 = vmatprep.subr.bf16.mxu0 %v2424
    %4714 = vmatpush1.bf16.xpose.msra.mxu0 %v2423
    %4715 = vmatprep.subr.bf16.mxu0 %v2520
    %4716 = vmatpush1.bf16.xpose.msra.mxu0 %v2519
    %4717 = vmatprep.subr.bf16.mxu0 0
    %4718 = vmatpush1.bf16.xpose.msra.mxu0 0
    %4719 = vmatprep.subr.bf16.mxu0 0
    %4720 = vmatpush1.bf16.xpose.msra.mxu0 0
    %4721 = vmatprep.subr.bf16.mxu0 0
    %4722 = vmatpush1.bf16.xpose.msra.mxu0 0
    %4723 = vmatprep.subr.bf16.mxu0 0
    %4724 = vmatpush1.bf16.xpose.msra.mxu0 0
    %4725 = vmatprep.subr.bf16.mxu0 0
    %4726 = vmatpush1.bf16.xpose.msra.mxu0 0
    %4727 = vmatprep.subr.bf16.mxu0 0
    %4728 = vmatpush1.bf16.xpose.msra.mxu0 0
    %4729 = vmatprep.subr.bf16.mxu0 0
    %4730 = vmatpush1.bf16.xpose.msra.mxu0 0
    %4731 = vmatprep.subr.bf16.mxu0 0
    %4732 = vmatpush1.bf16.xpose.msra.mxu0 0
    %4733 = vmatprep.subr.bf16.mxu0 0
    %4734 = vmatpush1.bf16.xpose.msra.mxu0 0
    %4735 = vmatprep.subr.bf16.mxu0 0
    %4736 = vmatpush1.bf16.xpose.msra.mxu0 0
    %4737 = vmatprep.subr.bf16.mxu0 0
    %4738 = vmatpush1.bf16.xpose.msra.mxu0 0
    %4739 = vmatprep.subr.bf16.mxu0 0
    %4740 = vmatpush1.bf16.xpose.msra.mxu0 0
    %4741 = vmatprep.mubr.bf16.mxu0 %v1035
    %4742 = vmatmul.mubr.bf16.gmra.mrb[0].mxu0 %v1033
    %v4743 = vpop.f32.mrb[0].mxu0
    %v4744 = vadd.f32 %v4704, %v4743
    %v4745 = vpop.f32.mrb[0].mxu0
    %v4746 = vpop.f32.mrb[0].mxu0
    %v4747 = vpop.f32.mrb[0].mxu0
    %4748 = vdwg.mxu0
    %4749 = vmatprep.subr.bf16.mxu0 %v2234
    %4750 = vmatpush1.bf16.xpose.msra.mxu0 %v2233
    %4751 = vmatprep.subr.bf16.mxu0 %v2330
    %4752 = vmatpush1.bf16.xpose.msra.mxu0 %v2329
    %4753 = vmatprep.subr.bf16.mxu0 %v2426
    %4754 = vmatpush1.bf16.xpose.msra.mxu0 %v2425
    %4755 = vmatprep.subr.bf16.mxu0 %v2522
    %4756 = vmatpush1.bf16.xpose.msra.mxu0 %v2521
    %4757 = vmatprep.subr.bf16.mxu0 0
    %4758 = vmatpush1.bf16.xpose.msra.mxu0 0
    %4759 = vmatprep.subr.bf16.mxu0 0
    %4760 = vmatpush1.bf16.xpose.msra.mxu0 0
    %4761 = vmatprep.subr.bf16.mxu0 0
    %4762 = vmatpush1.bf16.xpose.msra.mxu0 0
    %4763 = vmatprep.subr.bf16.mxu0 0
    %4764 = vmatpush1.bf16.xpose.msra.mxu0 0
    %4765 = vmatprep.subr.bf16.mxu0 0
    %4766 = vmatpush1.bf16.xpose.msra.mxu0 0
    %4767 = vmatprep.subr.bf16.mxu0 0
    %4768 = vmatpush1.bf16.xpose.msra.mxu0 0
    %4769 = vmatprep.subr.bf16.mxu0 0
    %4770 = vmatpush1.bf16.xpose.msra.mxu0 0
    %4771 = vmatprep.subr.bf16.mxu0 0
    %4772 = vmatpush1.bf16.xpose.msra.mxu0 0
    %4773 = vmatprep.subr.bf16.mxu0 0
    %4774 = vmatpush1.bf16.xpose.msra.mxu0 0
    %4775 = vmatprep.subr.bf16.mxu0 0
    %4776 = vmatpush1.bf16.xpose.msra.mxu0 0
    %4777 = vmatprep.subr.bf16.mxu0 0
    %4778 = vmatpush1.bf16.xpose.msra.mxu0 0
    %4779 = vmatprep.subr.bf16.mxu0 0
    %4780 = vmatpush1.bf16.xpose.msra.mxu0 0
    %4781 = vmatprep.mubr.bf16.mxu0 %v1032
    %4782 = vmatmul.mubr.bf16.gmra.mrb[0].mxu0 %v1018
    %v4783 = vpop.f32.mrb[0].mxu0
    %v4784 = vadd.f32 %v4744, %v4783
    %v4785 = vpop.f32.mrb[0].mxu0
    %v4786 = vpop.f32.mrb[0].mxu0
    %v4787 = vpop.f32.mrb[0].mxu0
    %4788 = vdwg.mxu0
    %4789 = vmatprep.subr.bf16.mxu0 %v2236
    %4790 = vmatpush1.bf16.xpose.msra.mxu0 %v2235
    %4791 = vmatprep.subr.bf16.mxu0 %v2332
    %4792 = vmatpush1.bf16.xpose.msra.mxu0 %v2331
    %4793 = vmatprep.subr.bf16.mxu0 %v2428
    %4794 = vmatpush1.bf16.xpose.msra.mxu0 %v2427
    %4795 = vmatprep.subr.bf16.mxu0 %v2524
    %4796 = vmatpush1.bf16.xpose.msra.mxu0 %v2523
    %4797 = vmatprep.subr.bf16.mxu0 0
    %4798 = vmatpush1.bf16.xpose.msra.mxu0 0
    %4799 = vmatprep.subr.bf16.mxu0 0
    %4800 = vmatpush1.bf16.xpose.msra.mxu0 0
    %4801 = vmatprep.subr.bf16.mxu0 0
    %4802 = vmatpush1.bf16.xpose.msra.mxu0 0
    %4803 = vmatprep.subr.bf16.mxu0 0
    %4804 = vmatpush1.bf16.xpose.msra.mxu0 0
    %4805 = vmatprep.subr.bf16.mxu0 0
    %4806 = vmatpush1.bf16.xpose.msra.mxu0 0
    %4807 = vmatprep.subr.bf16.mxu0 0
    %4808 = vmatpush1.bf16.xpose.msra.mxu0 0
    %4809 = vmatprep.subr.bf16.mxu0 0
    %4810 = vmatpush1.bf16.xpose.msra.mxu0 0
    %4811 = vmatprep.subr.bf16.mxu0 0
    %4812 = vmatpush1.bf16.xpose.msra.mxu0 0
    %4813 = vmatprep.subr.bf16.mxu0 0
    %4814 = vmatpush1.bf16.xpose.msra.mxu0 0
    %4815 = vmatprep.subr.bf16.mxu0 0
    %4816 = vmatpush1.bf16.xpose.msra.mxu0 0
    %4817 = vmatprep.subr.bf16.mxu0 0
    %4818 = vmatpush1.bf16.xpose.msra.mxu0 0
    %4819 = vmatprep.subr.bf16.mxu0 0
    %4820 = vmatpush1.bf16.xpose.msra.mxu0 0
    %4821 = vmatprep.mubr.bf16.mxu0 %v1036
    %4822 = vmatmul.mubr.bf16.gmra.mrb[0].mxu0 %v1034
    %v4823 = vpop.f32.mrb[0].mxu0
    %v4824 = vadd.f32 %v4784, %v4823
    %v4825 = vpop.f32.mrb[0].mxu0
    %v4826 = vpop.f32.mrb[0].mxu0
    %v4827 = vpop.f32.mrb[0].mxu0
    %4828 = vdwg.mxu0
    %v4829 = vmax.f32 %v4824, 0.0
    %v4830 = vld [vmem:[#allocation8] sm:$0x3f]
    %v4831 = vld [vmem:[#allocation10] sm:$0x1]
    %v4833 = vlaneseq
    %v4834 = vshrl.u32 %v4833, 7
    %v4835 = vsub.s32 0, %v4834
    %v4836 = vrot.slane %v4831, %v4835
    %vm4838 = vcmask 408576
    %v4840 = vsel %vm4838, %v4829, 0
    %v4843 = vsel %vm4838, %v4830, 0
    %4845 = vmatprep.subr.mxu0 0.0
    %4846 = vmatpush1.xpose.msra.mxu0 %v4843
    %4847 = vmatprep.subr.mxu0 0.0
    %4848 = vmatpush1.xpose.msra.mxu0 0.0
    %4849 = vmatprep.subr.mxu0 0.0
    %4850 = vmatpush1.xpose.msra.mxu0 0.0
    %4851 = vmatprep.subr.mxu0 0.0
    %4852 = vmatpush1.xpose.msra.mxu0 0.0
    %4853 = vmatprep.subr.mxu0 0.0
    %4854 = vmatpush1.xpose.msra.mxu0 0.0
    %4855 = vmatprep.subr.mxu0 0.0
    %4856 = vmatpush1.xpose.msra.mxu0 0.0
    %4857 = vmatprep.subr.mxu0 0.0
    %4858 = vmatpush1.xpose.msra.mxu0 0.0
    %4859 = vmatprep.subr.mxu0 0.0
    %4860 = vmatpush1.xpose.msra.mxu0 0.0
    %4861 = vmatprep.subr.mxu0 0.0
    %4862 = vmatpush1.xpose.msra.mxu0 0.0
    %4863 = vmatprep.subr.mxu0 0.0
    %4864 = vmatpush1.xpose.msra.mxu0 0.0
    %4865 = vmatprep.subr.mxu0 0.0
    %4866 = vmatpush1.xpose.msra.mxu0 0.0
    %4867 = vmatprep.subr.mxu0 0.0
    %4868 = vmatpush1.xpose.msra.mxu0 0.0
    %4869 = vmatprep.subr.mxu0 0.0
    %4870 = vmatpush1.xpose.msra.mxu0 0.0
    %4871 = vmatprep.subr.mxu0 0.0
    %4872 = vmatpush1.xpose.msra.mxu0 0.0
    %4873 = vmatprep.subr.mxu0 0.0
    %4874 = vmatpush1.xpose.msra.mxu0 0.0
    %4875 = vmatprep.subr.mxu0 0.0
    %4876 = vmatpush1.xpose.msra.mxu0 0.0
    %4877 = vmatprep.subr.mxu0 0.0
    %4878 = vmatpush1.xpose.msra.mxu0 0.0
    %4879 = vmatprep.subr.mxu0 0.0
    %4880 = vmatpush1.xpose.msra.mxu0 0.0
    %4881 = vmatprep.subr.mxu0 0.0
    %4882 = vmatpush1.xpose.msra.mxu0 0.0
    %4883 = vmatprep.subr.mxu0 0.0
    %4884 = vmatpush1.xpose.msra.mxu0 0.0
    %4885 = vmatprep.subr.mxu0 0.0
    %4886 = vmatpush1.xpose.msra.mxu0 0.0
    %4887 = vmatprep.subr.mxu0 0.0
    %4888 = vmatpush1.xpose.msra.mxu0 0.0
    %4889 = vmatprep.subr.mxu0 0.0
    %4890 = vmatpush1.xpose.msra.mxu0 0.0
    %4891 = vmatprep.subr.mxu0 0.0
    %4892 = vmatpush1.xpose.msra.mxu0 0.0
    %4893 = vmatprep.subr.mxu0 0.0
    %4894 = vmatpush1.xpose.msra.mxu0 0.0
    %4895 = vmatprep.subr.mxu0 0.0
    %4896 = vmatpush1.xpose.msra.mxu0 0.0
    %4897 = vmatprep.subr.mxu0 0.0
    %4898 = vmatpush1.xpose.msra.mxu0 0.0
    %4899 = vmatprep.subr.mxu0 0.0
    %4900 = vmatpush1.xpose.msra.mxu0 0.0
    %4901 = vmatprep.subr.mxu0 0.0
    %4902 = vmatpush1.xpose.msra.mxu0 0.0
    %4903 = vmatprep.subr.mxu0 0.0
    %4904 = vmatpush1.xpose.msra.mxu0 0.0
    %4905 = vmatprep.subr.mxu0 0.0
    %4906 = vmatpush1.xpose.msra.mxu0 0.0
    %4907 = vmatprep.subr.mxu0 0.0
    %4908 = vmatpush1.xpose.msra.mxu0 0.0
    %4909 = vmatprep.mubr.f32.mxu0 0.0
    %4910 = vmatmul.mubr.f32.gmra.mrb[0].mxu0 %v4840
    %v4911 = vpop.f32.mrb[0].mxu0
    %v4912 = vadd.f32 %v4836, %v4911
    %v4913 = vpop.f32.mrb[0].mxu0
    %4914 = vdwg.mxu0
    %vm4915 = vcmask 41984
    %4916 = vst.msk [vmem:[#allocation11] sm:$0x3] %vm4915, %v4912
    // Predicated region
    $region42: #{tpu_custom_call.1} parent=1 // pred_check
      _
    $region43: #{tpu_custom_call.1} parent=1 // pred_check_branch
      %4918 = sbr.rel (0) target = $region45
    $region44: #{tpu_custom_call.1} parent=1 // pred_region
      %s4920 = ssub.s32 32, 32
      %4921 = vsyncadd [#allocation4], %s4920
      %s4923 = sshll.u32 [#allocation11], 4
      %s4924 = int_to_ptr.vmem [resolvable:$true] %s4923
      %4926 = dma.vmem_to_hbm [thread:$0]  %s4924, 32, %s5, [#allocation4]
    $region45: #{tpu_custom_call.1} parent=1 // pred_fallthru
      _
    // Predicated region
    $region46: #{tpu_custom_call.1} parent=1 // pred_check
      _
    $region47: #{tpu_custom_call.1} parent=1 // pred_check_branch
      %4928 = sbr.rel (0) target = $region49
    $region48: #{tpu_custom_call.1} parent=1 // pred_region
      %4929 = dma.done [#allocation4], 32
    $region49: #{tpu_custom_call.1} parent=1 // pred_fallthru
      _
    %4930 = vsyncpa [#allocation3], 1
    %4931 = vsyncpa [#allocation6], 1
    %4932 = vsyncpa [#allocation9], 1
    %4933 = vsyncpa [#allocation4], 1

</llo_original>
